<compile_context>
chip_gen: v5e
topology: v5e:2x2
jax: 0.10.0
libtpu: 0.0.40
codegen_flags: <defaults>
</compile_context>

<pallas_src>
import functools

import jax
import jax.numpy as jnp
from jax.experimental import pallas as pl
from jax.experimental.pallas import tpu as pltpu

THETA_M = 4.0            # ilt.sigmoid_ilt_mask(theta_m=4)
THETA_Z = 50.0           # litho wafer-image sigmoid steepness
LITHO_THRESHOLD = 0.225
GAMMA = 4                # (result - target).pow(gamma).sum()


def _sigmoid(x):
    # numerically stable sigmoid (theta_z * |I - thr| can reach O(40); avoids exp overflow)
    return 0.5 * (jnp.tanh(0.5 * x) + 1.0)


def _ilt_loss_kernel(ktaps_ref, mpad_ref, target_ref, out_ref, msig_ref, *,
                     num_kernels, kh, kw, H, W):
    """ILT forward loss for one batch tile.

    ktaps_ref : (2*K*kh*kw,) f32 SMEM   sqrt(w_k)-prescaled real taps, then imag taps
    mpad_ref  : (TB, H+kh-1, W+kw-1) f32 VMEM   wrap-padded raw mask tile
    target_ref: (TB, H, W) f32 VMEM
    out_ref   : (1, 1, 128) f32 VMEM    per-tile partial loss (lane-broadcast)
    msig_ref  : (TB, H+kh-1, W+kw-1) f32 VMEM scratch
    """
    # fused ilt.bit_mask_to_two_value_mask + ilt.sigmoid_ilt_mask(theta_m=4):
    #   sigmoid(theta_m * (2*m - 1)) == sigmoid(8*m - 4)
    msig_ref[...] = _sigmoid(2.0 * THETA_M * mpad_ref[...] - THETA_M)

    TB = target_ref.shape[0]
    nt = kh * kw
    nk = num_kernels * nt
    zeros = jnp.zeros((TB, H, W), jnp.float32)
    re_acc = [zeros for _ in range(num_kernels)]
    im_acc = [zeros for _ in range(num_kernels)]

    # litho.lithosim circular convolution, direct form:
    #   conv_k[y, x] = sum_{dy,dx} m_sig[(y-dy)%H, (x-dx)%W] * kernel_k[dy, dx]
    # Each (dy, dx) tap is a static sub-window of the wrap-padded m_sig; the
    # window is shared across all K kernels and across real/imag parts.
    for dy in range(kh):
        for dx in range(kw):
            win = msig_ref[:, pl.ds(kh - 1 - dy, H), pl.ds(kw - 1 - dx, W)]
            toff = dy * kw + dx
            for k in range(num_kernels):
                re_acc[k] = re_acc[k] + ktaps_ref[k * nt + toff] * win
                im_acc[k] = im_acc[k] + ktaps_ref[nk + k * nt + toff] * win

    # intensity = sum_k w_k * |conv_k|^2  (w_k already folded in as sqrt(w_k))
    intensity = zeros
    for k in range(num_kernels):
        intensity = intensity + re_acc[k] * re_acc[k] + im_acc[k] * im_acc[k]

    # non-binary wafer image (return_binary_wafer=False) and (result-target)^4
    wafer = _sigmoid(THETA_Z * (intensity - LITHO_THRESHOLD))
    diff = wafer - target_ref[...]
    d2 = diff * diff
    partial = jnp.sum(d2 * d2)
    out_ref[...] = jnp.full(out_ref.shape, partial, jnp.float32)


def ilt_loss_forward(mask_pred, target, kernels_real, kernels_imag, weight):
    """Forward pass of ilt_loss_layer (new_cord=None path) as a Pallas kernel."""
    B, C, H, W = mask_pred.shape
    K, kh, kw = kernels_real.shape
    Bt = B * C
    Hp, Wp = H + kh - 1, W + kw - 1

    mask3 = mask_pred.reshape(Bt, H, W).astype(jnp.float32)
    target3 = target.reshape(Bt, H, W).astype(jnp.float32)

    # circular halo (wrap) pad so each conv tap is a static in-kernel window read
    mpad = jnp.pad(mask3, ((0, 0), (kh - 1, 0), (kw - 1, 0)), mode="wrap")

    # fold the (nonnegative) SOCS weights into the taps:
    #   w_k*(re^2+im^2) == (sqrt(w_k)*re)^2 + (sqrt(w_k)*im)^2
    sw = jnp.sqrt(weight.astype(jnp.float32))[:, None, None]
    ktaps = jnp.concatenate([
        (kernels_real.astype(jnp.float32) * sw).reshape(-1),
        (kernels_imag.astype(jnp.float32) * sw).reshape(-1),
    ])

    # batch tile size: keep >= 2 grid steps when possible (feeds both v7x TCs)
    TB = 1
    for cand in (8, 4, 2):
        if Bt % cand == 0 and Bt // cand >= 2:
            TB = cand
            break
    G = Bt // TB

    # VMEM budget: double-buffered input tiles + scratch + live accumulators
    tile_b = TB * H * W * 4
    pad_b = TB * Hp * Wp * 4
    vmem_est = 3 * pad_b + 2 * tile_b + (2 * K + 6) * tile_b + 2 * 128 * 4
    vmem_limit = int(min(64 * 1024 * 1024, max(16 * 1024 * 1024, 4 * vmem_est)))

    kernel = functools.partial(_ilt_loss_kernel, num_kernels=K, kh=kh, kw=kw, H=H, W=W)
    partials = pl.pallas_call(
        kernel,
        out_shape=jax.ShapeDtypeStruct((G, 1, 128), jnp.float32),
        grid=(G,),
        in_specs=[
            pl.BlockSpec(memory_space=pltpu.MemorySpace.SMEM),     # prescaled taps
            pl.BlockSpec((TB, Hp, Wp), lambda i: (i, 0, 0)),       # padded mask tile
            pl.BlockSpec((TB, H, W), lambda i: (i, 0, 0)),         # target tile
        ],
        out_specs=pl.BlockSpec((1, 1, 128), lambda i: (i, 0, 0)),
        scratch_shapes=[pltpu.VMEM((TB, Hp, Wp), jnp.float32)],
        compiler_params=pltpu.CompilerParams(
            dimension_semantics=("parallel",),
            vmem_limit_bytes=vmem_limit,
        ),
    )(ktaps, mpad, target3)

    return jnp.sum(partials[:, 0, 0])


# TODO(synk): the `new_cord is not None` scaled path (per-sample nearest
# interpolation + crop into a 2048x2048 canvas) and the custom backward
# (ilt.compute_gradient) are not translated; only the forward ILT loss is.
# TODO(synk): for very large masks (e.g. 2048x2048) add spatial (H, W) tiling
# with halo exchange in addition to the batch-tile grid.

if __name__ == "__main__":
    key = jax.random.PRNGKey(0)
    k1, k2, k3, k4, k5 = jax.random.split(key, 5)

    B, C, H, W = 2, 1, 16, 16      # mask / target layouts (NCHW, single channel)
    K, kh, kw = 4, 5, 5            # SOCS kernels: K complex kernels, kh x kw taps

    mask_pred = jax.random.uniform(k1, (B, C, H, W), jnp.float32)
    target = (jax.random.uniform(k2, (B, C, H, W), jnp.float32) > 0.5).astype(jnp.float32)
    kernels_real = 0.05 * jax.random.normal(k3, (K, kh, kw), jnp.float32)
    kernels_imag = 0.05 * jax.random.normal(k4, (K, kh, kw), jnp.float32)
    weight = jnp.abs(jax.random.normal(k5, (K,), jnp.float32))

    loss = ilt_loss_forward(mask_pred, target, kernels_real, kernels_imag, weight)
    jax.block_until_ready(loss)
    print("KERNEL_OK")
</pallas_src>

<mosaic_0001>
module attributes {stable_mosaic.version = 11 : i64} {
  func.func @_ilt_loss_kernel(%arg0: i32, %arg1: memref<200xf32, #tpu.memory_space<smem>>, %arg2: memref<1x20x20xf32, #tpu.memory_space<vmem>>, %arg3: memref<1x16x16xf32, #tpu.memory_space<vmem>>, %arg4: memref<1x1x128xf32, #tpu.memory_space<vmem>>, %arg5: memref<1x20x20xf32, #tpu.memory_space<vmem>>) attributes {dimension_semantics = [#tpu.dimension_semantics<parallel>], iteration_bounds = array<i64: 2>, scalar_prefetch = 0 : i64, scratch_operands = 1 : i64, tpu.core_type = #tpu.core_type<tc>, window_params = [{transform_indices = @transform_0, window_bounds = array<i64: 200>}, {transform_indices = @transform_1, window_bounds = array<i64: 1, 20, 20>}, {transform_indices = @transform_2, window_bounds = array<i64: 1, 16, 16>}, {transform_indices = @transform_3, window_bounds = array<i64: 1, 1, 128>}]} {
    %c0 = arith.constant 0 : index
    %c0_0 = arith.constant 0 : index
    %c0_1 = arith.constant 0 : index
    %0 = vector.load %arg2[%c0, %c0_0, %c0_1] : memref<1x20x20xf32, #tpu.memory_space<vmem>>, vector<1x20x20xf32>
    %cst = arith.constant 8.000000e+00 : f32
    %1 = vector.broadcast %cst : f32 to vector<1x20x20xf32>
    %2 = arith.mulf %1, %0 : vector<1x20x20xf32>
    %cst_2 = arith.constant 4.000000e+00 : f32
    %3 = vector.broadcast %cst_2 : f32 to vector<1x20x20xf32>
    %4 = arith.subf %2, %3 : vector<1x20x20xf32>
    %cst_3 = arith.constant 5.000000e-01 : f32
    %5 = vector.broadcast %cst_3 : f32 to vector<1x20x20xf32>
    %6 = arith.mulf %5, %4 : vector<1x20x20xf32>
    %7 = math.tanh %6 : vector<1x20x20xf32>
    %cst_4 = arith.constant 1.000000e+00 : f32
    %8 = vector.broadcast %cst_4 : f32 to vector<1x20x20xf32>
    %9 = arith.addf %7, %8 : vector<1x20x20xf32>
    %cst_5 = arith.constant 5.000000e-01 : f32
    %10 = vector.broadcast %cst_5 : f32 to vector<1x20x20xf32>
    %11 = arith.mulf %10, %9 : vector<1x20x20xf32>
    %c0_6 = arith.constant 0 : index
    %c0_7 = arith.constant 0 : index
    %c0_8 = arith.constant 0 : index
    %12 = vector.load %arg5[%c0_6, %c0_7, %c0_8] : memref<1x20x20xf32, #tpu.memory_space<vmem>>, vector<1x20x20xf32>
    tpu.vector_store %arg5[%c0_6, %c0_7, %c0_8], %11 {strides = array<i32>} : memref<1x20x20xf32, #tpu.memory_space<vmem>>, vector<1x20x20xf32>,
    %cst_9 = arith.constant 0.000000e+00 : f32
    %13 = vector.broadcast %cst_9 : f32 to vector<1x16x16xf32>
    %c0_10 = arith.constant 0 : index
    %c4 = arith.constant 4 : index
    %c4_11 = arith.constant 4 : index
    %14 = vector.load %arg5[%c0_10, %c4, %c4_11] : memref<1x20x20xf32, #tpu.memory_space<vmem>>, vector<1x16x16xf32>
    %c0_12 = arith.constant 0 : index
    %15 = memref.load %arg1[%c0_12] : memref<200xf32, #tpu.memory_space<smem>>
    %16 = vector.broadcast %15 : f32 to vector<1x16x16xf32>
    %17 = arith.mulf %16, %14 : vector<1x16x16xf32>
    %18 = arith.addf %13, %17 : vector<1x16x16xf32>
    %c100 = arith.constant 100 : index
    %19 = memref.load %arg1[%c100] : memref<200xf32, #tpu.memory_space<smem>>
    %20 = vector.broadcast %19 : f32 to vector<1x16x16xf32>
    %21 = arith.mulf %20, %14 : vector<1x16x16xf32>
    %22 = arith.addf %13, %21 : vector<1x16x16xf32>
    %c25 = arith.constant 25 : index
    %23 = memref.load %arg1[%c25] : memref<200xf32, #tpu.memory_space<smem>>
    %24 = vector.broadcast %23 : f32 to vector<1x16x16xf32>
    %25 = arith.mulf %24, %14 : vector<1x16x16xf32>
    %26 = arith.addf %13, %25 : vector<1x16x16xf32>
    %c125 = arith.constant 125 : index
    %27 = memref.load %arg1[%c125] : memref<200xf32, #tpu.memory_space<smem>>
    %28 = vector.broadcast %27 : f32 to vector<1x16x16xf32>
    %29 = arith.mulf %28, %14 : vector<1x16x16xf32>
    %30 = arith.addf %13, %29 : vector<1x16x16xf32>
    %c50 = arith.constant 50 : index
    %31 = memref.load %arg1[%c50] : memref<200xf32, #tpu.memory_space<smem>>
    %32 = vector.broadcast %31 : f32 to vector<1x16x16xf32>
    %33 = arith.mulf %32, %14 : vector<1x16x16xf32>
    %34 = arith.addf %13, %33 : vector<1x16x16xf32>
    %c150 = arith.constant 150 : index
    %35 = memref.load %arg1[%c150] : memref<200xf32, #tpu.memory_space<smem>>
    %36 = vector.broadcast %35 : f32 to vector<1x16x16xf32>
    %37 = arith.mulf %36, %14 : vector<1x16x16xf32>
    %38 = arith.addf %13, %37 : vector<1x16x16xf32>
    %c75 = arith.constant 75 : index
    %39 = memref.load %arg1[%c75] : memref<200xf32, #tpu.memory_space<smem>>
    %40 = vector.broadcast %39 : f32 to vector<1x16x16xf32>
    %41 = arith.mulf %40, %14 : vector<1x16x16xf32>
    %42 = arith.addf %13, %41 : vector<1x16x16xf32>
    %c175 = arith.constant 175 : index
    %43 = memref.load %arg1[%c175] : memref<200xf32, #tpu.memory_space<smem>>
    %44 = vector.broadcast %43 : f32 to vector<1x16x16xf32>
    %45 = arith.mulf %44, %14 : vector<1x16x16xf32>
    %46 = arith.addf %13, %45 : vector<1x16x16xf32>
    %c0_13 = arith.constant 0 : index
    %c4_14 = arith.constant 4 : index
    %c3 = arith.constant 3 : index
    %47 = vector.load %arg5[%c0_13, %c4_14, %c3] : memref<1x20x20xf32, #tpu.memory_space<vmem>>, vector<1x16x16xf32>
    %c1 = arith.constant 1 : index
    %48 = memref.load %arg1[%c1] : memref<200xf32, #tpu.memory_space<smem>>
    %49 = vector.broadcast %48 : f32 to vector<1x16x16xf32>
    %50 = arith.mulf %49, %47 : vector<1x16x16xf32>
    %51 = arith.addf %18, %50 : vector<1x16x16xf32>
    %c101 = arith.constant 101 : index
    %52 = memref.load %arg1[%c101] : memref<200xf32, #tpu.memory_space<smem>>
    %53 = vector.broadcast %52 : f32 to vector<1x16x16xf32>
    %54 = arith.mulf %53, %47 : vector<1x16x16xf32>
    %55 = arith.addf %22, %54 : vector<1x16x16xf32>
    %c26 = arith.constant 26 : index
    %56 = memref.load %arg1[%c26] : memref<200xf32, #tpu.memory_space<smem>>
    %57 = vector.broadcast %56 : f32 to vector<1x16x16xf32>
    %58 = arith.mulf %57, %47 : vector<1x16x16xf32>
    %59 = arith.addf %26, %58 : vector<1x16x16xf32>
    %c126 = arith.constant 126 : index
    %60 = memref.load %arg1[%c126] : memref<200xf32, #tpu.memory_space<smem>>
    %61 = vector.broadcast %60 : f32 to vector<1x16x16xf32>
    %62 = arith.mulf %61, %47 : vector<1x16x16xf32>
    %63 = arith.addf %30, %62 : vector<1x16x16xf32>
    %c51 = arith.constant 51 : index
    %64 = memref.load %arg1[%c51] : memref<200xf32, #tpu.memory_space<smem>>
    %65 = vector.broadcast %64 : f32 to vector<1x16x16xf32>
    %66 = arith.mulf %65, %47 : vector<1x16x16xf32>
    %67 = arith.addf %34, %66 : vector<1x16x16xf32>
    %c151 = arith.constant 151 : index
    %68 = memref.load %arg1[%c151] : memref<200xf32, #tpu.memory_space<smem>>
    %69 = vector.broadcast %68 : f32 to vector<1x16x16xf32>
    %70 = arith.mulf %69, %47 : vector<1x16x16xf32>
    %71 = arith.addf %38, %70 : vector<1x16x16xf32>
    %c76 = arith.constant 76 : index
    %72 = memref.load %arg1[%c76] : memref<200xf32, #tpu.memory_space<smem>>
    %73 = vector.broadcast %72 : f32 to vector<1x16x16xf32>
    %74 = arith.mulf %73, %47 : vector<1x16x16xf32>
    %75 = arith.addf %42, %74 : vector<1x16x16xf32>
    %c176 = arith.constant 176 : index
    %76 = memref.load %arg1[%c176] : memref<200xf32, #tpu.memory_space<smem>>
    %77 = vector.broadcast %76 : f32 to vector<1x16x16xf32>
    %78 = arith.mulf %77, %47 : vector<1x16x16xf32>
    %79 = arith.addf %46, %78 : vector<1x16x16xf32>
    %c0_15 = arith.constant 0 : index
    %c4_16 = arith.constant 4 : index
    %c2 = arith.constant 2 : index
    %80 = vector.load %arg5[%c0_15, %c4_16, %c2] : memref<1x20x20xf32, #tpu.memory_space<vmem>>, vector<1x16x16xf32>
    %c2_17 = arith.constant 2 : index
    %81 = memref.load %arg1[%c2_17] : memref<200xf32, #tpu.memory_space<smem>>
    %82 = vector.broadcast %81 : f32 to vector<1x16x16xf32>
    %83 = arith.mulf %82, %80 : vector<1x16x16xf32>
    %84 = arith.addf %51, %83 : vector<1x16x16xf32>
    %c102 = arith.constant 102 : index
    %85 = memref.load %arg1[%c102] : memref<200xf32, #tpu.memory_space<smem>>
    %86 = vector.broadcast %85 : f32 to vector<1x16x16xf32>
    %87 = arith.mulf %86, %80 : vector<1x16x16xf32>
    %88 = arith.addf %55, %87 : vector<1x16x16xf32>
    %c27 = arith.constant 27 : index
    %89 = memref.load %arg1[%c27] : memref<200xf32, #tpu.memory_space<smem>>
    %90 = vector.broadcast %89 : f32 to vector<1x16x16xf32>
    %91 = arith.mulf %90, %80 : vector<1x16x16xf32>
    %92 = arith.addf %59, %91 : vector<1x16x16xf32>
    %c127 = arith.constant 127 : index
    %93 = memref.load %arg1[%c127] : memref<200xf32, #tpu.memory_space<smem>>
    %94 = vector.broadcast %93 : f32 to vector<1x16x16xf32>
    %95 = arith.mulf %94, %80 : vector<1x16x16xf32>
    %96 = arith.addf %63, %95 : vector<1x16x16xf32>
    %c52 = arith.constant 52 : index
    %97 = memref.load %arg1[%c52] : memref<200xf32, #tpu.memory_space<smem>>
    %98 = vector.broadcast %97 : f32 to vector<1x16x16xf32>
    %99 = arith.mulf %98, %80 : vector<1x16x16xf32>
    %100 = arith.addf %67, %99 : vector<1x16x16xf32>
    %c152 = arith.constant 152 : index
    %101 = memref.load %arg1[%c152] : memref<200xf32, #tpu.memory_space<smem>>
    %102 = vector.broadcast %101 : f32 to vector<1x16x16xf32>
    %103 = arith.mulf %102, %80 : vector<1x16x16xf32>
    %104 = arith.addf %71, %103 : vector<1x16x16xf32>
    %c77 = arith.constant 77 : index
    %105 = memref.load %arg1[%c77] : memref<200xf32, #tpu.memory_space<smem>>
    %106 = vector.broadcast %105 : f32 to vector<1x16x16xf32>
    %107 = arith.mulf %106, %80 : vector<1x16x16xf32>
    %108 = arith.addf %75, %107 : vector<1x16x16xf32>
    %c177 = arith.constant 177 : index
    %109 = memref.load %arg1[%c177] : memref<200xf32, #tpu.memory_space<smem>>
    %110 = vector.broadcast %109 : f32 to vector<1x16x16xf32>
    %111 = arith.mulf %110, %80 : vector<1x16x16xf32>
    %112 = arith.addf %79, %111 : vector<1x16x16xf32>
    %c0_18 = arith.constant 0 : index
    %c4_19 = arith.constant 4 : index
    %c1_20 = arith.constant 1 : index
    %113 = vector.load %arg5[%c0_18, %c4_19, %c1_20] : memref<1x20x20xf32, #tpu.memory_space<vmem>>, vector<1x16x16xf32>
    %c3_21 = arith.constant 3 : index
    %114 = memref.load %arg1[%c3_21] : memref<200xf32, #tpu.memory_space<smem>>
    %115 = vector.broadcast %114 : f32 to vector<1x16x16xf32>
    %116 = arith.mulf %115, %113 : vector<1x16x16xf32>
    %117 = arith.addf %84, %116 : vector<1x16x16xf32>
    %c103 = arith.constant 103 : index
    %118 = memref.load %arg1[%c103] : memref<200xf32, #tpu.memory_space<smem>>
    %119 = vector.broadcast %118 : f32 to vector<1x16x16xf32>
    %120 = arith.mulf %119, %113 : vector<1x16x16xf32>
    %121 = arith.addf %88, %120 : vector<1x16x16xf32>
    %c28 = arith.constant 28 : index
    %122 = memref.load %arg1[%c28] : memref<200xf32, #tpu.memory_space<smem>>
    %123 = vector.broadcast %122 : f32 to vector<1x16x16xf32>
    %124 = arith.mulf %123, %113 : vector<1x16x16xf32>
    %125 = arith.addf %92, %124 : vector<1x16x16xf32>
    %c128 = arith.constant 128 : index
    %126 = memref.load %arg1[%c128] : memref<200xf32, #tpu.memory_space<smem>>
    %127 = vector.broadcast %126 : f32 to vector<1x16x16xf32>
    %128 = arith.mulf %127, %113 : vector<1x16x16xf32>
    %129 = arith.addf %96, %128 : vector<1x16x16xf32>
    %c53 = arith.constant 53 : index
    %130 = memref.load %arg1[%c53] : memref<200xf32, #tpu.memory_space<smem>>
    %131 = vector.broadcast %130 : f32 to vector<1x16x16xf32>
    %132 = arith.mulf %131, %113 : vector<1x16x16xf32>
    %133 = arith.addf %100, %132 : vector<1x16x16xf32>
    %c153 = arith.constant 153 : index
    %134 = memref.load %arg1[%c153] : memref<200xf32, #tpu.memory_space<smem>>
    %135 = vector.broadcast %134 : f32 to vector<1x16x16xf32>
    %136 = arith.mulf %135, %113 : vector<1x16x16xf32>
    %137 = arith.addf %104, %136 : vector<1x16x16xf32>
    %c78 = arith.constant 78 : index
    %138 = memref.load %arg1[%c78] : memref<200xf32, #tpu.memory_space<smem>>
    %139 = vector.broadcast %138 : f32 to vector<1x16x16xf32>
    %140 = arith.mulf %139, %113 : vector<1x16x16xf32>
    %141 = arith.addf %108, %140 : vector<1x16x16xf32>
    %c178 = arith.constant 178 : index
    %142 = memref.load %arg1[%c178] : memref<200xf32, #tpu.memory_space<smem>>
    %143 = vector.broadcast %142 : f32 to vector<1x16x16xf32>
    %144 = arith.mulf %143, %113 : vector<1x16x16xf32>
    %145 = arith.addf %112, %144 : vector<1x16x16xf32>
    %c0_22 = arith.constant 0 : index
    %c4_23 = arith.constant 4 : index
    %c0_24 = arith.constant 0 : index
    %146 = vector.load %arg5[%c0_22, %c4_23, %c0_24] : memref<1x20x20xf32, #tpu.memory_space<vmem>>, vector<1x16x16xf32>
    %c4_25 = arith.constant 4 : index
    %147 = memref.load %arg1[%c4_25] : memref<200xf32, #tpu.memory_space<smem>>
    %148 = vector.broadcast %147 : f32 to vector<1x16x16xf32>
    %149 = arith.mulf %148, %146 : vector<1x16x16xf32>
    %150 = arith.addf %117, %149 : vector<1x16x16xf32>
    %c104 = arith.constant 104 : index
    %151 = memref.load %arg1[%c104] : memref<200xf32, #tpu.memory_space<smem>>
    %152 = vector.broadcast %151 : f32 to vector<1x16x16xf32>
    %153 = arith.mulf %152, %146 : vector<1x16x16xf32>
    %154 = arith.addf %121, %153 : vector<1x16x16xf32>
    %c29 = arith.constant 29 : index
    %155 = memref.load %arg1[%c29] : memref<200xf32, #tpu.memory_space<smem>>
    %156 = vector.broadcast %155 : f32 to vector<1x16x16xf32>
    %157 = arith.mulf %156, %146 : vector<1x16x16xf32>
    %158 = arith.addf %125, %157 : vector<1x16x16xf32>
    %c129 = arith.constant 129 : index
    %159 = memref.load %arg1[%c129] : memref<200xf32, #tpu.memory_space<smem>>
    %160 = vector.broadcast %159 : f32 to vector<1x16x16xf32>
    %161 = arith.mulf %160, %146 : vector<1x16x16xf32>
    %162 = arith.addf %129, %161 : vector<1x16x16xf32>
    %c54 = arith.constant 54 : index
    %163 = memref.load %arg1[%c54] : memref<200xf32, #tpu.memory_space<smem>>
    %164 = vector.broadcast %163 : f32 to vector<1x16x16xf32>
    %165 = arith.mulf %164, %146 : vector<1x16x16xf32>
    %166 = arith.addf %133, %165 : vector<1x16x16xf32>
    %c154 = arith.constant 154 : index
    %167 = memref.load %arg1[%c154] : memref<200xf32, #tpu.memory_space<smem>>
    %168 = vector.broadcast %167 : f32 to vector<1x16x16xf32>
    %169 = arith.mulf %168, %146 : vector<1x16x16xf32>
    %170 = arith.addf %137, %169 : vector<1x16x16xf32>
    %c79 = arith.constant 79 : index
    %171 = memref.load %arg1[%c79] : memref<200xf32, #tpu.memory_space<smem>>
    %172 = vector.broadcast %171 : f32 to vector<1x16x16xf32>
    %173 = arith.mulf %172, %146 : vector<1x16x16xf32>
    %174 = arith.addf %141, %173 : vector<1x16x16xf32>
    %c179 = arith.constant 179 : index
    %175 = memref.load %arg1[%c179] : memref<200xf32, #tpu.memory_space<smem>>
    %176 = vector.broadcast %175 : f32 to vector<1x16x16xf32>
    %177 = arith.mulf %176, %146 : vector<1x16x16xf32>
    %178 = arith.addf %145, %177 : vector<1x16x16xf32>
    %c0_26 = arith.constant 0 : index
    %c3_27 = arith.constant 3 : index
    %c4_28 = arith.constant 4 : index
    %179 = vector.load %arg5[%c0_26, %c3_27, %c4_28] : memref<1x20x20xf32, #tpu.memory_space<vmem>>, vector<1x16x16xf32>
    %c5 = arith.constant 5 : index
    %180 = memref.load %arg1[%c5] : memref<200xf32, #tpu.memory_space<smem>>
    %181 = vector.broadcast %180 : f32 to vector<1x16x16xf32>
    %182 = arith.mulf %181, %179 : vector<1x16x16xf32>
    %183 = arith.addf %150, %182 : vector<1x16x16xf32>
    %c105 = arith.constant 105 : index
    %184 = memref.load %arg1[%c105] : memref<200xf32, #tpu.memory_space<smem>>
    %185 = vector.broadcast %184 : f32 to vector<1x16x16xf32>
    %186 = arith.mulf %185, %179 : vector<1x16x16xf32>
    %187 = arith.addf %154, %186 : vector<1x16x16xf32>
    %c30 = arith.constant 30 : index
    %188 = memref.load %arg1[%c30] : memref<200xf32, #tpu.memory_space<smem>>
    %189 = vector.broadcast %188 : f32 to vector<1x16x16xf32>
    %190 = arith.mulf %189, %179 : vector<1x16x16xf32>
    %191 = arith.addf %158, %190 : vector<1x16x16xf32>
    %c130 = arith.constant 130 : index
    %192 = memref.load %arg1[%c130] : memref<200xf32, #tpu.memory_space<smem>>
    %193 = vector.broadcast %192 : f32 to vector<1x16x16xf32>
    %194 = arith.mulf %193, %179 : vector<1x16x16xf32>
    %195 = arith.addf %162, %194 : vector<1x16x16xf32>
    %c55 = arith.constant 55 : index
    %196 = memref.load %arg1[%c55] : memref<200xf32, #tpu.memory_space<smem>>
    %197 = vector.broadcast %196 : f32 to vector<1x16x16xf32>
    %198 = arith.mulf %197, %179 : vector<1x16x16xf32>
    %199 = arith.addf %166, %198 : vector<1x16x16xf32>
    %c155 = arith.constant 155 : index
    %200 = memref.load %arg1[%c155] : memref<200xf32, #tpu.memory_space<smem>>
    %201 = vector.broadcast %200 : f32 to vector<1x16x16xf32>
    %202 = arith.mulf %201, %179 : vector<1x16x16xf32>
    %203 = arith.addf %170, %202 : vector<1x16x16xf32>
    %c80 = arith.constant 80 : index
    %204 = memref.load %arg1[%c80] : memref<200xf32, #tpu.memory_space<smem>>
    %205 = vector.broadcast %204 : f32 to vector<1x16x16xf32>
    %206 = arith.mulf %205, %179 : vector<1x16x16xf32>
    %207 = arith.addf %174, %206 : vector<1x16x16xf32>
    %c180 = arith.constant 180 : index
    %208 = memref.load %arg1[%c180] : memref<200xf32, #tpu.memory_space<smem>>
    %209 = vector.broadcast %208 : f32 to vector<1x16x16xf32>
    %210 = arith.mulf %209, %179 : vector<1x16x16xf32>
    %211 = arith.addf %178, %210 : vector<1x16x16xf32>
    %c0_29 = arith.constant 0 : index
    %c3_30 = arith.constant 3 : index
    %c3_31 = arith.constant 3 : index
    %212 = vector.load %arg5[%c0_29, %c3_30, %c3_31] : memref<1x20x20xf32, #tpu.memory_space<vmem>>, vector<1x16x16xf32>
    %c6 = arith.constant 6 : index
    %213 = memref.load %arg1[%c6] : memref<200xf32, #tpu.memory_space<smem>>
    %214 = vector.broadcast %213 : f32 to vector<1x16x16xf32>
    %215 = arith.mulf %214, %212 : vector<1x16x16xf32>
    %216 = arith.addf %183, %215 : vector<1x16x16xf32>
    %c106 = arith.constant 106 : index
    %217 = memref.load %arg1[%c106] : memref<200xf32, #tpu.memory_space<smem>>
    %218 = vector.broadcast %217 : f32 to vector<1x16x16xf32>
    %219 = arith.mulf %218, %212 : vector<1x16x16xf32>
    %220 = arith.addf %187, %219 : vector<1x16x16xf32>
    %c31 = arith.constant 31 : index
    %221 = memref.load %arg1[%c31] : memref<200xf32, #tpu.memory_space<smem>>
    %222 = vector.broadcast %221 : f32 to vector<1x16x16xf32>
    %223 = arith.mulf %222, %212 : vector<1x16x16xf32>
    %224 = arith.addf %191, %223 : vector<1x16x16xf32>
    %c131 = arith.constant 131 : index
    %225 = memref.load %arg1[%c131] : memref<200xf32, #tpu.memory_space<smem>>
    %226 = vector.broadcast %225 : f32 to vector<1x16x16xf32>
    %227 = arith.mulf %226, %212 : vector<1x16x16xf32>
    %228 = arith.addf %195, %227 : vector<1x16x16xf32>
    %c56 = arith.constant 56 : index
    %229 = memref.load %arg1[%c56] : memref<200xf32, #tpu.memory_space<smem>>
    %230 = vector.broadcast %229 : f32 to vector<1x16x16xf32>
    %231 = arith.mulf %230, %212 : vector<1x16x16xf32>
    %232 = arith.addf %199, %231 : vector<1x16x16xf32>
    %c156 = arith.constant 156 : index
    %233 = memref.load %arg1[%c156] : memref<200xf32, #tpu.memory_space<smem>>
    %234 = vector.broadcast %233 : f32 to vector<1x16x16xf32>
    %235 = arith.mulf %234, %212 : vector<1x16x16xf32>
    %236 = arith.addf %203, %235 : vector<1x16x16xf32>
    %c81 = arith.constant 81 : index
    %237 = memref.load %arg1[%c81] : memref<200xf32, #tpu.memory_space<smem>>
    %238 = vector.broadcast %237 : f32 to vector<1x16x16xf32>
    %239 = arith.mulf %238, %212 : vector<1x16x16xf32>
    %240 = arith.addf %207, %239 : vector<1x16x16xf32>
    %c181 = arith.constant 181 : index
    %241 = memref.load %arg1[%c181] : memref<200xf32, #tpu.memory_space<smem>>
    %242 = vector.broadcast %241 : f32 to vector<1x16x16xf32>
    %243 = arith.mulf %242, %212 : vector<1x16x16xf32>
    %244 = arith.addf %211, %243 : vector<1x16x16xf32>
    %c0_32 = arith.constant 0 : index
    %c3_33 = arith.constant 3 : index
    %c2_34 = arith.constant 2 : index
    %245 = vector.load %arg5[%c0_32, %c3_33, %c2_34] : memref<1x20x20xf32, #tpu.memory_space<vmem>>, vector<1x16x16xf32>
    %c7 = arith.constant 7 : index
    %246 = memref.load %arg1[%c7] : memref<200xf32, #tpu.memory_space<smem>>
    %247 = vector.broadcast %246 : f32 to vector<1x16x16xf32>
    %248 = arith.mulf %247, %245 : vector<1x16x16xf32>
    %249 = arith.addf %216, %248 : vector<1x16x16xf32>
    %c107 = arith.constant 107 : index
    %250 = memref.load %arg1[%c107] : memref<200xf32, #tpu.memory_space<smem>>
    %251 = vector.broadcast %250 : f32 to vector<1x16x16xf32>
    %252 = arith.mulf %251, %245 : vector<1x16x16xf32>
    %253 = arith.addf %220, %252 : vector<1x16x16xf32>
    %c32 = arith.constant 32 : index
    %254 = memref.load %arg1[%c32] : memref<200xf32, #tpu.memory_space<smem>>
    %255 = vector.broadcast %254 : f32 to vector<1x16x16xf32>
    %256 = arith.mulf %255, %245 : vector<1x16x16xf32>
    %257 = arith.addf %224, %256 : vector<1x16x16xf32>
    %c132 = arith.constant 132 : index
    %258 = memref.load %arg1[%c132] : memref<200xf32, #tpu.memory_space<smem>>
    %259 = vector.broadcast %258 : f32 to vector<1x16x16xf32>
    %260 = arith.mulf %259, %245 : vector<1x16x16xf32>
    %261 = arith.addf %228, %260 : vector<1x16x16xf32>
    %c57 = arith.constant 57 : index
    %262 = memref.load %arg1[%c57] : memref<200xf32, #tpu.memory_space<smem>>
    %263 = vector.broadcast %262 : f32 to vector<1x16x16xf32>
    %264 = arith.mulf %263, %245 : vector<1x16x16xf32>
    %265 = arith.addf %232, %264 : vector<1x16x16xf32>
    %c157 = arith.constant 157 : index
    %266 = memref.load %arg1[%c157] : memref<200xf32, #tpu.memory_space<smem>>
    %267 = vector.broadcast %266 : f32 to vector<1x16x16xf32>
    %268 = arith.mulf %267, %245 : vector<1x16x16xf32>
    %269 = arith.addf %236, %268 : vector<1x16x16xf32>
    %c82 = arith.constant 82 : index
    %270 = memref.load %arg1[%c82] : memref<200xf32, #tpu.memory_space<smem>>
    %271 = vector.broadcast %270 : f32 to vector<1x16x16xf32>
    %272 = arith.mulf %271, %245 : vector<1x16x16xf32>
    %273 = arith.addf %240, %272 : vector<1x16x16xf32>
    %c182 = arith.constant 182 : index
    %274 = memref.load %arg1[%c182] : memref<200xf32, #tpu.memory_space<smem>>
    %275 = vector.broadcast %274 : f32 to vector<1x16x16xf32>
    %276 = arith.mulf %275, %245 : vector<1x16x16xf32>
    %277 = arith.addf %244, %276 : vector<1x16x16xf32>
    %c0_35 = arith.constant 0 : index
    %c3_36 = arith.constant 3 : index
    %c1_37 = arith.constant 1 : index
    %278 = vector.load %arg5[%c0_35, %c3_36, %c1_37] : memref<1x20x20xf32, #tpu.memory_space<vmem>>, vector<1x16x16xf32>
    %c8 = arith.constant 8 : index
    %279 = memref.load %arg1[%c8] : memref<200xf32, #tpu.memory_space<smem>>
    %280 = vector.broadcast %279 : f32 to vector<1x16x16xf32>
    %281 = arith.mulf %280, %278 : vector<1x16x16xf32>
    %282 = arith.addf %249, %281 : vector<1x16x16xf32>
    %c108 = arith.constant 108 : index
    %283 = memref.load %arg1[%c108] : memref<200xf32, #tpu.memory_space<smem>>
    %284 = vector.broadcast %283 : f32 to vector<1x16x16xf32>
    %285 = arith.mulf %284, %278 : vector<1x16x16xf32>
    %286 = arith.addf %253, %285 : vector<1x16x16xf32>
    %c33 = arith.constant 33 : index
    %287 = memref.load %arg1[%c33] : memref<200xf32, #tpu.memory_space<smem>>
    %288 = vector.broadcast %287 : f32 to vector<1x16x16xf32>
    %289 = arith.mulf %288, %278 : vector<1x16x16xf32>
    %290 = arith.addf %257, %289 : vector<1x16x16xf32>
    %c133 = arith.constant 133 : index
    %291 = memref.load %arg1[%c133] : memref<200xf32, #tpu.memory_space<smem>>
    %292 = vector.broadcast %291 : f32 to vector<1x16x16xf32>
    %293 = arith.mulf %292, %278 : vector<1x16x16xf32>
    %294 = arith.addf %261, %293 : vector<1x16x16xf32>
    %c58 = arith.constant 58 : index
    %295 = memref.load %arg1[%c58] : memref<200xf32, #tpu.memory_space<smem>>
    %296 = vector.broadcast %295 : f32 to vector<1x16x16xf32>
    %297 = arith.mulf %296, %278 : vector<1x16x16xf32>
    %298 = arith.addf %265, %297 : vector<1x16x16xf32>
    %c158 = arith.constant 158 : index
    %299 = memref.load %arg1[%c158] : memref<200xf32, #tpu.memory_space<smem>>
    %300 = vector.broadcast %299 : f32 to vector<1x16x16xf32>
    %301 = arith.mulf %300, %278 : vector<1x16x16xf32>
    %302 = arith.addf %269, %301 : vector<1x16x16xf32>
    %c83 = arith.constant 83 : index
    %303 = memref.load %arg1[%c83] : memref<200xf32, #tpu.memory_space<smem>>
    %304 = vector.broadcast %303 : f32 to vector<1x16x16xf32>
    %305 = arith.mulf %304, %278 : vector<1x16x16xf32>
    %306 = arith.addf %273, %305 : vector<1x16x16xf32>
    %c183 = arith.constant 183 : index
    %307 = memref.load %arg1[%c183] : memref<200xf32, #tpu.memory_space<smem>>
    %308 = vector.broadcast %307 : f32 to vector<1x16x16xf32>
    %309 = arith.mulf %308, %278 : vector<1x16x16xf32>
    %310 = arith.addf %277, %309 : vector<1x16x16xf32>
    %c0_38 = arith.constant 0 : index
    %c3_39 = arith.constant 3 : index
    %c0_40 = arith.constant 0 : index
    %311 = vector.load %arg5[%c0_38, %c3_39, %c0_40] : memref<1x20x20xf32, #tpu.memory_space<vmem>>, vector<1x16x16xf32>
    %c9 = arith.constant 9 : index
    %312 = memref.load %arg1[%c9] : memref<200xf32, #tpu.memory_space<smem>>
    %313 = vector.broadcast %312 : f32 to vector<1x16x16xf32>
    %314 = arith.mulf %313, %311 : vector<1x16x16xf32>
    %315 = arith.addf %282, %314 : vector<1x16x16xf32>
    %c109 = arith.constant 109 : index
    %316 = memref.load %arg1[%c109] : memref<200xf32, #tpu.memory_space<smem>>
    %317 = vector.broadcast %316 : f32 to vector<1x16x16xf32>
    %318 = arith.mulf %317, %311 : vector<1x16x16xf32>
    %319 = arith.addf %286, %318 : vector<1x16x16xf32>
    %c34 = arith.constant 34 : index
    %320 = memref.load %arg1[%c34] : memref<200xf32, #tpu.memory_space<smem>>
    %321 = vector.broadcast %320 : f32 to vector<1x16x16xf32>
    %322 = arith.mulf %321, %311 : vector<1x16x16xf32>
    %323 = arith.addf %290, %322 : vector<1x16x16xf32>
    %c134 = arith.constant 134 : index
    %324 = memref.load %arg1[%c134] : memref<200xf32, #tpu.memory_space<smem>>
    %325 = vector.broadcast %324 : f32 to vector<1x16x16xf32>
    %326 = arith.mulf %325, %311 : vector<1x16x16xf32>
    %327 = arith.addf %294, %326 : vector<1x16x16xf32>
    %c59 = arith.constant 59 : index
    %328 = memref.load %arg1[%c59] : memref<200xf32, #tpu.memory_space<smem>>
    %329 = vector.broadcast %328 : f32 to vector<1x16x16xf32>
    %330 = arith.mulf %329, %311 : vector<1x16x16xf32>
    %331 = arith.addf %298, %330 : vector<1x16x16xf32>
    %c159 = arith.constant 159 : index
    %332 = memref.load %arg1[%c159] : memref<200xf32, #tpu.memory_space<smem>>
    %333 = vector.broadcast %332 : f32 to vector<1x16x16xf32>
    %334 = arith.mulf %333, %311 : vector<1x16x16xf32>
    %335 = arith.addf %302, %334 : vector<1x16x16xf32>
    %c84 = arith.constant 84 : index
    %336 = memref.load %arg1[%c84] : memref<200xf32, #tpu.memory_space<smem>>
    %337 = vector.broadcast %336 : f32 to vector<1x16x16xf32>
    %338 = arith.mulf %337, %311 : vector<1x16x16xf32>
    %339 = arith.addf %306, %338 : vector<1x16x16xf32>
    %c184 = arith.constant 184 : index
    %340 = memref.load %arg1[%c184] : memref<200xf32, #tpu.memory_space<smem>>
    %341 = vector.broadcast %340 : f32 to vector<1x16x16xf32>
    %342 = arith.mulf %341, %311 : vector<1x16x16xf32>
    %343 = arith.addf %310, %342 : vector<1x16x16xf32>
    %c0_41 = arith.constant 0 : index
    %c2_42 = arith.constant 2 : index
    %c4_43 = arith.constant 4 : index
    %344 = vector.load %arg5[%c0_41, %c2_42, %c4_43] : memref<1x20x20xf32, #tpu.memory_space<vmem>>, vector<1x16x16xf32>
    %c10 = arith.constant 10 : index
    %345 = memref.load %arg1[%c10] : memref<200xf32, #tpu.memory_space<smem>>
    %346 = vector.broadcast %345 : f32 to vector<1x16x16xf32>
    %347 = arith.mulf %346, %344 : vector<1x16x16xf32>
    %348 = arith.addf %315, %347 : vector<1x16x16xf32>
    %c110 = arith.constant 110 : index
    %349 = memref.load %arg1[%c110] : memref<200xf32, #tpu.memory_space<smem>>
    %350 = vector.broadcast %349 : f32 to vector<1x16x16xf32>
    %351 = arith.mulf %350, %344 : vector<1x16x16xf32>
    %352 = arith.addf %319, %351 : vector<1x16x16xf32>
    %c35 = arith.constant 35 : index
    %353 = memref.load %arg1[%c35] : memref<200xf32, #tpu.memory_space<smem>>
    %354 = vector.broadcast %353 : f32 to vector<1x16x16xf32>
    %355 = arith.mulf %354, %344 : vector<1x16x16xf32>
    %356 = arith.addf %323, %355 : vector<1x16x16xf32>
    %c135 = arith.constant 135 : index
    %357 = memref.load %arg1[%c135] : memref<200xf32, #tpu.memory_space<smem>>
    %358 = vector.broadcast %357 : f32 to vector<1x16x16xf32>
    %359 = arith.mulf %358, %344 : vector<1x16x16xf32>
    %360 = arith.addf %327, %359 : vector<1x16x16xf32>
    %c60 = arith.constant 60 : index
    %361 = memref.load %arg1[%c60] : memref<200xf32, #tpu.memory_space<smem>>
    %362 = vector.broadcast %361 : f32 to vector<1x16x16xf32>
    %363 = arith.mulf %362, %344 : vector<1x16x16xf32>
    %364 = arith.addf %331, %363 : vector<1x16x16xf32>
    %c160 = arith.constant 160 : index
    %365 = memref.load %arg1[%c160] : memref<200xf32, #tpu.memory_space<smem>>
    %366 = vector.broadcast %365 : f32 to vector<1x16x16xf32>
    %367 = arith.mulf %366, %344 : vector<1x16x16xf32>
    %368 = arith.addf %335, %367 : vector<1x16x16xf32>
    %c85 = arith.constant 85 : index
    %369 = memref.load %arg1[%c85] : memref<200xf32, #tpu.memory_space<smem>>
    %370 = vector.broadcast %369 : f32 to vector<1x16x16xf32>
    %371 = arith.mulf %370, %344 : vector<1x16x16xf32>
    %372 = arith.addf %339, %371 : vector<1x16x16xf32>
    %c185 = arith.constant 185 : index
    %373 = memref.load %arg1[%c185] : memref<200xf32, #tpu.memory_space<smem>>
    %374 = vector.broadcast %373 : f32 to vector<1x16x16xf32>
    %375 = arith.mulf %374, %344 : vector<1x16x16xf32>
    %376 = arith.addf %343, %375 : vector<1x16x16xf32>
    %c0_44 = arith.constant 0 : index
    %c2_45 = arith.constant 2 : index
    %c3_46 = arith.constant 3 : index
    %377 = vector.load %arg5[%c0_44, %c2_45, %c3_46] : memref<1x20x20xf32, #tpu.memory_space<vmem>>, vector<1x16x16xf32>
    %c11 = arith.constant 11 : index
    %378 = memref.load %arg1[%c11] : memref<200xf32, #tpu.memory_space<smem>>
    %379 = vector.broadcast %378 : f32 to vector<1x16x16xf32>
    %380 = arith.mulf %379, %377 : vector<1x16x16xf32>
    %381 = arith.addf %348, %380 : vector<1x16x16xf32>
    %c111 = arith.constant 111 : index
    %382 = memref.load %arg1[%c111] : memref<200xf32, #tpu.memory_space<smem>>
    %383 = vector.broadcast %382 : f32 to vector<1x16x16xf32>
    %384 = arith.mulf %383, %377 : vector<1x16x16xf32>
    %385 = arith.addf %352, %384 : vector<1x16x16xf32>
    %c36 = arith.constant 36 : index
    %386 = memref.load %arg1[%c36] : memref<200xf32, #tpu.memory_space<smem>>
    %387 = vector.broadcast %386 : f32 to vector<1x16x16xf32>
    %388 = arith.mulf %387, %377 : vector<1x16x16xf32>
    %389 = arith.addf %356, %388 : vector<1x16x16xf32>
    %c136 = arith.constant 136 : index
    %390 = memref.load %arg1[%c136] : memref<200xf32, #tpu.memory_space<smem>>
    %391 = vector.broadcast %390 : f32 to vector<1x16x16xf32>
    %392 = arith.mulf %391, %377 : vector<1x16x16xf32>
    %393 = arith.addf %360, %392 : vector<1x16x16xf32>
    %c61 = arith.constant 61 : index
    %394 = memref.load %arg1[%c61] : memref<200xf32, #tpu.memory_space<smem>>
    %395 = vector.broadcast %394 : f32 to vector<1x16x16xf32>
    %396 = arith.mulf %395, %377 : vector<1x16x16xf32>
    %397 = arith.addf %364, %396 : vector<1x16x16xf32>
    %c161 = arith.constant 161 : index
    %398 = memref.load %arg1[%c161] : memref<200xf32, #tpu.memory_space<smem>>
    %399 = vector.broadcast %398 : f32 to vector<1x16x16xf32>
    %400 = arith.mulf %399, %377 : vector<1x16x16xf32>
    %401 = arith.addf %368, %400 : vector<1x16x16xf32>
    %c86 = arith.constant 86 : index
    %402 = memref.load %arg1[%c86] : memref<200xf32, #tpu.memory_space<smem>>
    %403 = vector.broadcast %402 : f32 to vector<1x16x16xf32>
    %404 = arith.mulf %403, %377 : vector<1x16x16xf32>
    %405 = arith.addf %372, %404 : vector<1x16x16xf32>
    %c186 = arith.constant 186 : index
    %406 = memref.load %arg1[%c186] : memref<200xf32, #tpu.memory_space<smem>>
    %407 = vector.broadcast %406 : f32 to vector<1x16x16xf32>
    %408 = arith.mulf %407, %377 : vector<1x16x16xf32>
    %409 = arith.addf %376, %408 : vector<1x16x16xf32>
    %c0_47 = arith.constant 0 : index
    %c2_48 = arith.constant 2 : index
    %c2_49 = arith.constant 2 : index
    %410 = vector.load %arg5[%c0_47, %c2_48, %c2_49] : memref<1x20x20xf32, #tpu.memory_space<vmem>>, vector<1x16x16xf32>
    %c12 = arith.constant 12 : index
    %411 = memref.load %arg1[%c12] : memref<200xf32, #tpu.memory_space<smem>>
    %412 = vector.broadcast %411 : f32 to vector<1x16x16xf32>
    %413 = arith.mulf %412, %410 : vector<1x16x16xf32>
    %414 = arith.addf %381, %413 : vector<1x16x16xf32>
    %c112 = arith.constant 112 : index
    %415 = memref.load %arg1[%c112] : memref<200xf32, #tpu.memory_space<smem>>
    %416 = vector.broadcast %415 : f32 to vector<1x16x16xf32>
    %417 = arith.mulf %416, %410 : vector<1x16x16xf32>
    %418 = arith.addf %385, %417 : vector<1x16x16xf32>
    %c37 = arith.constant 37 : index
    %419 = memref.load %arg1[%c37] : memref<200xf32, #tpu.memory_space<smem>>
    %420 = vector.broadcast %419 : f32 to vector<1x16x16xf32>
    %421 = arith.mulf %420, %410 : vector<1x16x16xf32>
    %422 = arith.addf %389, %421 : vector<1x16x16xf32>
    %c137 = arith.constant 137 : index
    %423 = memref.load %arg1[%c137] : memref<200xf32, #tpu.memory_space<smem>>
    %424 = vector.broadcast %423 : f32 to vector<1x16x16xf32>
    %425 = arith.mulf %424, %410 : vector<1x16x16xf32>
    %426 = arith.addf %393, %425 : vector<1x16x16xf32>
    %c62 = arith.constant 62 : index
    %427 = memref.load %arg1[%c62] : memref<200xf32, #tpu.memory_space<smem>>
    %428 = vector.broadcast %427 : f32 to vector<1x16x16xf32>
    %429 = arith.mulf %428, %410 : vector<1x16x16xf32>
    %430 = arith.addf %397, %429 : vector<1x16x16xf32>
    %c162 = arith.constant 162 : index
    %431 = memref.load %arg1[%c162] : memref<200xf32, #tpu.memory_space<smem>>
    %432 = vector.broadcast %431 : f32 to vector<1x16x16xf32>
    %433 = arith.mulf %432, %410 : vector<1x16x16xf32>
    %434 = arith.addf %401, %433 : vector<1x16x16xf32>
    %c87 = arith.constant 87 : index
    %435 = memref.load %arg1[%c87] : memref<200xf32, #tpu.memory_space<smem>>
    %436 = vector.broadcast %435 : f32 to vector<1x16x16xf32>
    %437 = arith.mulf %436, %410 : vector<1x16x16xf32>
    %438 = arith.addf %405, %437 : vector<1x16x16xf32>
    %c187 = arith.constant 187 : index
    %439 = memref.load %arg1[%c187] : memref<200xf32, #tpu.memory_space<smem>>
    %440 = vector.broadcast %439 : f32 to vector<1x16x16xf32>
    %441 = arith.mulf %440, %410 : vector<1x16x16xf32>
    %442 = arith.addf %409, %441 : vector<1x16x16xf32>
    %c0_50 = arith.constant 0 : index
    %c2_51 = arith.constant 2 : index
    %c1_52 = arith.constant 1 : index
    %443 = vector.load %arg5[%c0_50, %c2_51, %c1_52] : memref<1x20x20xf32, #tpu.memory_space<vmem>>, vector<1x16x16xf32>
    %c13 = arith.constant 13 : index
    %444 = memref.load %arg1[%c13] : memref<200xf32, #tpu.memory_space<smem>>
    %445 = vector.broadcast %444 : f32 to vector<1x16x16xf32>
    %446 = arith.mulf %445, %443 : vector<1x16x16xf32>
    %447 = arith.addf %414, %446 : vector<1x16x16xf32>
    %c113 = arith.constant 113 : index
    %448 = memref.load %arg1[%c113] : memref<200xf32, #tpu.memory_space<smem>>
    %449 = vector.broadcast %448 : f32 to vector<1x16x16xf32>
    %450 = arith.mulf %449, %443 : vector<1x16x16xf32>
    %451 = arith.addf %418, %450 : vector<1x16x16xf32>
    %c38 = arith.constant 38 : index
    %452 = memref.load %arg1[%c38] : memref<200xf32, #tpu.memory_space<smem>>
    %453 = vector.broadcast %452 : f32 to vector<1x16x16xf32>
    %454 = arith.mulf %453, %443 : vector<1x16x16xf32>
    %455 = arith.addf %422, %454 : vector<1x16x16xf32>
    %c138 = arith.constant 138 : index
    %456 = memref.load %arg1[%c138] : memref<200xf32, #tpu.memory_space<smem>>
    %457 = vector.broadcast %456 : f32 to vector<1x16x16xf32>
    %458 = arith.mulf %457, %443 : vector<1x16x16xf32>
    %459 = arith.addf %426, %458 : vector<1x16x16xf32>
    %c63 = arith.constant 63 : index
    %460 = memref.load %arg1[%c63] : memref<200xf32, #tpu.memory_space<smem>>
    %461 = vector.broadcast %460 : f32 to vector<1x16x16xf32>
    %462 = arith.mulf %461, %443 : vector<1x16x16xf32>
    %463 = arith.addf %430, %462 : vector<1x16x16xf32>
    %c163 = arith.constant 163 : index
    %464 = memref.load %arg1[%c163] : memref<200xf32, #tpu.memory_space<smem>>
    %465 = vector.broadcast %464 : f32 to vector<1x16x16xf32>
    %466 = arith.mulf %465, %443 : vector<1x16x16xf32>
    %467 = arith.addf %434, %466 : vector<1x16x16xf32>
    %c88 = arith.constant 88 : index
    %468 = memref.load %arg1[%c88] : memref<200xf32, #tpu.memory_space<smem>>
    %469 = vector.broadcast %468 : f32 to vector<1x16x16xf32>
    %470 = arith.mulf %469, %443 : vector<1x16x16xf32>
    %471 = arith.addf %438, %470 : vector<1x16x16xf32>
    %c188 = arith.constant 188 : index
    %472 = memref.load %arg1[%c188] : memref<200xf32, #tpu.memory_space<smem>>
    %473 = vector.broadcast %472 : f32 to vector<1x16x16xf32>
    %474 = arith.mulf %473, %443 : vector<1x16x16xf32>
    %475 = arith.addf %442, %474 : vector<1x16x16xf32>
    %c0_53 = arith.constant 0 : index
    %c2_54 = arith.constant 2 : index
    %c0_55 = arith.constant 0 : index
    %476 = vector.load %arg5[%c0_53, %c2_54, %c0_55] : memref<1x20x20xf32, #tpu.memory_space<vmem>>, vector<1x16x16xf32>
    %c14 = arith.constant 14 : index
    %477 = memref.load %arg1[%c14] : memref<200xf32, #tpu.memory_space<smem>>
    %478 = vector.broadcast %477 : f32 to vector<1x16x16xf32>
    %479 = arith.mulf %478, %476 : vector<1x16x16xf32>
    %480 = arith.addf %447, %479 : vector<1x16x16xf32>
    %c114 = arith.constant 114 : index
    %481 = memref.load %arg1[%c114] : memref<200xf32, #tpu.memory_space<smem>>
    %482 = vector.broadcast %481 : f32 to vector<1x16x16xf32>
    %483 = arith.mulf %482, %476 : vector<1x16x16xf32>
    %484 = arith.addf %451, %483 : vector<1x16x16xf32>
    %c39 = arith.constant 39 : index
    %485 = memref.load %arg1[%c39] : memref<200xf32, #tpu.memory_space<smem>>
    %486 = vector.broadcast %485 : f32 to vector<1x16x16xf32>
    %487 = arith.mulf %486, %476 : vector<1x16x16xf32>
    %488 = arith.addf %455, %487 : vector<1x16x16xf32>
    %c139 = arith.constant 139 : index
    %489 = memref.load %arg1[%c139] : memref<200xf32, #tpu.memory_space<smem>>
    %490 = vector.broadcast %489 : f32 to vector<1x16x16xf32>
    %491 = arith.mulf %490, %476 : vector<1x16x16xf32>
    %492 = arith.addf %459, %491 : vector<1x16x16xf32>
    %c64 = arith.constant 64 : index
    %493 = memref.load %arg1[%c64] : memref<200xf32, #tpu.memory_space<smem>>
    %494 = vector.broadcast %493 : f32 to vector<1x16x16xf32>
    %495 = arith.mulf %494, %476 : vector<1x16x16xf32>
    %496 = arith.addf %463, %495 : vector<1x16x16xf32>
    %c164 = arith.constant 164 : index
    %497 = memref.load %arg1[%c164] : memref<200xf32, #tpu.memory_space<smem>>
    %498 = vector.broadcast %497 : f32 to vector<1x16x16xf32>
    %499 = arith.mulf %498, %476 : vector<1x16x16xf32>
    %500 = arith.addf %467, %499 : vector<1x16x16xf32>
    %c89 = arith.constant 89 : index
    %501 = memref.load %arg1[%c89] : memref<200xf32, #tpu.memory_space<smem>>
    %502 = vector.broadcast %501 : f32 to vector<1x16x16xf32>
    %503 = arith.mulf %502, %476 : vector<1x16x16xf32>
    %504 = arith.addf %471, %503 : vector<1x16x16xf32>
    %c189 = arith.constant 189 : index
    %505 = memref.load %arg1[%c189] : memref<200xf32, #tpu.memory_space<smem>>
    %506 = vector.broadcast %505 : f32 to vector<1x16x16xf32>
    %507 = arith.mulf %506, %476 : vector<1x16x16xf32>
    %508 = arith.addf %475, %507 : vector<1x16x16xf32>
    %c0_56 = arith.constant 0 : index
    %c1_57 = arith.constant 1 : index
    %c4_58 = arith.constant 4 : index
    %509 = vector.load %arg5[%c0_56, %c1_57, %c4_58] : memref<1x20x20xf32, #tpu.memory_space<vmem>>, vector<1x16x16xf32>
    %c15 = arith.constant 15 : index
    %510 = memref.load %arg1[%c15] : memref<200xf32, #tpu.memory_space<smem>>
    %511 = vector.broadcast %510 : f32 to vector<1x16x16xf32>
    %512 = arith.mulf %511, %509 : vector<1x16x16xf32>
    %513 = arith.addf %480, %512 : vector<1x16x16xf32>
    %c115 = arith.constant 115 : index
    %514 = memref.load %arg1[%c115] : memref<200xf32, #tpu.memory_space<smem>>
    %515 = vector.broadcast %514 : f32 to vector<1x16x16xf32>
    %516 = arith.mulf %515, %509 : vector<1x16x16xf32>
    %517 = arith.addf %484, %516 : vector<1x16x16xf32>
    %c40 = arith.constant 40 : index
    %518 = memref.load %arg1[%c40] : memref<200xf32, #tpu.memory_space<smem>>
    %519 = vector.broadcast %518 : f32 to vector<1x16x16xf32>
    %520 = arith.mulf %519, %509 : vector<1x16x16xf32>
    %521 = arith.addf %488, %520 : vector<1x16x16xf32>
    %c140 = arith.constant 140 : index
    %522 = memref.load %arg1[%c140] : memref<200xf32, #tpu.memory_space<smem>>
    %523 = vector.broadcast %522 : f32 to vector<1x16x16xf32>
    %524 = arith.mulf %523, %509 : vector<1x16x16xf32>
    %525 = arith.addf %492, %524 : vector<1x16x16xf32>
    %c65 = arith.constant 65 : index
    %526 = memref.load %arg1[%c65] : memref<200xf32, #tpu.memory_space<smem>>
    %527 = vector.broadcast %526 : f32 to vector<1x16x16xf32>
    %528 = arith.mulf %527, %509 : vector<1x16x16xf32>
    %529 = arith.addf %496, %528 : vector<1x16x16xf32>
    %c165 = arith.constant 165 : index
    %530 = memref.load %arg1[%c165] : memref<200xf32, #tpu.memory_space<smem>>
    %531 = vector.broadcast %530 : f32 to vector<1x16x16xf32>
    %532 = arith.mulf %531, %509 : vector<1x16x16xf32>
    %533 = arith.addf %500, %532 : vector<1x16x16xf32>
    %c90 = arith.constant 90 : index
    %534 = memref.load %arg1[%c90] : memref<200xf32, #tpu.memory_space<smem>>
    %535 = vector.broadcast %534 : f32 to vector<1x16x16xf32>
    %536 = arith.mulf %535, %509 : vector<1x16x16xf32>
    %537 = arith.addf %504, %536 : vector<1x16x16xf32>
    %c190 = arith.constant 190 : index
    %538 = memref.load %arg1[%c190] : memref<200xf32, #tpu.memory_space<smem>>
    %539 = vector.broadcast %538 : f32 to vector<1x16x16xf32>
    %540 = arith.mulf %539, %509 : vector<1x16x16xf32>
    %541 = arith.addf %508, %540 : vector<1x16x16xf32>
    %c0_59 = arith.constant 0 : index
    %c1_60 = arith.constant 1 : index
    %c3_61 = arith.constant 3 : index
    %542 = vector.load %arg5[%c0_59, %c1_60, %c3_61] : memref<1x20x20xf32, #tpu.memory_space<vmem>>, vector<1x16x16xf32>
    %c16 = arith.constant 16 : index
    %543 = memref.load %arg1[%c16] : memref<200xf32, #tpu.memory_space<smem>>
    %544 = vector.broadcast %543 : f32 to vector<1x16x16xf32>
    %545 = arith.mulf %544, %542 : vector<1x16x16xf32>
    %546 = arith.addf %513, %545 : vector<1x16x16xf32>
    %c116 = arith.constant 116 : index
    %547 = memref.load %arg1[%c116] : memref<200xf32, #tpu.memory_space<smem>>
    %548 = vector.broadcast %547 : f32 to vector<1x16x16xf32>
    %549 = arith.mulf %548, %542 : vector<1x16x16xf32>
    %550 = arith.addf %517, %549 : vector<1x16x16xf32>
    %c41 = arith.constant 41 : index
    %551 = memref.load %arg1[%c41] : memref<200xf32, #tpu.memory_space<smem>>
    %552 = vector.broadcast %551 : f32 to vector<1x16x16xf32>
    %553 = arith.mulf %552, %542 : vector<1x16x16xf32>
    %554 = arith.addf %521, %553 : vector<1x16x16xf32>
    %c141 = arith.constant 141 : index
    %555 = memref.load %arg1[%c141] : memref<200xf32, #tpu.memory_space<smem>>
    %556 = vector.broadcast %555 : f32 to vector<1x16x16xf32>
    %557 = arith.mulf %556, %542 : vector<1x16x16xf32>
    %558 = arith.addf %525, %557 : vector<1x16x16xf32>
    %c66 = arith.constant 66 : index
    %559 = memref.load %arg1[%c66] : memref<200xf32, #tpu.memory_space<smem>>
    %560 = vector.broadcast %559 : f32 to vector<1x16x16xf32>
    %561 = arith.mulf %560, %542 : vector<1x16x16xf32>
    %562 = arith.addf %529, %561 : vector<1x16x16xf32>
    %c166 = arith.constant 166 : index
    %563 = memref.load %arg1[%c166] : memref<200xf32, #tpu.memory_space<smem>>
    %564 = vector.broadcast %563 : f32 to vector<1x16x16xf32>
    %565 = arith.mulf %564, %542 : vector<1x16x16xf32>
    %566 = arith.addf %533, %565 : vector<1x16x16xf32>
    %c91 = arith.constant 91 : index
    %567 = memref.load %arg1[%c91] : memref<200xf32, #tpu.memory_space<smem>>
    %568 = vector.broadcast %567 : f32 to vector<1x16x16xf32>
    %569 = arith.mulf %568, %542 : vector<1x16x16xf32>
    %570 = arith.addf %537, %569 : vector<1x16x16xf32>
    %c191 = arith.constant 191 : index
    %571 = memref.load %arg1[%c191] : memref<200xf32, #tpu.memory_space<smem>>
    %572 = vector.broadcast %571 : f32 to vector<1x16x16xf32>
    %573 = arith.mulf %572, %542 : vector<1x16x16xf32>
    %574 = arith.addf %541, %573 : vector<1x16x16xf32>
    %c0_62 = arith.constant 0 : index
    %c1_63 = arith.constant 1 : index
    %c2_64 = arith.constant 2 : index
    %575 = vector.load %arg5[%c0_62, %c1_63, %c2_64] : memref<1x20x20xf32, #tpu.memory_space<vmem>>, vector<1x16x16xf32>
    %c17 = arith.constant 17 : index
    %576 = memref.load %arg1[%c17] : memref<200xf32, #tpu.memory_space<smem>>
    %577 = vector.broadcast %576 : f32 to vector<1x16x16xf32>
    %578 = arith.mulf %577, %575 : vector<1x16x16xf32>
    %579 = arith.addf %546, %578 : vector<1x16x16xf32>
    %c117 = arith.constant 117 : index
    %580 = memref.load %arg1[%c117] : memref<200xf32, #tpu.memory_space<smem>>
    %581 = vector.broadcast %580 : f32 to vector<1x16x16xf32>
    %582 = arith.mulf %581, %575 : vector<1x16x16xf32>
    %583 = arith.addf %550, %582 : vector<1x16x16xf32>
    %c42 = arith.constant 42 : index
    %584 = memref.load %arg1[%c42] : memref<200xf32, #tpu.memory_space<smem>>
    %585 = vector.broadcast %584 : f32 to vector<1x16x16xf32>
    %586 = arith.mulf %585, %575 : vector<1x16x16xf32>
    %587 = arith.addf %554, %586 : vector<1x16x16xf32>
    %c142 = arith.constant 142 : index
    %588 = memref.load %arg1[%c142] : memref<200xf32, #tpu.memory_space<smem>>
    %589 = vector.broadcast %588 : f32 to vector<1x16x16xf32>
    %590 = arith.mulf %589, %575 : vector<1x16x16xf32>
    %591 = arith.addf %558, %590 : vector<1x16x16xf32>
    %c67 = arith.constant 67 : index
    %592 = memref.load %arg1[%c67] : memref<200xf32, #tpu.memory_space<smem>>
    %593 = vector.broadcast %592 : f32 to vector<1x16x16xf32>
    %594 = arith.mulf %593, %575 : vector<1x16x16xf32>
    %595 = arith.addf %562, %594 : vector<1x16x16xf32>
    %c167 = arith.constant 167 : index
    %596 = memref.load %arg1[%c167] : memref<200xf32, #tpu.memory_space<smem>>
    %597 = vector.broadcast %596 : f32 to vector<1x16x16xf32>
    %598 = arith.mulf %597, %575 : vector<1x16x16xf32>
    %599 = arith.addf %566, %598 : vector<1x16x16xf32>
    %c92 = arith.constant 92 : index
    %600 = memref.load %arg1[%c92] : memref<200xf32, #tpu.memory_space<smem>>
    %601 = vector.broadcast %600 : f32 to vector<1x16x16xf32>
    %602 = arith.mulf %601, %575 : vector<1x16x16xf32>
    %603 = arith.addf %570, %602 : vector<1x16x16xf32>
    %c192 = arith.constant 192 : index
    %604 = memref.load %arg1[%c192] : memref<200xf32, #tpu.memory_space<smem>>
    %605 = vector.broadcast %604 : f32 to vector<1x16x16xf32>
    %606 = arith.mulf %605, %575 : vector<1x16x16xf32>
    %607 = arith.addf %574, %606 : vector<1x16x16xf32>
    %c0_65 = arith.constant 0 : index
    %c1_66 = arith.constant 1 : index
    %c1_67 = arith.constant 1 : index
    %608 = vector.load %arg5[%c0_65, %c1_66, %c1_67] : memref<1x20x20xf32, #tpu.memory_space<vmem>>, vector<1x16x16xf32>
    %c18 = arith.constant 18 : index
    %609 = memref.load %arg1[%c18] : memref<200xf32, #tpu.memory_space<smem>>
    %610 = vector.broadcast %609 : f32 to vector<1x16x16xf32>
    %611 = arith.mulf %610, %608 : vector<1x16x16xf32>
    %612 = arith.addf %579, %611 : vector<1x16x16xf32>
    %c118 = arith.constant 118 : index
    %613 = memref.load %arg1[%c118] : memref<200xf32, #tpu.memory_space<smem>>
    %614 = vector.broadcast %613 : f32 to vector<1x16x16xf32>
    %615 = arith.mulf %614, %608 : vector<1x16x16xf32>
    %616 = arith.addf %583, %615 : vector<1x16x16xf32>
    %c43 = arith.constant 43 : index
    %617 = memref.load %arg1[%c43] : memref<200xf32, #tpu.memory_space<smem>>
    %618 = vector.broadcast %617 : f32 to vector<1x16x16xf32>
    %619 = arith.mulf %618, %608 : vector<1x16x16xf32>
    %620 = arith.addf %587, %619 : vector<1x16x16xf32>
    %c143 = arith.constant 143 : index
    %621 = memref.load %arg1[%c143] : memref<200xf32, #tpu.memory_space<smem>>
    %622 = vector.broadcast %621 : f32 to vector<1x16x16xf32>
    %623 = arith.mulf %622, %608 : vector<1x16x16xf32>
    %624 = arith.addf %591, %623 : vector<1x16x16xf32>
    %c68 = arith.constant 68 : index
    %625 = memref.load %arg1[%c68] : memref<200xf32, #tpu.memory_space<smem>>
    %626 = vector.broadcast %625 : f32 to vector<1x16x16xf32>
    %627 = arith.mulf %626, %608 : vector<1x16x16xf32>
    %628 = arith.addf %595, %627 : vector<1x16x16xf32>
    %c168 = arith.constant 168 : index
    %629 = memref.load %arg1[%c168] : memref<200xf32, #tpu.memory_space<smem>>
    %630 = vector.broadcast %629 : f32 to vector<1x16x16xf32>
    %631 = arith.mulf %630, %608 : vector<1x16x16xf32>
    %632 = arith.addf %599, %631 : vector<1x16x16xf32>
    %c93 = arith.constant 93 : index
    %633 = memref.load %arg1[%c93] : memref<200xf32, #tpu.memory_space<smem>>
    %634 = vector.broadcast %633 : f32 to vector<1x16x16xf32>
    %635 = arith.mulf %634, %608 : vector<1x16x16xf32>
    %636 = arith.addf %603, %635 : vector<1x16x16xf32>
    %c193 = arith.constant 193 : index
    %637 = memref.load %arg1[%c193] : memref<200xf32, #tpu.memory_space<smem>>
    %638 = vector.broadcast %637 : f32 to vector<1x16x16xf32>
    %639 = arith.mulf %638, %608 : vector<1x16x16xf32>
    %640 = arith.addf %607, %639 : vector<1x16x16xf32>
    %c0_68 = arith.constant 0 : index
    %c1_69 = arith.constant 1 : index
    %c0_70 = arith.constant 0 : index
    %641 = vector.load %arg5[%c0_68, %c1_69, %c0_70] : memref<1x20x20xf32, #tpu.memory_space<vmem>>, vector<1x16x16xf32>
    %c19 = arith.constant 19 : index
    %642 = memref.load %arg1[%c19] : memref<200xf32, #tpu.memory_space<smem>>
    %643 = vector.broadcast %642 : f32 to vector<1x16x16xf32>
    %644 = arith.mulf %643, %641 : vector<1x16x16xf32>
    %645 = arith.addf %612, %644 : vector<1x16x16xf32>
    %c119 = arith.constant 119 : index
    %646 = memref.load %arg1[%c119] : memref<200xf32, #tpu.memory_space<smem>>
    %647 = vector.broadcast %646 : f32 to vector<1x16x16xf32>
    %648 = arith.mulf %647, %641 : vector<1x16x16xf32>
    %649 = arith.addf %616, %648 : vector<1x16x16xf32>
    %c44 = arith.constant 44 : index
    %650 = memref.load %arg1[%c44] : memref<200xf32, #tpu.memory_space<smem>>
    %651 = vector.broadcast %650 : f32 to vector<1x16x16xf32>
    %652 = arith.mulf %651, %641 : vector<1x16x16xf32>
    %653 = arith.addf %620, %652 : vector<1x16x16xf32>
    %c144 = arith.constant 144 : index
    %654 = memref.load %arg1[%c144] : memref<200xf32, #tpu.memory_space<smem>>
    %655 = vector.broadcast %654 : f32 to vector<1x16x16xf32>
    %656 = arith.mulf %655, %641 : vector<1x16x16xf32>
    %657 = arith.addf %624, %656 : vector<1x16x16xf32>
    %c69 = arith.constant 69 : index
    %658 = memref.load %arg1[%c69] : memref<200xf32, #tpu.memory_space<smem>>
    %659 = vector.broadcast %658 : f32 to vector<1x16x16xf32>
    %660 = arith.mulf %659, %641 : vector<1x16x16xf32>
    %661 = arith.addf %628, %660 : vector<1x16x16xf32>
    %c169 = arith.constant 169 : index
    %662 = memref.load %arg1[%c169] : memref<200xf32, #tpu.memory_space<smem>>
    %663 = vector.broadcast %662 : f32 to vector<1x16x16xf32>
    %664 = arith.mulf %663, %641 : vector<1x16x16xf32>
    %665 = arith.addf %632, %664 : vector<1x16x16xf32>
    %c94 = arith.constant 94 : index
    %666 = memref.load %arg1[%c94] : memref<200xf32, #tpu.memory_space<smem>>
    %667 = vector.broadcast %666 : f32 to vector<1x16x16xf32>
    %668 = arith.mulf %667, %641 : vector<1x16x16xf32>
    %669 = arith.addf %636, %668 : vector<1x16x16xf32>
    %c194 = arith.constant 194 : index
    %670 = memref.load %arg1[%c194] : memref<200xf32, #tpu.memory_space<smem>>
    %671 = vector.broadcast %670 : f32 to vector<1x16x16xf32>
    %672 = arith.mulf %671, %641 : vector<1x16x16xf32>
    %673 = arith.addf %640, %672 : vector<1x16x16xf32>
    %c0_71 = arith.constant 0 : index
    %c0_72 = arith.constant 0 : index
    %c4_73 = arith.constant 4 : index
    %674 = vector.load %arg5[%c0_71, %c0_72, %c4_73] : memref<1x20x20xf32, #tpu.memory_space<vmem>>, vector<1x16x16xf32>
    %c20 = arith.constant 20 : index
    %675 = memref.load %arg1[%c20] : memref<200xf32, #tpu.memory_space<smem>>
    %676 = vector.broadcast %675 : f32 to vector<1x16x16xf32>
    %677 = arith.mulf %676, %674 : vector<1x16x16xf32>
    %678 = arith.addf %645, %677 : vector<1x16x16xf32>
    %c120 = arith.constant 120 : index
    %679 = memref.load %arg1[%c120] : memref<200xf32, #tpu.memory_space<smem>>
    %680 = vector.broadcast %679 : f32 to vector<1x16x16xf32>
    %681 = arith.mulf %680, %674 : vector<1x16x16xf32>
    %682 = arith.addf %649, %681 : vector<1x16x16xf32>
    %c45 = arith.constant 45 : index
    %683 = memref.load %arg1[%c45] : memref<200xf32, #tpu.memory_space<smem>>
    %684 = vector.broadcast %683 : f32 to vector<1x16x16xf32>
    %685 = arith.mulf %684, %674 : vector<1x16x16xf32>
    %686 = arith.addf %653, %685 : vector<1x16x16xf32>
    %c145 = arith.constant 145 : index
    %687 = memref.load %arg1[%c145] : memref<200xf32, #tpu.memory_space<smem>>
    %688 = vector.broadcast %687 : f32 to vector<1x16x16xf32>
    %689 = arith.mulf %688, %674 : vector<1x16x16xf32>
    %690 = arith.addf %657, %689 : vector<1x16x16xf32>
    %c70 = arith.constant 70 : index
    %691 = memref.load %arg1[%c70] : memref<200xf32, #tpu.memory_space<smem>>
    %692 = vector.broadcast %691 : f32 to vector<1x16x16xf32>
    %693 = arith.mulf %692, %674 : vector<1x16x16xf32>
    %694 = arith.addf %661, %693 : vector<1x16x16xf32>
    %c170 = arith.constant 170 : index
    %695 = memref.load %arg1[%c170] : memref<200xf32, #tpu.memory_space<smem>>
    %696 = vector.broadcast %695 : f32 to vector<1x16x16xf32>
    %697 = arith.mulf %696, %674 : vector<1x16x16xf32>
    %698 = arith.addf %665, %697 : vector<1x16x16xf32>
    %c95 = arith.constant 95 : index
    %699 = memref.load %arg1[%c95] : memref<200xf32, #tpu.memory_space<smem>>
    %700 = vector.broadcast %699 : f32 to vector<1x16x16xf32>
    %701 = arith.mulf %700, %674 : vector<1x16x16xf32>
    %702 = arith.addf %669, %701 : vector<1x16x16xf32>
    %c195 = arith.constant 195 : index
    %703 = memref.load %arg1[%c195] : memref<200xf32, #tpu.memory_space<smem>>
    %704 = vector.broadcast %703 : f32 to vector<1x16x16xf32>
    %705 = arith.mulf %704, %674 : vector<1x16x16xf32>
    %706 = arith.addf %673, %705 : vector<1x16x16xf32>
    %c0_74 = arith.constant 0 : index
    %c0_75 = arith.constant 0 : index
    %c3_76 = arith.constant 3 : index
    %707 = vector.load %arg5[%c0_74, %c0_75, %c3_76] : memref<1x20x20xf32, #tpu.memory_space<vmem>>, vector<1x16x16xf32>
    %c21 = arith.constant 21 : index
    %708 = memref.load %arg1[%c21] : memref<200xf32, #tpu.memory_space<smem>>
    %709 = vector.broadcast %708 : f32 to vector<1x16x16xf32>
    %710 = arith.mulf %709, %707 : vector<1x16x16xf32>
    %711 = arith.addf %678, %710 : vector<1x16x16xf32>
    %c121 = arith.constant 121 : index
    %712 = memref.load %arg1[%c121] : memref<200xf32, #tpu.memory_space<smem>>
    %713 = vector.broadcast %712 : f32 to vector<1x16x16xf32>
    %714 = arith.mulf %713, %707 : vector<1x16x16xf32>
    %715 = arith.addf %682, %714 : vector<1x16x16xf32>
    %c46 = arith.constant 46 : index
    %716 = memref.load %arg1[%c46] : memref<200xf32, #tpu.memory_space<smem>>
    %717 = vector.broadcast %716 : f32 to vector<1x16x16xf32>
    %718 = arith.mulf %717, %707 : vector<1x16x16xf32>
    %719 = arith.addf %686, %718 : vector<1x16x16xf32>
    %c146 = arith.constant 146 : index
    %720 = memref.load %arg1[%c146] : memref<200xf32, #tpu.memory_space<smem>>
    %721 = vector.broadcast %720 : f32 to vector<1x16x16xf32>
    %722 = arith.mulf %721, %707 : vector<1x16x16xf32>
    %723 = arith.addf %690, %722 : vector<1x16x16xf32>
    %c71 = arith.constant 71 : index
    %724 = memref.load %arg1[%c71] : memref<200xf32, #tpu.memory_space<smem>>
    %725 = vector.broadcast %724 : f32 to vector<1x16x16xf32>
    %726 = arith.mulf %725, %707 : vector<1x16x16xf32>
    %727 = arith.addf %694, %726 : vector<1x16x16xf32>
    %c171 = arith.constant 171 : index
    %728 = memref.load %arg1[%c171] : memref<200xf32, #tpu.memory_space<smem>>
    %729 = vector.broadcast %728 : f32 to vector<1x16x16xf32>
    %730 = arith.mulf %729, %707 : vector<1x16x16xf32>
    %731 = arith.addf %698, %730 : vector<1x16x16xf32>
    %c96 = arith.constant 96 : index
    %732 = memref.load %arg1[%c96] : memref<200xf32, #tpu.memory_space<smem>>
    %733 = vector.broadcast %732 : f32 to vector<1x16x16xf32>
    %734 = arith.mulf %733, %707 : vector<1x16x16xf32>
    %735 = arith.addf %702, %734 : vector<1x16x16xf32>
    %c196 = arith.constant 196 : index
    %736 = memref.load %arg1[%c196] : memref<200xf32, #tpu.memory_space<smem>>
    %737 = vector.broadcast %736 : f32 to vector<1x16x16xf32>
    %738 = arith.mulf %737, %707 : vector<1x16x16xf32>
    %739 = arith.addf %706, %738 : vector<1x16x16xf32>
    %c0_77 = arith.constant 0 : index
    %c0_78 = arith.constant 0 : index
    %c2_79 = arith.constant 2 : index
    %740 = vector.load %arg5[%c0_77, %c0_78, %c2_79] : memref<1x20x20xf32, #tpu.memory_space<vmem>>, vector<1x16x16xf32>
    %c22 = arith.constant 22 : index
    %741 = memref.load %arg1[%c22] : memref<200xf32, #tpu.memory_space<smem>>
    %742 = vector.broadcast %741 : f32 to vector<1x16x16xf32>
    %743 = arith.mulf %742, %740 : vector<1x16x16xf32>
    %744 = arith.addf %711, %743 : vector<1x16x16xf32>
    %c122 = arith.constant 122 : index
    %745 = memref.load %arg1[%c122] : memref<200xf32, #tpu.memory_space<smem>>
    %746 = vector.broadcast %745 : f32 to vector<1x16x16xf32>
    %747 = arith.mulf %746, %740 : vector<1x16x16xf32>
    %748 = arith.addf %715, %747 : vector<1x16x16xf32>
    %c47 = arith.constant 47 : index
    %749 = memref.load %arg1[%c47] : memref<200xf32, #tpu.memory_space<smem>>
    %750 = vector.broadcast %749 : f32 to vector<1x16x16xf32>
    %751 = arith.mulf %750, %740 : vector<1x16x16xf32>
    %752 = arith.addf %719, %751 : vector<1x16x16xf32>
    %c147 = arith.constant 147 : index
    %753 = memref.load %arg1[%c147] : memref<200xf32, #tpu.memory_space<smem>>
    %754 = vector.broadcast %753 : f32 to vector<1x16x16xf32>
    %755 = arith.mulf %754, %740 : vector<1x16x16xf32>
    %756 = arith.addf %723, %755 : vector<1x16x16xf32>
    %c72 = arith.constant 72 : index
    %757 = memref.load %arg1[%c72] : memref<200xf32, #tpu.memory_space<smem>>
    %758 = vector.broadcast %757 : f32 to vector<1x16x16xf32>
    %759 = arith.mulf %758, %740 : vector<1x16x16xf32>
    %760 = arith.addf %727, %759 : vector<1x16x16xf32>
    %c172 = arith.constant 172 : index
    %761 = memref.load %arg1[%c172] : memref<200xf32, #tpu.memory_space<smem>>
    %762 = vector.broadcast %761 : f32 to vector<1x16x16xf32>
    %763 = arith.mulf %762, %740 : vector<1x16x16xf32>
    %764 = arith.addf %731, %763 : vector<1x16x16xf32>
    %c97 = arith.constant 97 : index
    %765 = memref.load %arg1[%c97] : memref<200xf32, #tpu.memory_space<smem>>
    %766 = vector.broadcast %765 : f32 to vector<1x16x16xf32>
    %767 = arith.mulf %766, %740 : vector<1x16x16xf32>
    %768 = arith.addf %735, %767 : vector<1x16x16xf32>
    %c197 = arith.constant 197 : index
    %769 = memref.load %arg1[%c197] : memref<200xf32, #tpu.memory_space<smem>>
    %770 = vector.broadcast %769 : f32 to vector<1x16x16xf32>
    %771 = arith.mulf %770, %740 : vector<1x16x16xf32>
    %772 = arith.addf %739, %771 : vector<1x16x16xf32>
    %c0_80 = arith.constant 0 : index
    %c0_81 = arith.constant 0 : index
    %c1_82 = arith.constant 1 : index
    %773 = vector.load %arg5[%c0_80, %c0_81, %c1_82] : memref<1x20x20xf32, #tpu.memory_space<vmem>>, vector<1x16x16xf32>
    %c23 = arith.constant 23 : index
    %774 = memref.load %arg1[%c23] : memref<200xf32, #tpu.memory_space<smem>>
    %775 = vector.broadcast %774 : f32 to vector<1x16x16xf32>
    %776 = arith.mulf %775, %773 : vector<1x16x16xf32>
    %777 = arith.addf %744, %776 : vector<1x16x16xf32>
    %c123 = arith.constant 123 : index
    %778 = memref.load %arg1[%c123] : memref<200xf32, #tpu.memory_space<smem>>
    %779 = vector.broadcast %778 : f32 to vector<1x16x16xf32>
    %780 = arith.mulf %779, %773 : vector<1x16x16xf32>
    %781 = arith.addf %748, %780 : vector<1x16x16xf32>
    %c48 = arith.constant 48 : index
    %782 = memref.load %arg1[%c48] : memref<200xf32, #tpu.memory_space<smem>>
    %783 = vector.broadcast %782 : f32 to vector<1x16x16xf32>
    %784 = arith.mulf %783, %773 : vector<1x16x16xf32>
    %785 = arith.addf %752, %784 : vector<1x16x16xf32>
    %c148 = arith.constant 148 : index
    %786 = memref.load %arg1[%c148] : memref<200xf32, #tpu.memory_space<smem>>
    %787 = vector.broadcast %786 : f32 to vector<1x16x16xf32>
    %788 = arith.mulf %787, %773 : vector<1x16x16xf32>
    %789 = arith.addf %756, %788 : vector<1x16x16xf32>
    %c73 = arith.constant 73 : index
    %790 = memref.load %arg1[%c73] : memref<200xf32, #tpu.memory_space<smem>>
    %791 = vector.broadcast %790 : f32 to vector<1x16x16xf32>
    %792 = arith.mulf %791, %773 : vector<1x16x16xf32>
    %793 = arith.addf %760, %792 : vector<1x16x16xf32>
    %c173 = arith.constant 173 : index
    %794 = memref.load %arg1[%c173] : memref<200xf32, #tpu.memory_space<smem>>
    %795 = vector.broadcast %794 : f32 to vector<1x16x16xf32>
    %796 = arith.mulf %795, %773 : vector<1x16x16xf32>
    %797 = arith.addf %764, %796 : vector<1x16x16xf32>
    %c98 = arith.constant 98 : index
    %798 = memref.load %arg1[%c98] : memref<200xf32, #tpu.memory_space<smem>>
    %799 = vector.broadcast %798 : f32 to vector<1x16x16xf32>
    %800 = arith.mulf %799, %773 : vector<1x16x16xf32>
    %801 = arith.addf %768, %800 : vector<1x16x16xf32>
    %c198 = arith.constant 198 : index
    %802 = memref.load %arg1[%c198] : memref<200xf32, #tpu.memory_space<smem>>
    %803 = vector.broadcast %802 : f32 to vector<1x16x16xf32>
    %804 = arith.mulf %803, %773 : vector<1x16x16xf32>
    %805 = arith.addf %772, %804 : vector<1x16x16xf32>
    %c0_83 = arith.constant 0 : index
    %c0_84 = arith.constant 0 : index
    %c0_85 = arith.constant 0 : index
    %806 = vector.load %arg5[%c0_83, %c0_84, %c0_85] : memref<1x20x20xf32, #tpu.memory_space<vmem>>, vector<1x16x16xf32>
    %c24 = arith.constant 24 : index
    %807 = memref.load %arg1[%c24] : memref<200xf32, #tpu.memory_space<smem>>
    %808 = vector.broadcast %807 : f32 to vector<1x16x16xf32>
    %809 = arith.mulf %808, %806 : vector<1x16x16xf32>
    %810 = arith.addf %777, %809 : vector<1x16x16xf32>
    %c124 = arith.constant 124 : index
    %811 = memref.load %arg1[%c124] : memref<200xf32, #tpu.memory_space<smem>>
    %812 = vector.broadcast %811 : f32 to vector<1x16x16xf32>
    %813 = arith.mulf %812, %806 : vector<1x16x16xf32>
    %814 = arith.addf %781, %813 : vector<1x16x16xf32>
    %c49 = arith.constant 49 : index
    %815 = memref.load %arg1[%c49] : memref<200xf32, #tpu.memory_space<smem>>
    %816 = vector.broadcast %815 : f32 to vector<1x16x16xf32>
    %817 = arith.mulf %816, %806 : vector<1x16x16xf32>
    %818 = arith.addf %785, %817 : vector<1x16x16xf32>
    %c149 = arith.constant 149 : index
    %819 = memref.load %arg1[%c149] : memref<200xf32, #tpu.memory_space<smem>>
    %820 = vector.broadcast %819 : f32 to vector<1x16x16xf32>
    %821 = arith.mulf %820, %806 : vector<1x16x16xf32>
    %822 = arith.addf %789, %821 : vector<1x16x16xf32>
    %c74 = arith.constant 74 : index
    %823 = memref.load %arg1[%c74] : memref<200xf32, #tpu.memory_space<smem>>
    %824 = vector.broadcast %823 : f32 to vector<1x16x16xf32>
    %825 = arith.mulf %824, %806 : vector<1x16x16xf32>
    %826 = arith.addf %793, %825 : vector<1x16x16xf32>
    %c174 = arith.constant 174 : index
    %827 = memref.load %arg1[%c174] : memref<200xf32, #tpu.memory_space<smem>>
    %828 = vector.broadcast %827 : f32 to vector<1x16x16xf32>
    %829 = arith.mulf %828, %806 : vector<1x16x16xf32>
    %830 = arith.addf %797, %829 : vector<1x16x16xf32>
    %c99 = arith.constant 99 : index
    %831 = memref.load %arg1[%c99] : memref<200xf32, #tpu.memory_space<smem>>
    %832 = vector.broadcast %831 : f32 to vector<1x16x16xf32>
    %833 = arith.mulf %832, %806 : vector<1x16x16xf32>
    %834 = arith.addf %801, %833 : vector<1x16x16xf32>
    %c199 = arith.constant 199 : index
    %835 = memref.load %arg1[%c199] : memref<200xf32, #tpu.memory_space<smem>>
    %836 = vector.broadcast %835 : f32 to vector<1x16x16xf32>
    %837 = arith.mulf %836, %806 : vector<1x16x16xf32>
    %838 = arith.addf %805, %837 : vector<1x16x16xf32>
    %839 = arith.mulf %810, %810 : vector<1x16x16xf32>
    %840 = arith.addf %13, %839 : vector<1x16x16xf32>
    %841 = arith.mulf %814, %814 : vector<1x16x16xf32>
    %842 = arith.addf %840, %841 : vector<1x16x16xf32>
    %843 = arith.mulf %818, %818 : vector<1x16x16xf32>
    %844 = arith.addf %842, %843 : vector<1x16x16xf32>
    %845 = arith.mulf %822, %822 : vector<1x16x16xf32>
    %846 = arith.addf %844, %845 : vector<1x16x16xf32>
    %847 = arith.mulf %826, %826 : vector<1x16x16xf32>
    %848 = arith.addf %846, %847 : vector<1x16x16xf32>
    %849 = arith.mulf %830, %830 : vector<1x16x16xf32>
    %850 = arith.addf %848, %849 : vector<1x16x16xf32>
    %851 = arith.mulf %834, %834 : vector<1x16x16xf32>
    %852 = arith.addf %850, %851 : vector<1x16x16xf32>
    %853 = arith.mulf %838, %838 : vector<1x16x16xf32>
    %854 = arith.addf %852, %853 : vector<1x16x16xf32>
    %cst_86 = arith.constant 2.250000e-01 : f32
    %855 = vector.broadcast %cst_86 : f32 to vector<1x16x16xf32>
    %856 = arith.subf %854, %855 : vector<1x16x16xf32>
    %cst_87 = arith.constant 5.000000e+01 : f32
    %857 = vector.broadcast %cst_87 : f32 to vector<1x16x16xf32>
    %858 = arith.mulf %857, %856 : vector<1x16x16xf32>
    %cst_88 = arith.constant 5.000000e-01 : f32
    %859 = vector.broadcast %cst_88 : f32 to vector<1x16x16xf32>
    %860 = arith.mulf %859, %858 : vector<1x16x16xf32>
    %861 = math.tanh %860 : vector<1x16x16xf32>
    %cst_89 = arith.constant 1.000000e+00 : f32
    %862 = vector.broadcast %cst_89 : f32 to vector<1x16x16xf32>
    %863 = arith.addf %861, %862 : vector<1x16x16xf32>
    %cst_90 = arith.constant 5.000000e-01 : f32
    %864 = vector.broadcast %cst_90 : f32 to vector<1x16x16xf32>
    %865 = arith.mulf %864, %863 : vector<1x16x16xf32>
    %c0_91 = arith.constant 0 : index
    %c0_92 = arith.constant 0 : index
    %c0_93 = arith.constant 0 : index
    %866 = vector.load %arg3[%c0_91, %c0_92, %c0_93] : memref<1x16x16xf32, #tpu.memory_space<vmem>>, vector<1x16x16xf32>
    %867 = arith.subf %865, %866 : vector<1x16x16xf32>
    %868 = arith.mulf %867, %867 : vector<1x16x16xf32>
    %869 = arith.mulf %868, %868 : vector<1x16x16xf32>
    %870 = vector.shape_cast %869 : vector<1x16x16xf32> to vector<1x1x16x16xf32>
    %cst_94 = arith.constant dense<0.000000e+00> : vector<1xf32>
    %871 = vector.multi_reduction <add>, %870, %cst_94 [1, 2, 3] : vector<1x1x16x16xf32> to vector<1xf32>
    %872 = vector.shape_cast %871 : vector<1xf32> to vector<1x1x1x1xf32>
    %873 = vector.extract %872[0, 0, 0, 0] : f32 from vector<1x1x1x1xf32>
    %874 = vector.broadcast %873 : f32 to vector<1x1x128xf32>
    %c0_95 = arith.constant 0 : index
    %c0_96 = arith.constant 0 : index
    %c0_97 = arith.constant 0 : index
    %875 = vector.load %arg4[%c0_95, %c0_96, %c0_97] : memref<1x1x128xf32, #tpu.memory_space<vmem>>, vector<1x1x128xf32>
    tpu.vector_store %arg4[%c0_95, %c0_96, %c0_97], %874 {strides = array<i32>} : memref<1x1x128xf32, #tpu.memory_space<vmem>>, vector<1x1x128xf32>,
    return
  }
  func.func @transform_0(%arg0: i32) -> i32 {
    %c0_i32 = arith.constant 0 : i32
    %c0_i32_0 = arith.constant 0 : i32
    return %c0_i32 : i32
  }
  func.func @transform_1(%arg0: i32) -> (i32, i32, i32) {
    %c0_i32 = arith.constant 0 : i32
    %c0_i32_0 = arith.constant 0 : i32
    %c0_i32_1 = arith.constant 0 : i32
    return %arg0, %c0_i32, %c0_i32_0 : i32, i32, i32
  }
  func.func @transform_2(%arg0: i32) -> (i32, i32, i32) {
    %c0_i32 = arith.constant 0 : i32
    %c0_i32_0 = arith.constant 0 : i32
    %c0_i32_1 = arith.constant 0 : i32
    return %arg0, %c0_i32, %c0_i32_0 : i32, i32, i32
  }
  func.func @transform_3(%arg0: i32) -> (i32, i32, i32) {
    %c0_i32 = arith.constant 0 : i32
    %c0_i32_0 = arith.constant 0 : i32
    %c0_i32_1 = arith.constant 0 : i32
    return %arg0, %c0_i32, %c0_i32_0 : i32, i32, i32
  }
}

</mosaic_0001>

<llo_original>
// kernel: tpu_custom_call.1
$region0: #{tpu_custom_call.1}
  #allocation0 [shape = 'u32[]', space=smem, size = 0x4, offset = 0x4, fixed_abs, tag = 'smem constant byte address 0x4 - core index']
  #allocation1 [shape = 'u32[72,128]{1,0:T(1,128)}', space=vmem, size = 0x9000, scoped, tag = 'internal scratch']
  #allocation2 [shape = 'f32[1,20,20]{2,1,0:T(8,128)}', space=vmem, size = 0x3000, scoped, tag = 'scratch operand']
  %s0 = inlined_call_operand.vmem [shape: f32[200], index: 0, kind: input, shape index: {}]
  %s1 = inlined_call_operand.vmem [shape: f32[2,20,20], index: 1, kind: input, shape index: {}]
  %s2 = inlined_call_operand.vmem [shape: f32[2,16,16], index: 2, kind: input, shape index: {}]
  %s3 = inlined_call_operand.hbm [shape: f32[2,1,128], index: 3, kind: output, shape index: {}]
  %s4 = sld [smem:[#allocation0]]
  $region49: #{tpu_custom_call.1} parent=0
    _
  %s6 = ssub.s32 1, %s4
  %s7 = scalar_select 0, %s6, %s4
  $region1: #{tpu_custom_call.1} parent=0
    #allocation3 [shape = 'u8[1024]{0}', space=smem, size = 0x400, scoped, tag = 'input window, operand 0, single buffered']
    #allocation4 [shape = 's32[2]{0}', space=sflag, size = 0x8, scoped, tag = 'scoped memory for tpu_custom_call.1']
    #allocation5 [shape = 's32[2]{0}', space=sflag, size = 0x8, scoped, tag = 'scoped memory for tpu_custom_call.1']
    #allocation6 [shape = 'u8[1024]{0}', space=vmem, size = 0x400, scoped, tag = 'output window, operand 0']
    %8 = vsyncpa [#allocation5], 0
    %9 = vsyncpa [#allocation4], 0
    %s10 = scalar_lea.sflag [#allocation4], 1
    %11 = vsyncpa %s10, 0
    loop: start=0, step=1, limit=4
    $region2: #{tpu_custom_call.1} parent=1 // loop_pre_header
      _
    $region3: #{tpu_custom_call.1} parent=1 // loop_header
      %s13 = sphi 0, %s17
      %p14 = scmp.ge.s32.totalorder %s13, 4
      %s21 = sphi 0, %s21
      %s23 = sphi 0, %s21
      %s24 = sphi 0, %s23
      %s38 = sphi 0, %s24
      %s44 = sphi 0, %s46
      %s47 = sphi 0, %s44
      %s48 = sphi 0, %s47
      %s64 = sphi 0, %s48
      %s70 = sphi 0, %s72
      %s73 = sphi 0, %s70
      %s74 = sphi 0, %s73
      %s90 = sphi 0, %s74
      %s96 = sphi 0, %s98
      %s99 = sphi 0, %s96
      %s100 = sphi 0, %s99
      %s116 = sphi 0, %s100
    $region4: #{tpu_custom_call.1} parent=1 // loop_header_branch
      %16 = sbr.rel (%p14) target = $region8
    $region5: #{tpu_custom_call.1} parent=1 // loop_body
      %s18 = ssub.s32 %s13, 1
      %s19 = ssub.s32 %s13, 2
      %s20 = sadd.s32 %s13, 1
      %s22 = sadd.s32 %s21, 1
      %p25 = scmp.eq.s32.totalorder %s13, 1
      %p26 = scmp.ne.s32.totalorder %s21, %s23
      %p27 = scmp.eq.s32.totalorder %s13, 0
      %p28 = por %p26, %p27
      %p29 = scmp.ne.s32.totalorder %s21, %s23
      %p30 = scmp.eq.s32.totalorder %s18, 1
      %p31 = por %p29, %p30
      %p32 = scmp.ne.s32.totalorder %s23, %s24
      %p33 = scmp.eq.s32.totalorder %s18, 0
      %p34 = por %p32, %p33
      %p35 = scmp.ne.s32.totalorder %s23, %s24
      %p36 = scmp.eq.s32.totalorder %s19, 1
      %p37 = por %p35, %p36
      %p39 = scmp.ne.s32.totalorder %s24, %s38
      %p40 = scmp.eq.s32.totalorder %s19, 0
      %p41 = por %p39, %p40
      %s42 = ssub.s32 %s13, %s20
      %p43 = scmp.eq.s32.totalorder %s42, 0
      %s45 = sadd.s32 %s44, 1
      %s46 = scalar_select %p43, %s44, %s45
      %p49 = pneg %p43
      %p50 = scmp.eq.s32.totalorder %s13, 1
      %p51 = por %p49, %p50
      %p52 = scmp.ne.s32.totalorder %s44, %s47
      %p53 = scmp.eq.s32.totalorder %s13, 0
      %p54 = por %p52, %p53
      %p55 = scmp.ne.s32.totalorder %s44, %s47
      %p56 = scmp.eq.s32.totalorder %s18, 1
      %p57 = por %p55, %p56
      %p58 = scmp.ne.s32.totalorder %s47, %s48
      %p59 = scmp.eq.s32.totalorder %s18, 0
      %p60 = por %p58, %p59
      %p61 = scmp.ne.s32.totalorder %s47, %s48
      %p62 = scmp.eq.s32.totalorder %s19, 1
      %p63 = por %p61, %p62
      %p65 = scmp.ne.s32.totalorder %s48, %s64
      %p66 = scmp.eq.s32.totalorder %s19, 0
      %p67 = por %p65, %p66
      %s68 = ssub.s32 %s13, %s20
      %p69 = scmp.eq.s32.totalorder %s68, 0
      %s71 = sadd.s32 %s70, 1
      %s72 = scalar_select %p69, %s70, %s71
      %p75 = pneg %p69
      %p76 = scmp.eq.s32.totalorder %s13, 1
      %p77 = por %p75, %p76
      %p78 = scmp.ne.s32.totalorder %s70, %s73
      %p79 = scmp.eq.s32.totalorder %s13, 0
      %p80 = por %p78, %p79
      %p81 = scmp.ne.s32.totalorder %s70, %s73
      %p82 = scmp.eq.s32.totalorder %s18, 1
      %p83 = por %p81, %p82
      %p84 = scmp.ne.s32.totalorder %s73, %s74
      %p85 = scmp.eq.s32.totalorder %s18, 0
      %p86 = por %p84, %p85
      %p87 = scmp.ne.s32.totalorder %s73, %s74
      %p88 = scmp.eq.s32.totalorder %s19, 1
      %p89 = por %p87, %p88
      %p91 = scmp.ne.s32.totalorder %s74, %s90
      %p92 = scmp.eq.s32.totalorder %s19, 0
      %p93 = por %p91, %p92
      %s94 = ssub.s32 %s13, %s20
      %p95 = scmp.eq.s32.totalorder %s94, 0
      %s97 = sadd.s32 %s96, 1
      %s98 = scalar_select %p95, %s96, %s97
      %p101 = pneg %p95
      %p102 = scmp.eq.s32.totalorder %s13, 1
      %p103 = por %p101, %p102
      %p104 = scmp.ne.s32.totalorder %s96, %s99
      %p105 = scmp.eq.s32.totalorder %s13, 0
      %p106 = por %p104, %p105
      %p107 = scmp.ne.s32.totalorder %s96, %s99
      %p108 = scmp.eq.s32.totalorder %s18, 1
      %p109 = por %p107, %p108
      %p110 = scmp.ne.s32.totalorder %s99, %s100
      %p111 = scmp.eq.s32.totalorder %s18, 0
      %p112 = por %p110, %p111
      %p113 = scmp.ne.s32.totalorder %s99, %s100
      %p114 = scmp.eq.s32.totalorder %s19, 1
      %p115 = por %p113, %p114
      %p117 = scmp.ne.s32.totalorder %s100, %s116
      %p118 = scmp.eq.s32.totalorder %s19, 0
      %p119 = por %p117, %p118
      %p120 = scmp.le.s32.totalorder 1, %s13
      %p121 = scmp.lt.s32.totalorder %s13, 3
      %p122 = pnand %p120, %p121
      %p123 = pneg %p122
      // Predicated region
      $region9: #{tpu_custom_call.1} parent=5 // pred_check
        _
      $region10: #{tpu_custom_call.1} parent=5 // pred_check_branch
        %125 = sbr.rel (%p122) target = $region12
      $region11: #{tpu_custom_call.1} parent=5 // pred_region
        %s126 = ssub.s32 %s13, 1
        // Predicated region
        $region13: #{tpu_custom_call.1} parent=11 // pred_check
          %p127 = pneg %p34
        $region14: #{tpu_custom_call.1} parent=11 // pred_check_branch
          %129 = sbr.rel (%p127) target = $region16
        $region15: #{tpu_custom_call.1} parent=11 // pred_region
          %131 = vsyncadd [#allocation5], 0
          %s133 = sshll.u32 %s0, 4
          %s134 = int_to_ptr.vmem [resolvable:$true] %s133
          %136 = dma.vmem_to_smem %s134, 32, [#allocation3], [#allocation5]
        $region16: #{tpu_custom_call.1} parent=11 // pred_fallthru
          _
      $region12: #{tpu_custom_call.1} parent=5 // pred_fallthru
        _
      %p137 = scmp.lt.s32.totalorder %s13, 2
      // Predicated region
      $region17: #{tpu_custom_call.1} parent=5 // pred_check
        %p138 = pneg %p137
      $region18: #{tpu_custom_call.1} parent=5 // pred_check_branch
        %140 = sbr.rel (%p138) target = $region20
      $region19: #{tpu_custom_call.1} parent=5 // pred_region
        // Predicated region
        $region21: #{tpu_custom_call.1} parent=19 // pred_check
          %p141 = pneg %p54
        $region22: #{tpu_custom_call.1} parent=19 // pred_check_branch
          %143 = sbr.rel (%p141) target = $region24
        $region23: #{tpu_custom_call.1} parent=19 // pred_region
          %p144 = scmp.lt.s32.totalorder %s13, 1
          %s145 = scalar_select %p144, %s13, 1
          %s146 = smul.addr %s145, 3
          %s147 = smul.addr %s146, 8
          %s148 = scalar_lea.vmem %s1, %s147
        $region24: #{tpu_custom_call.1} parent=19 // pred_fallthru
          _
        // Predicated region
        $region25: #{tpu_custom_call.1} parent=19 // pred_check
          %p149 = pneg %p80
        $region26: #{tpu_custom_call.1} parent=19 // pred_check_branch
          %151 = sbr.rel (%p149) target = $region28
        $region27: #{tpu_custom_call.1} parent=19 // pred_region
          %p152 = scmp.lt.s32.totalorder %s13, 1
          %s153 = scalar_select %p152, %s13, 1
          %s154 = smul.addr %s153, 2
          %s155 = smul.addr %s154, 8
          %s156 = scalar_lea.vmem %s2, %s155
        $region28: #{tpu_custom_call.1} parent=19 // pred_fallthru
          _
      $region20: #{tpu_custom_call.1} parent=5 // pred_fallthru
        _
      %p157 = scmp.le.s32.totalorder 1, %s13
      %p158 = scmp.lt.s32.totalorder %s13, 3
      %p159 = pnand %p157, %p158
      %p160 = pneg %p159
      // Predicated region
      $region29: #{tpu_custom_call.1} parent=5 // pred_check
        _
      $region30: #{tpu_custom_call.1} parent=5 // pred_check_branch
        %162 = sbr.rel (%p159) target = $region32
      $region31: #{tpu_custom_call.1} parent=5 // pred_region
        %s163 = ssub.s32 %s13, 1
        // Predicated region
        $region33: #{tpu_custom_call.1} parent=31 // pred_check
          %p164 = pneg %p34
        $region34: #{tpu_custom_call.1} parent=31 // pred_check_branch
          %166 = sbr.rel (%p164) target = $region36
        $region35: #{tpu_custom_call.1} parent=31 // pred_region
          %168 = dma.done [#allocation5], 32
        $region36: #{tpu_custom_call.1} parent=31 // pred_fallthru
          _
        %169 = sfence
        %p170 = pneg %p34
        %p171 = pneg %p31
        %p172 = scmp.lt.s32.totalorder %s18, 1
        %s173 = scalar_select %p172, %s18, 1
        %s174 = smul.addr %s173, 3
        %s175 = smul.addr %s174, 8
        %s176 = scalar_lea.vmem %s1, %s175
        %p177 = pneg %p60
        %p178 = pneg %p57
        %p179 = scmp.lt.s32.totalorder %s18, 1
        %s180 = scalar_select %p179, %s18, 1
        %s181 = smul.addr %s180, 2
        %s182 = smul.addr %s181, 8
        %s183 = scalar_lea.vmem %s2, %s182
        %p184 = pneg %p86
        %p185 = pneg %p83
        %p186 = pneg %p112
        %p187 = pneg %p109
        %s188 = sand.u32 %s99, 1
        %s189 = scalar_lea.sflag [#allocation4], %s188
        %s190 = sand.u32 %s99, 1
        %s191 = scalar_lea.vmem [#allocation6], %s190
        %p192 = scmp.lt.s32.totalorder %s18, 1
        %s193 = scalar_select %p192, %s18, 1
        %s194 = smul.addr %s193, 3
        %s195 = smul.addr %s194, 8
        %s196 = scalar_lea.vmem %s1, %s195
        %p197 = scmp.lt.s32.totalorder %s18, 1
        %s198 = scalar_select %p197, %s18, 1
        %s199 = smul.addr %s198, 2
        %s200 = smul.addr %s199, 8
        %s201 = scalar_lea.vmem %s2, %s200
        %v202 = vld [vmem:[%s196] sm:$0xff]
        %v203 = vld [vmem:[%s196 + $0x8] sm:$0xff]
        %v204 = vld [vmem:[%s196 + $0x10] sm:$0xf]
        %v205 = vmul.f32 %v202, 8.0
        %v206 = vmul.f32 %v203, 8.0
        %v207 = vmul.f32 %v204, 8.0
        %v208 = vsub.f32 %v205, 4.0
        %v209 = vsub.f32 %v206, 4.0
        %v210 = vsub.f32 %v207, 4.0
        %v211 = vmul.f32 %v208, 0.5
        %v212 = vmul.f32 %v209, 0.5
        %v213 = vmul.f32 %v210, 0.5
        %v214 = vtanh.pop %v211
        %v215 = vtanh.pop %v212
        %v216 = vtanh.pop %v213
        %v217 = vadd.f32 %v214, 1.0
        %v218 = vadd.f32 %v215, 1.0
        %v219 = vadd.f32 %v216, 1.0
        %v220 = vmul.f32 %v217, 0.5
        %v221 = vmul.f32 %v218, 0.5
        %v222 = vmul.f32 %v219, 0.5
        %vm223 = vcmask 162816
        %224 = vst.msk [vmem:[#allocation2] sm:$0xff] %vm223, %v220
        %225 = vst.msk [vmem:[#allocation2 + $0x8] sm:$0xff] %vm223, %v221
        %vm226 = vcmask 158720
        %227 = vst.msk [vmem:[#allocation2 + $0x10] sm:$0xf] %vm226, %v222
        %v228 = vld [vmem:[#allocation2 + $0x4] sm:$0xff]
        %v229 = vld [vmem:[#allocation2 + $0xc] sm:$0xff]
        %s230 = sld [smem:[#allocation3]]
        %v231 = vstv %s230
        %v232 = vmul.f32 %v231, %v228
        %v233 = vmul.f32 %v231, %v229
        %v234 = vadd.f32 %v232, 0.0
        %v235 = vadd.f32 %v233, 0.0
        %s236 = sld [smem:[#allocation3 + $0x64]]
        %v237 = vstv %s236
        %v238 = vmul.f32 %v237, %v228
        %v239 = vmul.f32 %v237, %v229
        %v240 = vadd.f32 %v238, 0.0
        %v241 = vadd.f32 %v239, 0.0
        %s242 = sld [smem:[#allocation3 + $0x19]]
        %v243 = vstv %s242
        %v244 = vmul.f32 %v243, %v228
        %v245 = vmul.f32 %v243, %v229
        %v246 = vadd.f32 %v244, 0.0
        %v247 = vadd.f32 %v245, 0.0
        %s248 = sld [smem:[#allocation3 + $0x7d]]
        %v249 = vstv %s248
        %v250 = vmul.f32 %v249, %v228
        %v251 = vmul.f32 %v249, %v229
        %v252 = vadd.f32 %v250, 0.0
        %v253 = vadd.f32 %v251, 0.0
        %s254 = sld [smem:[#allocation3 + $0x32]]
        %v255 = vstv %s254
        %v256 = vmul.f32 %v255, %v228
        %v257 = vmul.f32 %v255, %v229
        %v258 = vadd.f32 %v256, 0.0
        %v259 = vadd.f32 %v257, 0.0
        %s260 = sld [smem:[#allocation3 + $0x96]]
        %v261 = vstv %s260
        %v262 = vmul.f32 %v261, %v228
        %v263 = vmul.f32 %v261, %v229
        %v264 = vadd.f32 %v262, 0.0
        %v265 = vadd.f32 %v263, 0.0
        %s266 = sld [smem:[#allocation3 + $0x4b]]
        %v267 = vstv %s266
        %v268 = vmul.f32 %v267, %v228
        %v269 = vmul.f32 %v267, %v229
        %v270 = vadd.f32 %v268, 0.0
        %v271 = vadd.f32 %v269, 0.0
        %s272 = sld [smem:[#allocation3 + $0xaf]]
        %v273 = vstv %s272
        %v274 = vmul.f32 %v273, %v228
        %v275 = vmul.f32 %v273, %v229
        %v276 = vadd.f32 %v274, 0.0
        %v277 = vadd.f32 %v275, 0.0
        %s278 = sld [smem:[#allocation3 + $0x1]]
        %v279 = vstv %s278
        %v280 = vmul.f32 %v279, %v228
        %v281 = vmul.f32 %v279, %v229
        %284 = vrot.lane.b32.xlu0 %v280, 1
        %v285 = vpop.permute.xlu0 %284
        %286 = vrot.lane.b32.xlu0 %v281, 1
        %v287 = vpop.permute.xlu0 %286
        %v290 = vadd.f32 %v234, %v285
        %v291 = vadd.f32 %v235, %v287
        %s292 = sld [smem:[#allocation3 + $0x65]]
        %v293 = vstv %s292
        %v294 = vmul.f32 %v293, %v228
        %v295 = vmul.f32 %v293, %v229
        %298 = vrot.lane.b32.xlu0 %v294, 1
        %v299 = vpop.permute.xlu0 %298
        %300 = vrot.lane.b32.xlu0 %v295, 1
        %v301 = vpop.permute.xlu0 %300
        %v304 = vadd.f32 %v240, %v299
        %v305 = vadd.f32 %v241, %v301
        %s306 = sld [smem:[#allocation3 + $0x1a]]
        %v307 = vstv %s306
        %v308 = vmul.f32 %v307, %v228
        %v309 = vmul.f32 %v307, %v229
        %312 = vrot.lane.b32.xlu0 %v308, 1
        %v313 = vpop.permute.xlu0 %312
        %314 = vrot.lane.b32.xlu0 %v309, 1
        %v315 = vpop.permute.xlu0 %314
        %v318 = vadd.f32 %v246, %v313
        %v319 = vadd.f32 %v247, %v315
        %s320 = sld [smem:[#allocation3 + $0x7e]]
        %v321 = vstv %s320
        %v322 = vmul.f32 %v321, %v228
        %v323 = vmul.f32 %v321, %v229
        %326 = vrot.lane.b32.xlu0 %v322, 1
        %v327 = vpop.permute.xlu0 %326
        %328 = vrot.lane.b32.xlu0 %v323, 1
        %v329 = vpop.permute.xlu0 %328
        %v332 = vadd.f32 %v252, %v327
        %v333 = vadd.f32 %v253, %v329
        %s334 = sld [smem:[#allocation3 + $0x33]]
        %v335 = vstv %s334
        %v336 = vmul.f32 %v335, %v228
        %v337 = vmul.f32 %v335, %v229
        %340 = vrot.lane.b32.xlu0 %v336, 1
        %v341 = vpop.permute.xlu0 %340
        %342 = vrot.lane.b32.xlu0 %v337, 1
        %v343 = vpop.permute.xlu0 %342
        %v346 = vadd.f32 %v258, %v341
        %v347 = vadd.f32 %v259, %v343
        %s348 = sld [smem:[#allocation3 + $0x97]]
        %v349 = vstv %s348
        %v350 = vmul.f32 %v349, %v228
        %v351 = vmul.f32 %v349, %v229
        %354 = vrot.lane.b32.xlu0 %v350, 1
        %v355 = vpop.permute.xlu0 %354
        %356 = vrot.lane.b32.xlu0 %v351, 1
        %v357 = vpop.permute.xlu0 %356
        %v360 = vadd.f32 %v264, %v355
        %v361 = vadd.f32 %v265, %v357
        %s362 = sld [smem:[#allocation3 + $0x4c]]
        %v363 = vstv %s362
        %v364 = vmul.f32 %v363, %v228
        %v365 = vmul.f32 %v363, %v229
        %368 = vrot.lane.b32.xlu0 %v364, 1
        %v369 = vpop.permute.xlu0 %368
        %370 = vrot.lane.b32.xlu0 %v365, 1
        %v371 = vpop.permute.xlu0 %370
        %v374 = vadd.f32 %v270, %v369
        %v375 = vadd.f32 %v271, %v371
        %s376 = sld [smem:[#allocation3 + $0xb0]]
        %v377 = vstv %s376
        %v378 = vmul.f32 %v377, %v228
        %v379 = vmul.f32 %v377, %v229
        %382 = vrot.lane.b32.xlu0 %v378, 1
        %v383 = vpop.permute.xlu0 %382
        %384 = vrot.lane.b32.xlu0 %v379, 1
        %v385 = vpop.permute.xlu0 %384
        %v388 = vadd.f32 %v276, %v383
        %v389 = vadd.f32 %v277, %v385
        %s390 = sld [smem:[#allocation3 + $0x2]]
        %v391 = vstv %s390
        %v392 = vmul.f32 %v391, %v228
        %v393 = vmul.f32 %v391, %v229
        %396 = vrot.lane.b32.xlu0 %v392, 2
        %v397 = vpop.permute.xlu0 %396
        %398 = vrot.lane.b32.xlu0 %v393, 2
        %v399 = vpop.permute.xlu0 %398
        %v402 = vadd.f32 %v290, %v397
        %v403 = vadd.f32 %v291, %v399
        %s404 = sld [smem:[#allocation3 + $0x66]]
        %v405 = vstv %s404
        %v406 = vmul.f32 %v405, %v228
        %v407 = vmul.f32 %v405, %v229
        %410 = vrot.lane.b32.xlu0 %v406, 2
        %v411 = vpop.permute.xlu0 %410
        %412 = vrot.lane.b32.xlu0 %v407, 2
        %v413 = vpop.permute.xlu0 %412
        %v416 = vadd.f32 %v304, %v411
        %v417 = vadd.f32 %v305, %v413
        %s418 = sld [smem:[#allocation3 + $0x1b]]
        %v419 = vstv %s418
        %v420 = vmul.f32 %v419, %v228
        %v421 = vmul.f32 %v419, %v229
        %424 = vrot.lane.b32.xlu0 %v420, 2
        %v425 = vpop.permute.xlu0 %424
        %426 = vrot.lane.b32.xlu0 %v421, 2
        %v427 = vpop.permute.xlu0 %426
        %v430 = vadd.f32 %v318, %v425
        %v431 = vadd.f32 %v319, %v427
        %s432 = sld [smem:[#allocation3 + $0x7f]]
        %v433 = vstv %s432
        %v434 = vmul.f32 %v433, %v228
        %v435 = vmul.f32 %v433, %v229
        %438 = vrot.lane.b32.xlu0 %v434, 2
        %v439 = vpop.permute.xlu0 %438
        %440 = vrot.lane.b32.xlu0 %v435, 2
        %v441 = vpop.permute.xlu0 %440
        %v444 = vadd.f32 %v332, %v439
        %v445 = vadd.f32 %v333, %v441
        %s446 = sld [smem:[#allocation3 + $0x34]]
        %v447 = vstv %s446
        %v448 = vmul.f32 %v447, %v228
        %v449 = vmul.f32 %v447, %v229
        %452 = vrot.lane.b32.xlu0 %v448, 2
        %v453 = vpop.permute.xlu0 %452
        %454 = vrot.lane.b32.xlu0 %v449, 2
        %v455 = vpop.permute.xlu0 %454
        %v458 = vadd.f32 %v346, %v453
        %v459 = vadd.f32 %v347, %v455
        %s460 = sld [smem:[#allocation3 + $0x98]]
        %v461 = vstv %s460
        %v462 = vmul.f32 %v461, %v228
        %v463 = vmul.f32 %v461, %v229
        %466 = vrot.lane.b32.xlu0 %v462, 2
        %v467 = vpop.permute.xlu0 %466
        %468 = vrot.lane.b32.xlu0 %v463, 2
        %v469 = vpop.permute.xlu0 %468
        %v472 = vadd.f32 %v360, %v467
        %v473 = vadd.f32 %v361, %v469
        %s474 = sld [smem:[#allocation3 + $0x4d]]
        %v475 = vstv %s474
        %v476 = vmul.f32 %v475, %v228
        %v477 = vmul.f32 %v475, %v229
        %480 = vrot.lane.b32.xlu0 %v476, 2
        %v481 = vpop.permute.xlu0 %480
        %482 = vrot.lane.b32.xlu0 %v477, 2
        %v483 = vpop.permute.xlu0 %482
        %v486 = vadd.f32 %v374, %v481
        %v487 = vadd.f32 %v375, %v483
        %s488 = sld [smem:[#allocation3 + $0xb1]]
        %v489 = vstv %s488
        %v490 = vmul.f32 %v489, %v228
        %v491 = vmul.f32 %v489, %v229
        %494 = vrot.lane.b32.xlu0 %v490, 2
        %v495 = vpop.permute.xlu0 %494
        %496 = vrot.lane.b32.xlu0 %v491, 2
        %v497 = vpop.permute.xlu0 %496
        %v500 = vadd.f32 %v388, %v495
        %v501 = vadd.f32 %v389, %v497
        %s502 = sld [smem:[#allocation3 + $0x3]]
        %v503 = vstv %s502
        %v504 = vmul.f32 %v503, %v228
        %v505 = vmul.f32 %v503, %v229
        %508 = vrot.lane.b32.xlu0 %v504, 3
        %v509 = vpop.permute.xlu0 %508
        %510 = vrot.lane.b32.xlu0 %v505, 3
        %v511 = vpop.permute.xlu0 %510
        %v514 = vadd.f32 %v402, %v509
        %v515 = vadd.f32 %v403, %v511
        %s516 = sld [smem:[#allocation3 + $0x67]]
        %v517 = vstv %s516
        %v518 = vmul.f32 %v517, %v228
        %v519 = vmul.f32 %v517, %v229
        %522 = vrot.lane.b32.xlu0 %v518, 3
        %v523 = vpop.permute.xlu0 %522
        %524 = vrot.lane.b32.xlu0 %v519, 3
        %v525 = vpop.permute.xlu0 %524
        %v528 = vadd.f32 %v416, %v523
        %v529 = vadd.f32 %v417, %v525
        %s530 = sld [smem:[#allocation3 + $0x1c]]
        %v531 = vstv %s530
        %v532 = vmul.f32 %v531, %v228
        %v533 = vmul.f32 %v531, %v229
        %536 = vrot.lane.b32.xlu0 %v532, 3
        %v537 = vpop.permute.xlu0 %536
        %538 = vrot.lane.b32.xlu0 %v533, 3
        %v539 = vpop.permute.xlu0 %538
        %v542 = vadd.f32 %v430, %v537
        %v543 = vadd.f32 %v431, %v539
        %s544 = sld [smem:[#allocation3 + $0x80]]
        %v545 = vstv %s544
        %v546 = vmul.f32 %v545, %v228
        %v547 = vmul.f32 %v545, %v229
        %550 = vrot.lane.b32.xlu0 %v546, 3
        %v551 = vpop.permute.xlu0 %550
        %552 = vrot.lane.b32.xlu0 %v547, 3
        %v553 = vpop.permute.xlu0 %552
        %v556 = vadd.f32 %v444, %v551
        %v557 = vadd.f32 %v445, %v553
        %s558 = sld [smem:[#allocation3 + $0x35]]
        %v559 = vstv %s558
        %v560 = vmul.f32 %v559, %v228
        %v561 = vmul.f32 %v559, %v229
        %564 = vrot.lane.b32.xlu0 %v560, 3
        %v565 = vpop.permute.xlu0 %564
        %566 = vrot.lane.b32.xlu0 %v561, 3
        %v567 = vpop.permute.xlu0 %566
        %v570 = vadd.f32 %v458, %v565
        %v571 = vadd.f32 %v459, %v567
        %s572 = sld [smem:[#allocation3 + $0x99]]
        %v573 = vstv %s572
        %v574 = vmul.f32 %v573, %v228
        %v575 = vmul.f32 %v573, %v229
        %578 = vrot.lane.b32.xlu0 %v574, 3
        %v579 = vpop.permute.xlu0 %578
        %580 = vrot.lane.b32.xlu0 %v575, 3
        %v581 = vpop.permute.xlu0 %580
        %v584 = vadd.f32 %v472, %v579
        %v585 = vadd.f32 %v473, %v581
        %s586 = sld [smem:[#allocation3 + $0x4e]]
        %v587 = vstv %s586
        %v588 = vmul.f32 %v587, %v228
        %v589 = vmul.f32 %v587, %v229
        %592 = vrot.lane.b32.xlu0 %v588, 3
        %v593 = vpop.permute.xlu0 %592
        %594 = vrot.lane.b32.xlu0 %v589, 3
        %v595 = vpop.permute.xlu0 %594
        %v598 = vadd.f32 %v486, %v593
        %v599 = vadd.f32 %v487, %v595
        %s600 = sld [smem:[#allocation3 + $0xb2]]
        %v601 = vstv %s600
        %v602 = vmul.f32 %v601, %v228
        %v603 = vmul.f32 %v601, %v229
        %606 = vrot.lane.b32.xlu0 %v602, 3
        %v607 = vpop.permute.xlu0 %606
        %608 = vrot.lane.b32.xlu0 %v603, 3
        %v609 = vpop.permute.xlu0 %608
        %v612 = vadd.f32 %v500, %v607
        %v613 = vadd.f32 %v501, %v609
        %s614 = sld [smem:[#allocation3 + $0x4]]
        %v615 = vstv %s614
        %v616 = vmul.f32 %v615, %v228
        %v617 = vmul.f32 %v615, %v229
        %620 = vrot.lane.b32.xlu0 %v616, 4
        %v621 = vpop.permute.xlu0 %620
        %622 = vrot.lane.b32.xlu0 %v617, 4
        %v623 = vpop.permute.xlu0 %622
        %v626 = vadd.f32 %v514, %v621
        %v627 = vadd.f32 %v515, %v623
        %s628 = sld [smem:[#allocation3 + $0x68]]
        %v629 = vstv %s628
        %v630 = vmul.f32 %v629, %v228
        %v631 = vmul.f32 %v629, %v229
        %634 = vrot.lane.b32.xlu0 %v630, 4
        %v635 = vpop.permute.xlu0 %634
        %636 = vrot.lane.b32.xlu0 %v631, 4
        %v637 = vpop.permute.xlu0 %636
        %v640 = vadd.f32 %v528, %v635
        %v641 = vadd.f32 %v529, %v637
        %s642 = sld [smem:[#allocation3 + $0x1d]]
        %v643 = vstv %s642
        %v644 = vmul.f32 %v643, %v228
        %v645 = vmul.f32 %v643, %v229
        %648 = vrot.lane.b32.xlu0 %v644, 4
        %v649 = vpop.permute.xlu0 %648
        %650 = vrot.lane.b32.xlu0 %v645, 4
        %v651 = vpop.permute.xlu0 %650
        %v654 = vadd.f32 %v542, %v649
        %v655 = vadd.f32 %v543, %v651
        %s656 = sld [smem:[#allocation3 + $0x81]]
        %v657 = vstv %s656
        %v658 = vmul.f32 %v657, %v228
        %v659 = vmul.f32 %v657, %v229
        %662 = vrot.lane.b32.xlu0 %v658, 4
        %v663 = vpop.permute.xlu0 %662
        %664 = vrot.lane.b32.xlu0 %v659, 4
        %v665 = vpop.permute.xlu0 %664
        %v668 = vadd.f32 %v556, %v663
        %v669 = vadd.f32 %v557, %v665
        %s670 = sld [smem:[#allocation3 + $0x36]]
        %v671 = vstv %s670
        %v672 = vmul.f32 %v671, %v228
        %v673 = vmul.f32 %v671, %v229
        %676 = vrot.lane.b32.xlu0 %v672, 4
        %v677 = vpop.permute.xlu0 %676
        %678 = vrot.lane.b32.xlu0 %v673, 4
        %v679 = vpop.permute.xlu0 %678
        %v682 = vadd.f32 %v570, %v677
        %v683 = vadd.f32 %v571, %v679
        %s684 = sld [smem:[#allocation3 + $0x9a]]
        %v685 = vstv %s684
        %v686 = vmul.f32 %v685, %v228
        %v687 = vmul.f32 %v685, %v229
        %690 = vrot.lane.b32.xlu0 %v686, 4
        %v691 = vpop.permute.xlu0 %690
        %692 = vrot.lane.b32.xlu0 %v687, 4
        %v693 = vpop.permute.xlu0 %692
        %v696 = vadd.f32 %v584, %v691
        %v697 = vadd.f32 %v585, %v693
        %s698 = sld [smem:[#allocation3 + $0x4f]]
        %v699 = vstv %s698
        %v700 = vmul.f32 %v699, %v228
        %v701 = vmul.f32 %v699, %v229
        %704 = vrot.lane.b32.xlu0 %v700, 4
        %v705 = vpop.permute.xlu0 %704
        %706 = vrot.lane.b32.xlu0 %v701, 4
        %v707 = vpop.permute.xlu0 %706
        %v710 = vadd.f32 %v598, %v705
        %v711 = vadd.f32 %v599, %v707
        %s712 = sld [smem:[#allocation3 + $0xb3]]
        %v713 = vstv %s712
        %v714 = vmul.f32 %v713, %v228
        %v715 = vmul.f32 %v713, %v229
        %718 = vrot.lane.b32.xlu0 %v714, 4
        %v719 = vpop.permute.xlu0 %718
        %720 = vrot.lane.b32.xlu0 %v715, 4
        %v721 = vpop.permute.xlu0 %720
        %v724 = vadd.f32 %v612, %v719
        %v725 = vadd.f32 %v613, %v721
        %v726 = vld [vmem:[#allocation2 + $0x3] sm:$0xff]
        %v727 = vld [vmem:[#allocation2 + $0xb] sm:$0xff]
        %s728 = sld [smem:[#allocation3 + $0x5]]
        %v729 = vstv %s728
        %v730 = vmul.f32 %v729, %v726
        %v731 = vmul.f32 %v729, %v727
        %v732 = vadd.f32 %v626, %v730
        %v733 = vadd.f32 %v627, %v731
        %s734 = sld [smem:[#allocation3 + $0x69]]
        %v735 = vstv %s734
        %v736 = vmul.f32 %v735, %v726
        %v737 = vmul.f32 %v735, %v727
        %v738 = vadd.f32 %v640, %v736
        %v739 = vadd.f32 %v641, %v737
        %s740 = sld [smem:[#allocation3 + $0x1e]]
        %v741 = vstv %s740
        %v742 = vmul.f32 %v741, %v726
        %v743 = vmul.f32 %v741, %v727
        %v744 = vadd.f32 %v654, %v742
        %v745 = vadd.f32 %v655, %v743
        %s746 = sld [smem:[#allocation3 + $0x82]]
        %v747 = vstv %s746
        %v748 = vmul.f32 %v747, %v726
        %v749 = vmul.f32 %v747, %v727
        %v750 = vadd.f32 %v668, %v748
        %v751 = vadd.f32 %v669, %v749
        %s752 = sld [smem:[#allocation3 + $0x37]]
        %v753 = vstv %s752
        %v754 = vmul.f32 %v753, %v726
        %v755 = vmul.f32 %v753, %v727
        %v756 = vadd.f32 %v682, %v754
        %v757 = vadd.f32 %v683, %v755
        %s758 = sld [smem:[#allocation3 + $0x9b]]
        %v759 = vstv %s758
        %v760 = vmul.f32 %v759, %v726
        %v761 = vmul.f32 %v759, %v727
        %v762 = vadd.f32 %v696, %v760
        %v763 = vadd.f32 %v697, %v761
        %s764 = sld [smem:[#allocation3 + $0x50]]
        %v765 = vstv %s764
        %v766 = vmul.f32 %v765, %v726
        %v767 = vmul.f32 %v765, %v727
        %v768 = vadd.f32 %v710, %v766
        %v769 = vadd.f32 %v711, %v767
        %s770 = sld [smem:[#allocation3 + $0xb4]]
        %v771 = vstv %s770
        %v772 = vmul.f32 %v771, %v726
        %v773 = vmul.f32 %v771, %v727
        %v774 = vadd.f32 %v724, %v772
        %v775 = vadd.f32 %v725, %v773
        %s776 = sld [smem:[#allocation3 + $0x6]]
        %v777 = vstv %s776
        %v778 = vmul.f32 %v777, %v726
        %v779 = vmul.f32 %v777, %v727
        %782 = vrot.lane.b32.xlu0 %v778, 1
        %v783 = vpop.permute.xlu0 %782
        %784 = vrot.lane.b32.xlu0 %v779, 1
        %v785 = vpop.permute.xlu0 %784
        %v788 = vadd.f32 %v732, %v783
        %v789 = vadd.f32 %v733, %v785
        %s790 = sld [smem:[#allocation3 + $0x6a]]
        %v791 = vstv %s790
        %v792 = vmul.f32 %v791, %v726
        %v793 = vmul.f32 %v791, %v727
        %796 = vrot.lane.b32.xlu0 %v792, 1
        %v797 = vpop.permute.xlu0 %796
        %798 = vrot.lane.b32.xlu0 %v793, 1
        %v799 = vpop.permute.xlu0 %798
        %v802 = vadd.f32 %v738, %v797
        %v803 = vadd.f32 %v739, %v799
        %s804 = sld [smem:[#allocation3 + $0x1f]]
        %v805 = vstv %s804
        %v806 = vmul.f32 %v805, %v726
        %v807 = vmul.f32 %v805, %v727
        %810 = vrot.lane.b32.xlu0 %v806, 1
        %v811 = vpop.permute.xlu0 %810
        %812 = vrot.lane.b32.xlu0 %v807, 1
        %v813 = vpop.permute.xlu0 %812
        %v816 = vadd.f32 %v744, %v811
        %v817 = vadd.f32 %v745, %v813
        %s818 = sld [smem:[#allocation3 + $0x83]]
        %v819 = vstv %s818
        %v820 = vmul.f32 %v819, %v726
        %v821 = vmul.f32 %v819, %v727
        %824 = vrot.lane.b32.xlu0 %v820, 1
        %v825 = vpop.permute.xlu0 %824
        %826 = vrot.lane.b32.xlu0 %v821, 1
        %v827 = vpop.permute.xlu0 %826
        %v830 = vadd.f32 %v750, %v825
        %v831 = vadd.f32 %v751, %v827
        %s832 = sld [smem:[#allocation3 + $0x38]]
        %v833 = vstv %s832
        %v834 = vmul.f32 %v833, %v726
        %v835 = vmul.f32 %v833, %v727
        %838 = vrot.lane.b32.xlu0 %v834, 1
        %v839 = vpop.permute.xlu0 %838
        %840 = vrot.lane.b32.xlu0 %v835, 1
        %v841 = vpop.permute.xlu0 %840
        %v844 = vadd.f32 %v756, %v839
        %v845 = vadd.f32 %v757, %v841
        %s846 = sld [smem:[#allocation3 + $0x9c]]
        %v847 = vstv %s846
        %v848 = vmul.f32 %v847, %v726
        %v849 = vmul.f32 %v847, %v727
        %852 = vrot.lane.b32.xlu0 %v848, 1
        %v853 = vpop.permute.xlu0 %852
        %854 = vrot.lane.b32.xlu0 %v849, 1
        %v855 = vpop.permute.xlu0 %854
        %v858 = vadd.f32 %v762, %v853
        %v859 = vadd.f32 %v763, %v855
        %s860 = sld [smem:[#allocation3 + $0x51]]
        %v861 = vstv %s860
        %v862 = vmul.f32 %v861, %v726
        %v863 = vmul.f32 %v861, %v727
        %866 = vrot.lane.b32.xlu0 %v862, 1
        %v867 = vpop.permute.xlu0 %866
        %868 = vrot.lane.b32.xlu0 %v863, 1
        %v869 = vpop.permute.xlu0 %868
        %v872 = vadd.f32 %v768, %v867
        %v873 = vadd.f32 %v769, %v869
        %s874 = sld [smem:[#allocation3 + $0xb5]]
        %v875 = vstv %s874
        %v876 = vmul.f32 %v875, %v726
        %v877 = vmul.f32 %v875, %v727
        %880 = vrot.lane.b32.xlu0 %v876, 1
        %v881 = vpop.permute.xlu0 %880
        %882 = vrot.lane.b32.xlu0 %v877, 1
        %v883 = vpop.permute.xlu0 %882
        %v886 = vadd.f32 %v774, %v881
        %v887 = vadd.f32 %v775, %v883
        %s888 = sld [smem:[#allocation3 + $0x7]]
        %v889 = vstv %s888
        %v890 = vmul.f32 %v889, %v726
        %v891 = vmul.f32 %v889, %v727
        %894 = vrot.lane.b32.xlu0 %v890, 2
        %v895 = vpop.permute.xlu0 %894
        %896 = vrot.lane.b32.xlu0 %v891, 2
        %v897 = vpop.permute.xlu0 %896
        %v900 = vadd.f32 %v788, %v895
        %v901 = vadd.f32 %v789, %v897
        %s902 = sld [smem:[#allocation3 + $0x6b]]
        %v903 = vstv %s902
        %v904 = vmul.f32 %v903, %v726
        %v905 = vmul.f32 %v903, %v727
        %908 = vrot.lane.b32.xlu0 %v904, 2
        %v909 = vpop.permute.xlu0 %908
        %910 = vrot.lane.b32.xlu0 %v905, 2
        %v911 = vpop.permute.xlu0 %910
        %v914 = vadd.f32 %v802, %v909
        %v915 = vadd.f32 %v803, %v911
        %s916 = sld [smem:[#allocation3 + $0x20]]
        %v917 = vstv %s916
        %v918 = vmul.f32 %v917, %v726
        %v919 = vmul.f32 %v917, %v727
        %922 = vrot.lane.b32.xlu0 %v918, 2
        %v923 = vpop.permute.xlu0 %922
        %924 = vrot.lane.b32.xlu0 %v919, 2
        %v925 = vpop.permute.xlu0 %924
        %v928 = vadd.f32 %v816, %v923
        %v929 = vadd.f32 %v817, %v925
        %s930 = sld [smem:[#allocation3 + $0x84]]
        %v931 = vstv %s930
        %v932 = vmul.f32 %v931, %v726
        %v933 = vmul.f32 %v931, %v727
        %936 = vrot.lane.b32.xlu0 %v932, 2
        %v937 = vpop.permute.xlu0 %936
        %938 = vrot.lane.b32.xlu0 %v933, 2
        %v939 = vpop.permute.xlu0 %938
        %v942 = vadd.f32 %v830, %v937
        %v943 = vadd.f32 %v831, %v939
        %s944 = sld [smem:[#allocation3 + $0x39]]
        %v945 = vstv %s944
        %v946 = vmul.f32 %v945, %v726
        %v947 = vmul.f32 %v945, %v727
        %950 = vrot.lane.b32.xlu0 %v946, 2
        %v951 = vpop.permute.xlu0 %950
        %952 = vrot.lane.b32.xlu0 %v947, 2
        %v953 = vpop.permute.xlu0 %952
        %v956 = vadd.f32 %v844, %v951
        %v957 = vadd.f32 %v845, %v953
        %s958 = sld [smem:[#allocation3 + $0x9d]]
        %v959 = vstv %s958
        %v960 = vmul.f32 %v959, %v726
        %v961 = vmul.f32 %v959, %v727
        %964 = vrot.lane.b32.xlu0 %v960, 2
        %v965 = vpop.permute.xlu0 %964
        %966 = vrot.lane.b32.xlu0 %v961, 2
        %v967 = vpop.permute.xlu0 %966
        %v970 = vadd.f32 %v858, %v965
        %v971 = vadd.f32 %v859, %v967
        %s972 = sld [smem:[#allocation3 + $0x52]]
        %v973 = vstv %s972
        %v974 = vmul.f32 %v973, %v726
        %v975 = vmul.f32 %v973, %v727
        %978 = vrot.lane.b32.xlu0 %v974, 2
        %v979 = vpop.permute.xlu0 %978
        %980 = vrot.lane.b32.xlu0 %v975, 2
        %v981 = vpop.permute.xlu0 %980
        %v984 = vadd.f32 %v872, %v979
        %v985 = vadd.f32 %v873, %v981
        %s986 = sld [smem:[#allocation3 + $0xb6]]
        %v987 = vstv %s986
        %v988 = vmul.f32 %v987, %v726
        %v989 = vmul.f32 %v987, %v727
        %992 = vrot.lane.b32.xlu0 %v988, 2
        %v993 = vpop.permute.xlu0 %992
        %994 = vrot.lane.b32.xlu0 %v989, 2
        %v995 = vpop.permute.xlu0 %994
        %v998 = vadd.f32 %v886, %v993
        %v999 = vadd.f32 %v887, %v995
        %s1000 = sld [smem:[#allocation3 + $0x8]]
        %v1001 = vstv %s1000
        %v1002 = vmul.f32 %v1001, %v726
        %v1003 = vmul.f32 %v1001, %v727
        %1006 = vrot.lane.b32.xlu0 %v1002, 3
        %v1007 = vpop.permute.xlu0 %1006
        %1008 = vrot.lane.b32.xlu0 %v1003, 3
        %v1009 = vpop.permute.xlu0 %1008
        %v1012 = vadd.f32 %v900, %v1007
        %v1013 = vadd.f32 %v901, %v1009
        %s1014 = sld [smem:[#allocation3 + $0x6c]]
        %v1015 = vstv %s1014
        %v1016 = vmul.f32 %v1015, %v726
        %v1017 = vmul.f32 %v1015, %v727
        %1020 = vrot.lane.b32.xlu0 %v1016, 3
        %v1021 = vpop.permute.xlu0 %1020
        %1022 = vrot.lane.b32.xlu0 %v1017, 3
        %v1023 = vpop.permute.xlu0 %1022
        %v1026 = vadd.f32 %v914, %v1021
        %v1027 = vadd.f32 %v915, %v1023
        %s1028 = sld [smem:[#allocation3 + $0x21]]
        %v1029 = vstv %s1028
        %v1030 = vmul.f32 %v1029, %v726
        %v1031 = vmul.f32 %v1029, %v727
        %1034 = vrot.lane.b32.xlu0 %v1030, 3
        %v1035 = vpop.permute.xlu0 %1034
        %1036 = vrot.lane.b32.xlu0 %v1031, 3
        %v1037 = vpop.permute.xlu0 %1036
        %v1040 = vadd.f32 %v928, %v1035
        %v1041 = vadd.f32 %v929, %v1037
        %s1042 = sld [smem:[#allocation3 + $0x85]]
        %v1043 = vstv %s1042
        %v1044 = vmul.f32 %v1043, %v726
        %v1045 = vmul.f32 %v1043, %v727
        %1048 = vrot.lane.b32.xlu0 %v1044, 3
        %v1049 = vpop.permute.xlu0 %1048
        %1050 = vrot.lane.b32.xlu0 %v1045, 3
        %v1051 = vpop.permute.xlu0 %1050
        %v1054 = vadd.f32 %v942, %v1049
        %v1055 = vadd.f32 %v943, %v1051
        %s1056 = sld [smem:[#allocation3 + $0x3a]]
        %v1057 = vstv %s1056
        %v1058 = vmul.f32 %v1057, %v726
        %v1059 = vmul.f32 %v1057, %v727
        %1062 = vrot.lane.b32.xlu0 %v1058, 3
        %v1063 = vpop.permute.xlu0 %1062
        %1064 = vrot.lane.b32.xlu0 %v1059, 3
        %v1065 = vpop.permute.xlu0 %1064
        %v1068 = vadd.f32 %v956, %v1063
        %v1069 = vadd.f32 %v957, %v1065
        %s1070 = sld [smem:[#allocation3 + $0x9e]]
        %v1071 = vstv %s1070
        %v1072 = vmul.f32 %v1071, %v726
        %v1073 = vmul.f32 %v1071, %v727
        %1076 = vrot.lane.b32.xlu0 %v1072, 3
        %v1077 = vpop.permute.xlu0 %1076
        %1078 = vrot.lane.b32.xlu0 %v1073, 3
        %v1079 = vpop.permute.xlu0 %1078
        %v1082 = vadd.f32 %v970, %v1077
        %v1083 = vadd.f32 %v971, %v1079
        %s1084 = sld [smem:[#allocation3 + $0x53]]
        %v1085 = vstv %s1084
        %v1086 = vmul.f32 %v1085, %v726
        %v1087 = vmul.f32 %v1085, %v727
        %1090 = vrot.lane.b32.xlu0 %v1086, 3
        %v1091 = vpop.permute.xlu0 %1090
        %1092 = vrot.lane.b32.xlu0 %v1087, 3
        %v1093 = vpop.permute.xlu0 %1092
        %v1096 = vadd.f32 %v984, %v1091
        %v1097 = vadd.f32 %v985, %v1093
        %s1098 = sld [smem:[#allocation3 + $0xb7]]
        %v1099 = vstv %s1098
        %v1100 = vmul.f32 %v1099, %v726
        %v1101 = vmul.f32 %v1099, %v727
        %1104 = vrot.lane.b32.xlu0 %v1100, 3
        %v1105 = vpop.permute.xlu0 %1104
        %1106 = vrot.lane.b32.xlu0 %v1101, 3
        %v1107 = vpop.permute.xlu0 %1106
        %v1110 = vadd.f32 %v998, %v1105
        %v1111 = vadd.f32 %v999, %v1107
        %s1112 = sld [smem:[#allocation3 + $0x9]]
        %v1113 = vstv %s1112
        %v1114 = vmul.f32 %v1113, %v726
        %v1115 = vmul.f32 %v1113, %v727
        %1118 = vrot.lane.b32.xlu0 %v1114, 4
        %v1119 = vpop.permute.xlu0 %1118
        %1120 = vrot.lane.b32.xlu0 %v1115, 4
        %v1121 = vpop.permute.xlu0 %1120
        %v1124 = vadd.f32 %v1012, %v1119
        %v1125 = vadd.f32 %v1013, %v1121
        %s1126 = sld [smem:[#allocation3 + $0x6d]]
        %v1127 = vstv %s1126
        %v1128 = vmul.f32 %v1127, %v726
        %v1129 = vmul.f32 %v1127, %v727
        %1132 = vrot.lane.b32.xlu0 %v1128, 4
        %v1133 = vpop.permute.xlu0 %1132
        %1134 = vrot.lane.b32.xlu0 %v1129, 4
        %v1135 = vpop.permute.xlu0 %1134
        %v1138 = vadd.f32 %v1026, %v1133
        %v1139 = vadd.f32 %v1027, %v1135
        %s1140 = sld [smem:[#allocation3 + $0x22]]
        %v1141 = vstv %s1140
        %v1142 = vmul.f32 %v1141, %v726
        %v1143 = vmul.f32 %v1141, %v727
        %1146 = vrot.lane.b32.xlu0 %v1142, 4
        %v1147 = vpop.permute.xlu0 %1146
        %1148 = vrot.lane.b32.xlu0 %v1143, 4
        %v1149 = vpop.permute.xlu0 %1148
        %v1152 = vadd.f32 %v1040, %v1147
        %v1153 = vadd.f32 %v1041, %v1149
        %s1154 = sld [smem:[#allocation3 + $0x86]]
        %v1155 = vstv %s1154
        %v1156 = vmul.f32 %v1155, %v726
        %v1157 = vmul.f32 %v1155, %v727
        %1160 = vrot.lane.b32.xlu0 %v1156, 4
        %v1161 = vpop.permute.xlu0 %1160
        %1162 = vrot.lane.b32.xlu0 %v1157, 4
        %v1163 = vpop.permute.xlu0 %1162
        %v1166 = vadd.f32 %v1054, %v1161
        %v1167 = vadd.f32 %v1055, %v1163
        %s1168 = sld [smem:[#allocation3 + $0x3b]]
        %v1169 = vstv %s1168
        %v1170 = vmul.f32 %v1169, %v726
        %v1171 = vmul.f32 %v1169, %v727
        %1174 = vrot.lane.b32.xlu0 %v1170, 4
        %v1175 = vpop.permute.xlu0 %1174
        %1176 = vrot.lane.b32.xlu0 %v1171, 4
        %v1177 = vpop.permute.xlu0 %1176
        %v1180 = vadd.f32 %v1068, %v1175
        %v1181 = vadd.f32 %v1069, %v1177
        %s1182 = sld [smem:[#allocation3 + $0x9f]]
        %v1183 = vstv %s1182
        %v1184 = vmul.f32 %v1183, %v726
        %v1185 = vmul.f32 %v1183, %v727
        %1188 = vrot.lane.b32.xlu0 %v1184, 4
        %v1189 = vpop.permute.xlu0 %1188
        %1190 = vrot.lane.b32.xlu0 %v1185, 4
        %v1191 = vpop.permute.xlu0 %1190
        %v1194 = vadd.f32 %v1082, %v1189
        %v1195 = vadd.f32 %v1083, %v1191
        %s1196 = sld [smem:[#allocation3 + $0x54]]
        %v1197 = vstv %s1196
        %v1198 = vmul.f32 %v1197, %v726
        %v1199 = vmul.f32 %v1197, %v727
        %1202 = vrot.lane.b32.xlu0 %v1198, 4
        %v1203 = vpop.permute.xlu0 %1202
        %1204 = vrot.lane.b32.xlu0 %v1199, 4
        %v1205 = vpop.permute.xlu0 %1204
        %v1208 = vadd.f32 %v1096, %v1203
        %v1209 = vadd.f32 %v1097, %v1205
        %s1210 = sld [smem:[#allocation3 + $0xb8]]
        %v1211 = vstv %s1210
        %v1212 = vmul.f32 %v1211, %v726
        %v1213 = vmul.f32 %v1211, %v727
        %1216 = vrot.lane.b32.xlu0 %v1212, 4
        %v1217 = vpop.permute.xlu0 %1216
        %1218 = vrot.lane.b32.xlu0 %v1213, 4
        %v1219 = vpop.permute.xlu0 %1218
        %v1222 = vadd.f32 %v1110, %v1217
        %v1223 = vadd.f32 %v1111, %v1219
        %v1224 = vld [vmem:[#allocation2 + $0x2] sm:$0xff]
        %v1225 = vld [vmem:[#allocation2 + $0xa] sm:$0xff]
        %s1226 = sld [smem:[#allocation3 + $0xa]]
        %v1227 = vstv %s1226
        %v1228 = vmul.f32 %v1227, %v1224
        %v1229 = vmul.f32 %v1227, %v1225
        %v1230 = vadd.f32 %v1124, %v1228
        %v1231 = vadd.f32 %v1125, %v1229
        %s1232 = sld [smem:[#allocation3 + $0x6e]]
        %v1233 = vstv %s1232
        %v1234 = vmul.f32 %v1233, %v1224
        %v1235 = vmul.f32 %v1233, %v1225
        %v1236 = vadd.f32 %v1138, %v1234
        %v1237 = vadd.f32 %v1139, %v1235
        %s1238 = sld [smem:[#allocation3 + $0x23]]
        %v1239 = vstv %s1238
        %v1240 = vmul.f32 %v1239, %v1224
        %v1241 = vmul.f32 %v1239, %v1225
        %v1242 = vadd.f32 %v1152, %v1240
        %v1243 = vadd.f32 %v1153, %v1241
        %s1244 = sld [smem:[#allocation3 + $0x87]]
        %v1245 = vstv %s1244
        %v1246 = vmul.f32 %v1245, %v1224
        %v1247 = vmul.f32 %v1245, %v1225
        %v1248 = vadd.f32 %v1166, %v1246
        %v1249 = vadd.f32 %v1167, %v1247
        %s1250 = sld [smem:[#allocation3 + $0x3c]]
        %v1251 = vstv %s1250
        %v1252 = vmul.f32 %v1251, %v1224
        %v1253 = vmul.f32 %v1251, %v1225
        %v1254 = vadd.f32 %v1180, %v1252
        %v1255 = vadd.f32 %v1181, %v1253
        %s1256 = sld [smem:[#allocation3 + $0xa0]]
        %v1257 = vstv %s1256
        %v1258 = vmul.f32 %v1257, %v1224
        %v1259 = vmul.f32 %v1257, %v1225
        %v1260 = vadd.f32 %v1194, %v1258
        %v1261 = vadd.f32 %v1195, %v1259
        %s1262 = sld [smem:[#allocation3 + $0x55]]
        %v1263 = vstv %s1262
        %v1264 = vmul.f32 %v1263, %v1224
        %v1265 = vmul.f32 %v1263, %v1225
        %v1266 = vadd.f32 %v1208, %v1264
        %v1267 = vadd.f32 %v1209, %v1265
        %s1268 = sld [smem:[#allocation3 + $0xb9]]
        %v1269 = vstv %s1268
        %v1270 = vmul.f32 %v1269, %v1224
        %v1271 = vmul.f32 %v1269, %v1225
        %v1272 = vadd.f32 %v1222, %v1270
        %v1273 = vadd.f32 %v1223, %v1271
        %s1274 = sld [smem:[#allocation3 + $0xb]]
        %v1275 = vstv %s1274
        %v1276 = vmul.f32 %v1275, %v1224
        %v1277 = vmul.f32 %v1275, %v1225
        %1280 = vrot.lane.b32.xlu0 %v1276, 1
        %v1281 = vpop.permute.xlu0 %1280
        %1282 = vrot.lane.b32.xlu0 %v1277, 1
        %v1283 = vpop.permute.xlu0 %1282
        %v1286 = vadd.f32 %v1230, %v1281
        %v1287 = vadd.f32 %v1231, %v1283
        %s1288 = sld [smem:[#allocation3 + $0x6f]]
        %v1289 = vstv %s1288
        %v1290 = vmul.f32 %v1289, %v1224
        %v1291 = vmul.f32 %v1289, %v1225
        %1294 = vrot.lane.b32.xlu0 %v1290, 1
        %v1295 = vpop.permute.xlu0 %1294
        %1296 = vrot.lane.b32.xlu0 %v1291, 1
        %v1297 = vpop.permute.xlu0 %1296
        %v1300 = vadd.f32 %v1236, %v1295
        %v1301 = vadd.f32 %v1237, %v1297
        %s1302 = sld [smem:[#allocation3 + $0x24]]
        %v1303 = vstv %s1302
        %v1304 = vmul.f32 %v1303, %v1224
        %v1305 = vmul.f32 %v1303, %v1225
        %1308 = vrot.lane.b32.xlu0 %v1304, 1
        %v1309 = vpop.permute.xlu0 %1308
        %1310 = vrot.lane.b32.xlu0 %v1305, 1
        %v1311 = vpop.permute.xlu0 %1310
        %v1314 = vadd.f32 %v1242, %v1309
        %v1315 = vadd.f32 %v1243, %v1311
        %s1316 = sld [smem:[#allocation3 + $0x88]]
        %v1317 = vstv %s1316
        %v1318 = vmul.f32 %v1317, %v1224
        %v1319 = vmul.f32 %v1317, %v1225
        %1322 = vrot.lane.b32.xlu0 %v1318, 1
        %v1323 = vpop.permute.xlu0 %1322
        %1324 = vrot.lane.b32.xlu0 %v1319, 1
        %v1325 = vpop.permute.xlu0 %1324
        %v1328 = vadd.f32 %v1248, %v1323
        %v1329 = vadd.f32 %v1249, %v1325
        %s1330 = sld [smem:[#allocation3 + $0x3d]]
        %v1331 = vstv %s1330
        %v1332 = vmul.f32 %v1331, %v1224
        %v1333 = vmul.f32 %v1331, %v1225
        %1336 = vrot.lane.b32.xlu0 %v1332, 1
        %v1337 = vpop.permute.xlu0 %1336
        %1338 = vrot.lane.b32.xlu0 %v1333, 1
        %v1339 = vpop.permute.xlu0 %1338
        %v1342 = vadd.f32 %v1254, %v1337
        %v1343 = vadd.f32 %v1255, %v1339
        %s1344 = sld [smem:[#allocation3 + $0xa1]]
        %v1345 = vstv %s1344
        %v1346 = vmul.f32 %v1345, %v1224
        %v1347 = vmul.f32 %v1345, %v1225
        %1350 = vrot.lane.b32.xlu0 %v1346, 1
        %v1351 = vpop.permute.xlu0 %1350
        %1352 = vrot.lane.b32.xlu0 %v1347, 1
        %v1353 = vpop.permute.xlu0 %1352
        %v1356 = vadd.f32 %v1260, %v1351
        %v1357 = vadd.f32 %v1261, %v1353
        %s1358 = sld [smem:[#allocation3 + $0x56]]
        %v1359 = vstv %s1358
        %v1360 = vmul.f32 %v1359, %v1224
        %v1361 = vmul.f32 %v1359, %v1225
        %1364 = vrot.lane.b32.xlu0 %v1360, 1
        %v1365 = vpop.permute.xlu0 %1364
        %1366 = vrot.lane.b32.xlu0 %v1361, 1
        %v1367 = vpop.permute.xlu0 %1366
        %v1370 = vadd.f32 %v1266, %v1365
        %v1371 = vadd.f32 %v1267, %v1367
        %s1372 = sld [smem:[#allocation3 + $0xba]]
        %v1373 = vstv %s1372
        %v1374 = vmul.f32 %v1373, %v1224
        %v1375 = vmul.f32 %v1373, %v1225
        %1378 = vrot.lane.b32.xlu0 %v1374, 1
        %v1379 = vpop.permute.xlu0 %1378
        %1380 = vrot.lane.b32.xlu0 %v1375, 1
        %v1381 = vpop.permute.xlu0 %1380
        %v1384 = vadd.f32 %v1272, %v1379
        %v1385 = vadd.f32 %v1273, %v1381
        %s1386 = sld [smem:[#allocation3 + $0xc]]
        %v1387 = vstv %s1386
        %v1388 = vmul.f32 %v1387, %v1224
        %v1389 = vmul.f32 %v1387, %v1225
        %1392 = vrot.lane.b32.xlu0 %v1388, 2
        %v1393 = vpop.permute.xlu0 %1392
        %1394 = vrot.lane.b32.xlu0 %v1389, 2
        %v1395 = vpop.permute.xlu0 %1394
        %v1398 = vadd.f32 %v1286, %v1393
        %v1399 = vadd.f32 %v1287, %v1395
        %s1400 = sld [smem:[#allocation3 + $0x70]]
        %v1401 = vstv %s1400
        %v1402 = vmul.f32 %v1401, %v1224
        %v1403 = vmul.f32 %v1401, %v1225
        %1406 = vrot.lane.b32.xlu0 %v1402, 2
        %v1407 = vpop.permute.xlu0 %1406
        %1408 = vrot.lane.b32.xlu0 %v1403, 2
        %v1409 = vpop.permute.xlu0 %1408
        %v1412 = vadd.f32 %v1300, %v1407
        %v1413 = vadd.f32 %v1301, %v1409
        %s1414 = sld [smem:[#allocation3 + $0x25]]
        %v1415 = vstv %s1414
        %v1416 = vmul.f32 %v1415, %v1224
        %v1417 = vmul.f32 %v1415, %v1225
        %1420 = vrot.lane.b32.xlu0 %v1416, 2
        %v1421 = vpop.permute.xlu0 %1420
        %1422 = vrot.lane.b32.xlu0 %v1417, 2
        %v1423 = vpop.permute.xlu0 %1422
        %v1426 = vadd.f32 %v1314, %v1421
        %v1427 = vadd.f32 %v1315, %v1423
        %s1428 = sld [smem:[#allocation3 + $0x89]]
        %v1429 = vstv %s1428
        %v1430 = vmul.f32 %v1429, %v1224
        %v1431 = vmul.f32 %v1429, %v1225
        %1434 = vrot.lane.b32.xlu0 %v1430, 2
        %v1435 = vpop.permute.xlu0 %1434
        %1436 = vrot.lane.b32.xlu0 %v1431, 2
        %v1437 = vpop.permute.xlu0 %1436
        %v1440 = vadd.f32 %v1328, %v1435
        %v1441 = vadd.f32 %v1329, %v1437
        %s1442 = sld [smem:[#allocation3 + $0x3e]]
        %v1443 = vstv %s1442
        %v1444 = vmul.f32 %v1443, %v1224
        %v1445 = vmul.f32 %v1443, %v1225
        %1448 = vrot.lane.b32.xlu0 %v1444, 2
        %v1449 = vpop.permute.xlu0 %1448
        %1450 = vrot.lane.b32.xlu0 %v1445, 2
        %v1451 = vpop.permute.xlu0 %1450
        %v1454 = vadd.f32 %v1342, %v1449
        %v1455 = vadd.f32 %v1343, %v1451
        %s1456 = sld [smem:[#allocation3 + $0xa2]]
        %v1457 = vstv %s1456
        %v1458 = vmul.f32 %v1457, %v1224
        %v1459 = vmul.f32 %v1457, %v1225
        %1462 = vrot.lane.b32.xlu0 %v1458, 2
        %v1463 = vpop.permute.xlu0 %1462
        %1464 = vrot.lane.b32.xlu0 %v1459, 2
        %v1465 = vpop.permute.xlu0 %1464
        %v1468 = vadd.f32 %v1356, %v1463
        %v1469 = vadd.f32 %v1357, %v1465
        %s1470 = sld [smem:[#allocation3 + $0x57]]
        %v1471 = vstv %s1470
        %v1472 = vmul.f32 %v1471, %v1224
        %v1473 = vmul.f32 %v1471, %v1225
        %1476 = vrot.lane.b32.xlu0 %v1472, 2
        %v1477 = vpop.permute.xlu0 %1476
        %1478 = vrot.lane.b32.xlu0 %v1473, 2
        %v1479 = vpop.permute.xlu0 %1478
        %v1482 = vadd.f32 %v1370, %v1477
        %v1483 = vadd.f32 %v1371, %v1479
        %s1484 = sld [smem:[#allocation3 + $0xbb]]
        %v1485 = vstv %s1484
        %v1486 = vmul.f32 %v1485, %v1224
        %v1487 = vmul.f32 %v1485, %v1225
        %1490 = vrot.lane.b32.xlu0 %v1486, 2
        %v1491 = vpop.permute.xlu0 %1490
        %1492 = vrot.lane.b32.xlu0 %v1487, 2
        %v1493 = vpop.permute.xlu0 %1492
        %v1496 = vadd.f32 %v1384, %v1491
        %v1497 = vadd.f32 %v1385, %v1493
        %s1498 = sld [smem:[#allocation3 + $0xd]]
        %v1499 = vstv %s1498
        %v1500 = vmul.f32 %v1499, %v1224
        %v1501 = vmul.f32 %v1499, %v1225
        %1504 = vrot.lane.b32.xlu0 %v1500, 3
        %v1505 = vpop.permute.xlu0 %1504
        %1506 = vrot.lane.b32.xlu0 %v1501, 3
        %v1507 = vpop.permute.xlu0 %1506
        %v1510 = vadd.f32 %v1398, %v1505
        %v1511 = vadd.f32 %v1399, %v1507
        %s1512 = sld [smem:[#allocation3 + $0x71]]
        %v1513 = vstv %s1512
        %v1514 = vmul.f32 %v1513, %v1224
        %v1515 = vmul.f32 %v1513, %v1225
        %1518 = vrot.lane.b32.xlu0 %v1514, 3
        %v1519 = vpop.permute.xlu0 %1518
        %1520 = vrot.lane.b32.xlu0 %v1515, 3
        %v1521 = vpop.permute.xlu0 %1520
        %v1524 = vadd.f32 %v1412, %v1519
        %v1525 = vadd.f32 %v1413, %v1521
        %s1526 = sld [smem:[#allocation3 + $0x26]]
        %v1527 = vstv %s1526
        %v1528 = vmul.f32 %v1527, %v1224
        %v1529 = vmul.f32 %v1527, %v1225
        %1532 = vrot.lane.b32.xlu0 %v1528, 3
        %v1533 = vpop.permute.xlu0 %1532
        %1534 = vrot.lane.b32.xlu0 %v1529, 3
        %v1535 = vpop.permute.xlu0 %1534
        %v1538 = vadd.f32 %v1426, %v1533
        %v1539 = vadd.f32 %v1427, %v1535
        %s1540 = sld [smem:[#allocation3 + $0x8a]]
        %v1541 = vstv %s1540
        %v1542 = vmul.f32 %v1541, %v1224
        %v1543 = vmul.f32 %v1541, %v1225
        %1546 = vrot.lane.b32.xlu0 %v1542, 3
        %v1547 = vpop.permute.xlu0 %1546
        %1548 = vrot.lane.b32.xlu0 %v1543, 3
        %v1549 = vpop.permute.xlu0 %1548
        %v1552 = vadd.f32 %v1440, %v1547
        %v1553 = vadd.f32 %v1441, %v1549
        %s1554 = sld [smem:[#allocation3 + $0x3f]]
        %v1555 = vstv %s1554
        %v1556 = vmul.f32 %v1555, %v1224
        %v1557 = vmul.f32 %v1555, %v1225
        %1560 = vrot.lane.b32.xlu0 %v1556, 3
        %v1561 = vpop.permute.xlu0 %1560
        %1562 = vrot.lane.b32.xlu0 %v1557, 3
        %v1563 = vpop.permute.xlu0 %1562
        %v1566 = vadd.f32 %v1454, %v1561
        %v1567 = vadd.f32 %v1455, %v1563
        %s1568 = sld [smem:[#allocation3 + $0xa3]]
        %v1569 = vstv %s1568
        %v1570 = vmul.f32 %v1569, %v1224
        %v1571 = vmul.f32 %v1569, %v1225
        %1574 = vrot.lane.b32.xlu0 %v1570, 3
        %v1575 = vpop.permute.xlu0 %1574
        %1576 = vrot.lane.b32.xlu0 %v1571, 3
        %v1577 = vpop.permute.xlu0 %1576
        %v1580 = vadd.f32 %v1468, %v1575
        %v1581 = vadd.f32 %v1469, %v1577
        %s1582 = sld [smem:[#allocation3 + $0x58]]
        %v1583 = vstv %s1582
        %v1584 = vmul.f32 %v1583, %v1224
        %v1585 = vmul.f32 %v1583, %v1225
        %1588 = vrot.lane.b32.xlu0 %v1584, 3
        %v1589 = vpop.permute.xlu0 %1588
        %1590 = vrot.lane.b32.xlu0 %v1585, 3
        %v1591 = vpop.permute.xlu0 %1590
        %v1594 = vadd.f32 %v1482, %v1589
        %v1595 = vadd.f32 %v1483, %v1591
        %s1596 = sld [smem:[#allocation3 + $0xbc]]
        %v1597 = vstv %s1596
        %v1598 = vmul.f32 %v1597, %v1224
        %v1599 = vmul.f32 %v1597, %v1225
        %1602 = vrot.lane.b32.xlu0 %v1598, 3
        %v1603 = vpop.permute.xlu0 %1602
        %1604 = vrot.lane.b32.xlu0 %v1599, 3
        %v1605 = vpop.permute.xlu0 %1604
        %v1608 = vadd.f32 %v1496, %v1603
        %v1609 = vadd.f32 %v1497, %v1605
        %s1610 = sld [smem:[#allocation3 + $0xe]]
        %v1611 = vstv %s1610
        %v1612 = vmul.f32 %v1611, %v1224
        %v1613 = vmul.f32 %v1611, %v1225
        %1616 = vrot.lane.b32.xlu0 %v1612, 4
        %v1617 = vpop.permute.xlu0 %1616
        %1618 = vrot.lane.b32.xlu0 %v1613, 4
        %v1619 = vpop.permute.xlu0 %1618
        %v1622 = vadd.f32 %v1510, %v1617
        %v1623 = vadd.f32 %v1511, %v1619
        %s1624 = sld [smem:[#allocation3 + $0x72]]
        %v1625 = vstv %s1624
        %v1626 = vmul.f32 %v1625, %v1224
        %v1627 = vmul.f32 %v1625, %v1225
        %1630 = vrot.lane.b32.xlu0 %v1626, 4
        %v1631 = vpop.permute.xlu0 %1630
        %1632 = vrot.lane.b32.xlu0 %v1627, 4
        %v1633 = vpop.permute.xlu0 %1632
        %v1636 = vadd.f32 %v1524, %v1631
        %v1637 = vadd.f32 %v1525, %v1633
        %s1638 = sld [smem:[#allocation3 + $0x27]]
        %v1639 = vstv %s1638
        %v1640 = vmul.f32 %v1639, %v1224
        %v1641 = vmul.f32 %v1639, %v1225
        %1644 = vrot.lane.b32.xlu0 %v1640, 4
        %v1645 = vpop.permute.xlu0 %1644
        %1646 = vrot.lane.b32.xlu0 %v1641, 4
        %v1647 = vpop.permute.xlu0 %1646
        %v1650 = vadd.f32 %v1538, %v1645
        %v1651 = vadd.f32 %v1539, %v1647
        %s1652 = sld [smem:[#allocation3 + $0x8b]]
        %v1653 = vstv %s1652
        %v1654 = vmul.f32 %v1653, %v1224
        %v1655 = vmul.f32 %v1653, %v1225
        %1658 = vrot.lane.b32.xlu0 %v1654, 4
        %v1659 = vpop.permute.xlu0 %1658
        %1660 = vrot.lane.b32.xlu0 %v1655, 4
        %v1661 = vpop.permute.xlu0 %1660
        %v1664 = vadd.f32 %v1552, %v1659
        %v1665 = vadd.f32 %v1553, %v1661
        %s1666 = sld [smem:[#allocation3 + $0x40]]
        %v1667 = vstv %s1666
        %v1668 = vmul.f32 %v1667, %v1224
        %v1669 = vmul.f32 %v1667, %v1225
        %1672 = vrot.lane.b32.xlu0 %v1668, 4
        %v1673 = vpop.permute.xlu0 %1672
        %1674 = vrot.lane.b32.xlu0 %v1669, 4
        %v1675 = vpop.permute.xlu0 %1674
        %v1678 = vadd.f32 %v1566, %v1673
        %v1679 = vadd.f32 %v1567, %v1675
        %s1680 = sld [smem:[#allocation3 + $0xa4]]
        %v1681 = vstv %s1680
        %v1682 = vmul.f32 %v1681, %v1224
        %v1683 = vmul.f32 %v1681, %v1225
        %1686 = vrot.lane.b32.xlu0 %v1682, 4
        %v1687 = vpop.permute.xlu0 %1686
        %1688 = vrot.lane.b32.xlu0 %v1683, 4
        %v1689 = vpop.permute.xlu0 %1688
        %v1692 = vadd.f32 %v1580, %v1687
        %v1693 = vadd.f32 %v1581, %v1689
        %s1694 = sld [smem:[#allocation3 + $0x59]]
        %v1695 = vstv %s1694
        %v1696 = vmul.f32 %v1695, %v1224
        %v1697 = vmul.f32 %v1695, %v1225
        %1700 = vrot.lane.b32.xlu0 %v1696, 4
        %v1701 = vpop.permute.xlu0 %1700
        %1702 = vrot.lane.b32.xlu0 %v1697, 4
        %v1703 = vpop.permute.xlu0 %1702
        %v1706 = vadd.f32 %v1594, %v1701
        %v1707 = vadd.f32 %v1595, %v1703
        %s1708 = sld [smem:[#allocation3 + $0xbd]]
        %v1709 = vstv %s1708
        %v1710 = vmul.f32 %v1709, %v1224
        %v1711 = vmul.f32 %v1709, %v1225
        %1714 = vrot.lane.b32.xlu0 %v1710, 4
        %v1715 = vpop.permute.xlu0 %1714
        %1716 = vrot.lane.b32.xlu0 %v1711, 4
        %v1717 = vpop.permute.xlu0 %1716
        %v1720 = vadd.f32 %v1608, %v1715
        %v1721 = vadd.f32 %v1609, %v1717
        %v1722 = vld [vmem:[#allocation2 + $0x1] sm:$0xff]
        %v1723 = vld [vmem:[#allocation2 + $0x9] sm:$0xff]
        %s1724 = sld [smem:[#allocation3 + $0xf]]
        %v1725 = vstv %s1724
        %v1726 = vmul.f32 %v1725, %v1722
        %v1727 = vmul.f32 %v1725, %v1723
        %v1728 = vadd.f32 %v1622, %v1726
        %v1729 = vadd.f32 %v1623, %v1727
        %s1730 = sld [smem:[#allocation3 + $0x73]]
        %v1731 = vstv %s1730
        %v1732 = vmul.f32 %v1731, %v1722
        %v1733 = vmul.f32 %v1731, %v1723
        %v1734 = vadd.f32 %v1636, %v1732
        %v1735 = vadd.f32 %v1637, %v1733
        %s1736 = sld [smem:[#allocation3 + $0x28]]
        %v1737 = vstv %s1736
        %v1738 = vmul.f32 %v1737, %v1722
        %v1739 = vmul.f32 %v1737, %v1723
        %v1740 = vadd.f32 %v1650, %v1738
        %v1741 = vadd.f32 %v1651, %v1739
        %s1742 = sld [smem:[#allocation3 + $0x8c]]
        %v1743 = vstv %s1742
        %v1744 = vmul.f32 %v1743, %v1722
        %v1745 = vmul.f32 %v1743, %v1723
        %v1746 = vadd.f32 %v1664, %v1744
        %v1747 = vadd.f32 %v1665, %v1745
        %s1748 = sld [smem:[#allocation3 + $0x41]]
        %v1749 = vstv %s1748
        %v1750 = vmul.f32 %v1749, %v1722
        %v1751 = vmul.f32 %v1749, %v1723
        %v1752 = vadd.f32 %v1678, %v1750
        %v1753 = vadd.f32 %v1679, %v1751
        %s1754 = sld [smem:[#allocation3 + $0xa5]]
        %v1755 = vstv %s1754
        %v1756 = vmul.f32 %v1755, %v1722
        %v1757 = vmul.f32 %v1755, %v1723
        %v1758 = vadd.f32 %v1692, %v1756
        %v1759 = vadd.f32 %v1693, %v1757
        %s1760 = sld [smem:[#allocation3 + $0x5a]]
        %v1761 = vstv %s1760
        %v1762 = vmul.f32 %v1761, %v1722
        %v1763 = vmul.f32 %v1761, %v1723
        %v1764 = vadd.f32 %v1706, %v1762
        %v1765 = vadd.f32 %v1707, %v1763
        %s1766 = sld [smem:[#allocation3 + $0xbe]]
        %v1767 = vstv %s1766
        %v1768 = vmul.f32 %v1767, %v1722
        %v1769 = vmul.f32 %v1767, %v1723
        %v1770 = vadd.f32 %v1720, %v1768
        %v1771 = vadd.f32 %v1721, %v1769
        %s1772 = sld [smem:[#allocation3 + $0x10]]
        %v1773 = vstv %s1772
        %v1774 = vmul.f32 %v1773, %v1722
        %v1775 = vmul.f32 %v1773, %v1723
        %1778 = vrot.lane.b32.xlu0 %v1774, 1
        %v1779 = vpop.permute.xlu0 %1778
        %1780 = vrot.lane.b32.xlu0 %v1775, 1
        %v1781 = vpop.permute.xlu0 %1780
        %v1784 = vadd.f32 %v1728, %v1779
        %v1785 = vadd.f32 %v1729, %v1781
        %s1786 = sld [smem:[#allocation3 + $0x74]]
        %v1787 = vstv %s1786
        %v1788 = vmul.f32 %v1787, %v1722
        %v1789 = vmul.f32 %v1787, %v1723
        %1792 = vrot.lane.b32.xlu0 %v1788, 1
        %v1793 = vpop.permute.xlu0 %1792
        %1794 = vrot.lane.b32.xlu0 %v1789, 1
        %v1795 = vpop.permute.xlu0 %1794
        %v1798 = vadd.f32 %v1734, %v1793
        %v1799 = vadd.f32 %v1735, %v1795
        %s1800 = sld [smem:[#allocation3 + $0x29]]
        %v1801 = vstv %s1800
        %v1802 = vmul.f32 %v1801, %v1722
        %v1803 = vmul.f32 %v1801, %v1723
        %1806 = vrot.lane.b32.xlu0 %v1802, 1
        %v1807 = vpop.permute.xlu0 %1806
        %1808 = vrot.lane.b32.xlu0 %v1803, 1
        %v1809 = vpop.permute.xlu0 %1808
        %v1812 = vadd.f32 %v1740, %v1807
        %v1813 = vadd.f32 %v1741, %v1809
        %s1814 = sld [smem:[#allocation3 + $0x8d]]
        %v1815 = vstv %s1814
        %v1816 = vmul.f32 %v1815, %v1722
        %v1817 = vmul.f32 %v1815, %v1723
        %1820 = vrot.lane.b32.xlu0 %v1816, 1
        %v1821 = vpop.permute.xlu0 %1820
        %1822 = vrot.lane.b32.xlu0 %v1817, 1
        %v1823 = vpop.permute.xlu0 %1822
        %v1826 = vadd.f32 %v1746, %v1821
        %v1827 = vadd.f32 %v1747, %v1823
        %s1828 = sld [smem:[#allocation3 + $0x42]]
        %v1829 = vstv %s1828
        %v1830 = vmul.f32 %v1829, %v1722
        %v1831 = vmul.f32 %v1829, %v1723
        %1834 = vrot.lane.b32.xlu0 %v1830, 1
        %v1835 = vpop.permute.xlu0 %1834
        %1836 = vrot.lane.b32.xlu0 %v1831, 1
        %v1837 = vpop.permute.xlu0 %1836
        %v1840 = vadd.f32 %v1752, %v1835
        %v1841 = vadd.f32 %v1753, %v1837
        %s1842 = sld [smem:[#allocation3 + $0xa6]]
        %v1843 = vstv %s1842
        %v1844 = vmul.f32 %v1843, %v1722
        %v1845 = vmul.f32 %v1843, %v1723
        %1848 = vrot.lane.b32.xlu0 %v1844, 1
        %v1849 = vpop.permute.xlu0 %1848
        %1850 = vrot.lane.b32.xlu0 %v1845, 1
        %v1851 = vpop.permute.xlu0 %1850
        %v1854 = vadd.f32 %v1758, %v1849
        %v1855 = vadd.f32 %v1759, %v1851
        %s1856 = sld [smem:[#allocation3 + $0x5b]]
        %v1857 = vstv %s1856
        %v1858 = vmul.f32 %v1857, %v1722
        %v1859 = vmul.f32 %v1857, %v1723
        %1862 = vrot.lane.b32.xlu0 %v1858, 1
        %v1863 = vpop.permute.xlu0 %1862
        %1864 = vrot.lane.b32.xlu0 %v1859, 1
        %v1865 = vpop.permute.xlu0 %1864
        %v1868 = vadd.f32 %v1764, %v1863
        %v1869 = vadd.f32 %v1765, %v1865
        %s1870 = sld [smem:[#allocation3 + $0xbf]]
        %v1871 = vstv %s1870
        %v1872 = vmul.f32 %v1871, %v1722
        %v1873 = vmul.f32 %v1871, %v1723
        %1876 = vrot.lane.b32.xlu0 %v1872, 1
        %v1877 = vpop.permute.xlu0 %1876
        %1878 = vrot.lane.b32.xlu0 %v1873, 1
        %v1879 = vpop.permute.xlu0 %1878
        %v1882 = vadd.f32 %v1770, %v1877
        %v1883 = vadd.f32 %v1771, %v1879
        %s1884 = sld [smem:[#allocation3 + $0x11]]
        %v1885 = vstv %s1884
        %v1886 = vmul.f32 %v1885, %v1722
        %v1887 = vmul.f32 %v1885, %v1723
        %1890 = vrot.lane.b32.xlu0 %v1886, 2
        %v1891 = vpop.permute.xlu0 %1890
        %1892 = vrot.lane.b32.xlu0 %v1887, 2
        %v1893 = vpop.permute.xlu0 %1892
        %v1896 = vadd.f32 %v1784, %v1891
        %v1897 = vadd.f32 %v1785, %v1893
        %s1898 = sld [smem:[#allocation3 + $0x75]]
        %v1899 = vstv %s1898
        %v1900 = vmul.f32 %v1899, %v1722
        %v1901 = vmul.f32 %v1899, %v1723
        %1904 = vrot.lane.b32.xlu0 %v1900, 2
        %v1905 = vpop.permute.xlu0 %1904
        %1906 = vrot.lane.b32.xlu0 %v1901, 2
        %v1907 = vpop.permute.xlu0 %1906
        %v1910 = vadd.f32 %v1798, %v1905
        %v1911 = vadd.f32 %v1799, %v1907
        %s1912 = sld [smem:[#allocation3 + $0x2a]]
        %v1913 = vstv %s1912
        %v1914 = vmul.f32 %v1913, %v1722
        %v1915 = vmul.f32 %v1913, %v1723
        %1918 = vrot.lane.b32.xlu0 %v1914, 2
        %v1919 = vpop.permute.xlu0 %1918
        %1920 = vrot.lane.b32.xlu0 %v1915, 2
        %v1921 = vpop.permute.xlu0 %1920
        %v1924 = vadd.f32 %v1812, %v1919
        %v1925 = vadd.f32 %v1813, %v1921
        %s1926 = sld [smem:[#allocation3 + $0x8e]]
        %v1927 = vstv %s1926
        %v1928 = vmul.f32 %v1927, %v1722
        %v1929 = vmul.f32 %v1927, %v1723
        %1932 = vrot.lane.b32.xlu0 %v1928, 2
        %v1933 = vpop.permute.xlu0 %1932
        %1934 = vrot.lane.b32.xlu0 %v1929, 2
        %v1935 = vpop.permute.xlu0 %1934
        %v1938 = vadd.f32 %v1826, %v1933
        %v1939 = vadd.f32 %v1827, %v1935
        %s1940 = sld [smem:[#allocation3 + $0x43]]
        %v1941 = vstv %s1940
        %v1942 = vmul.f32 %v1941, %v1722
        %v1943 = vmul.f32 %v1941, %v1723
        %1946 = vrot.lane.b32.xlu0 %v1942, 2
        %v1947 = vpop.permute.xlu0 %1946
        %1948 = vrot.lane.b32.xlu0 %v1943, 2
        %v1949 = vpop.permute.xlu0 %1948
        %v1952 = vadd.f32 %v1840, %v1947
        %v1953 = vadd.f32 %v1841, %v1949
        %s1954 = sld [smem:[#allocation3 + $0xa7]]
        %v1955 = vstv %s1954
        %v1956 = vmul.f32 %v1955, %v1722
        %v1957 = vmul.f32 %v1955, %v1723
        %1960 = vrot.lane.b32.xlu0 %v1956, 2
        %v1961 = vpop.permute.xlu0 %1960
        %1962 = vrot.lane.b32.xlu0 %v1957, 2
        %v1963 = vpop.permute.xlu0 %1962
        %v1966 = vadd.f32 %v1854, %v1961
        %v1967 = vadd.f32 %v1855, %v1963
        %s1968 = sld [smem:[#allocation3 + $0x5c]]
        %v1969 = vstv %s1968
        %v1970 = vmul.f32 %v1969, %v1722
        %v1971 = vmul.f32 %v1969, %v1723
        %1974 = vrot.lane.b32.xlu0 %v1970, 2
        %v1975 = vpop.permute.xlu0 %1974
        %1976 = vrot.lane.b32.xlu0 %v1971, 2
        %v1977 = vpop.permute.xlu0 %1976
        %v1980 = vadd.f32 %v1868, %v1975
        %v1981 = vadd.f32 %v1869, %v1977
        %s1982 = sld [smem:[#allocation3 + $0xc0]]
        %v1983 = vstv %s1982
        %v1984 = vmul.f32 %v1983, %v1722
        %v1985 = vmul.f32 %v1983, %v1723
        %1988 = vrot.lane.b32.xlu0 %v1984, 2
        %v1989 = vpop.permute.xlu0 %1988
        %1990 = vrot.lane.b32.xlu0 %v1985, 2
        %v1991 = vpop.permute.xlu0 %1990
        %v1994 = vadd.f32 %v1882, %v1989
        %v1995 = vadd.f32 %v1883, %v1991
        %s1996 = sld [smem:[#allocation3 + $0x12]]
        %v1997 = vstv %s1996
        %v1998 = vmul.f32 %v1997, %v1722
        %v1999 = vmul.f32 %v1997, %v1723
        %2002 = vrot.lane.b32.xlu0 %v1998, 3
        %v2003 = vpop.permute.xlu0 %2002
        %2004 = vrot.lane.b32.xlu0 %v1999, 3
        %v2005 = vpop.permute.xlu0 %2004
        %v2008 = vadd.f32 %v1896, %v2003
        %v2009 = vadd.f32 %v1897, %v2005
        %s2010 = sld [smem:[#allocation3 + $0x76]]
        %v2011 = vstv %s2010
        %v2012 = vmul.f32 %v2011, %v1722
        %v2013 = vmul.f32 %v2011, %v1723
        %2016 = vrot.lane.b32.xlu0 %v2012, 3
        %v2017 = vpop.permute.xlu0 %2016
        %2018 = vrot.lane.b32.xlu0 %v2013, 3
        %v2019 = vpop.permute.xlu0 %2018
        %v2022 = vadd.f32 %v1910, %v2017
        %v2023 = vadd.f32 %v1911, %v2019
        %s2024 = sld [smem:[#allocation3 + $0x2b]]
        %v2025 = vstv %s2024
        %v2026 = vmul.f32 %v2025, %v1722
        %v2027 = vmul.f32 %v2025, %v1723
        %2030 = vrot.lane.b32.xlu0 %v2026, 3
        %v2031 = vpop.permute.xlu0 %2030
        %2032 = vrot.lane.b32.xlu0 %v2027, 3
        %v2033 = vpop.permute.xlu0 %2032
        %v2036 = vadd.f32 %v1924, %v2031
        %v2037 = vadd.f32 %v1925, %v2033
        %s2038 = sld [smem:[#allocation3 + $0x8f]]
        %v2039 = vstv %s2038
        %v2040 = vmul.f32 %v2039, %v1722
        %v2041 = vmul.f32 %v2039, %v1723
        %2044 = vrot.lane.b32.xlu0 %v2040, 3
        %v2045 = vpop.permute.xlu0 %2044
        %2046 = vrot.lane.b32.xlu0 %v2041, 3
        %v2047 = vpop.permute.xlu0 %2046
        %v2050 = vadd.f32 %v1938, %v2045
        %v2051 = vadd.f32 %v1939, %v2047
        %s2052 = sld [smem:[#allocation3 + $0x44]]
        %v2053 = vstv %s2052
        %v2054 = vmul.f32 %v2053, %v1722
        %v2055 = vmul.f32 %v2053, %v1723
        %2058 = vrot.lane.b32.xlu0 %v2054, 3
        %v2059 = vpop.permute.xlu0 %2058
        %2060 = vrot.lane.b32.xlu0 %v2055, 3
        %v2061 = vpop.permute.xlu0 %2060
        %v2064 = vadd.f32 %v1952, %v2059
        %v2065 = vadd.f32 %v1953, %v2061
        %s2066 = sld [smem:[#allocation3 + $0xa8]]
        %v2067 = vstv %s2066
        %v2068 = vmul.f32 %v2067, %v1722
        %v2069 = vmul.f32 %v2067, %v1723
        %2072 = vrot.lane.b32.xlu0 %v2068, 3
        %v2073 = vpop.permute.xlu0 %2072
        %2074 = vrot.lane.b32.xlu0 %v2069, 3
        %v2075 = vpop.permute.xlu0 %2074
        %v2078 = vadd.f32 %v1966, %v2073
        %v2079 = vadd.f32 %v1967, %v2075
        %s2080 = sld [smem:[#allocation3 + $0x5d]]
        %v2081 = vstv %s2080
        %v2082 = vmul.f32 %v2081, %v1722
        %v2083 = vmul.f32 %v2081, %v1723
        %2086 = vrot.lane.b32.xlu0 %v2082, 3
        %v2087 = vpop.permute.xlu0 %2086
        %2088 = vrot.lane.b32.xlu0 %v2083, 3
        %v2089 = vpop.permute.xlu0 %2088
        %v2092 = vadd.f32 %v1980, %v2087
        %v2093 = vadd.f32 %v1981, %v2089
        %s2094 = sld [smem:[#allocation3 + $0xc1]]
        %v2095 = vstv %s2094
        %v2096 = vmul.f32 %v2095, %v1722
        %v2097 = vmul.f32 %v2095, %v1723
        %2100 = vrot.lane.b32.xlu0 %v2096, 3
        %v2101 = vpop.permute.xlu0 %2100
        %2102 = vrot.lane.b32.xlu0 %v2097, 3
        %v2103 = vpop.permute.xlu0 %2102
        %v2106 = vadd.f32 %v1994, %v2101
        %v2107 = vadd.f32 %v1995, %v2103
        %s2108 = sld [smem:[#allocation3 + $0x13]]
        %v2109 = vstv %s2108
        %v2110 = vmul.f32 %v2109, %v1722
        %v2111 = vmul.f32 %v2109, %v1723
        %2114 = vrot.lane.b32.xlu0 %v2110, 4
        %v2115 = vpop.permute.xlu0 %2114
        %2116 = vrot.lane.b32.xlu0 %v2111, 4
        %v2117 = vpop.permute.xlu0 %2116
        %v2120 = vadd.f32 %v2008, %v2115
        %v2121 = vadd.f32 %v2009, %v2117
        %s2122 = sld [smem:[#allocation3 + $0x77]]
        %v2123 = vstv %s2122
        %v2124 = vmul.f32 %v2123, %v1722
        %v2125 = vmul.f32 %v2123, %v1723
        %2128 = vrot.lane.b32.xlu0 %v2124, 4
        %v2129 = vpop.permute.xlu0 %2128
        %2130 = vrot.lane.b32.xlu0 %v2125, 4
        %v2131 = vpop.permute.xlu0 %2130
        %v2134 = vadd.f32 %v2022, %v2129
        %v2135 = vadd.f32 %v2023, %v2131
        %s2136 = sld [smem:[#allocation3 + $0x2c]]
        %v2137 = vstv %s2136
        %v2138 = vmul.f32 %v2137, %v1722
        %v2139 = vmul.f32 %v2137, %v1723
        %2142 = vrot.lane.b32.xlu0 %v2138, 4
        %v2143 = vpop.permute.xlu0 %2142
        %2144 = vrot.lane.b32.xlu0 %v2139, 4
        %v2145 = vpop.permute.xlu0 %2144
        %v2148 = vadd.f32 %v2036, %v2143
        %v2149 = vadd.f32 %v2037, %v2145
        %s2150 = sld [smem:[#allocation3 + $0x90]]
        %v2151 = vstv %s2150
        %v2152 = vmul.f32 %v2151, %v1722
        %v2153 = vmul.f32 %v2151, %v1723
        %2156 = vrot.lane.b32.xlu0 %v2152, 4
        %v2157 = vpop.permute.xlu0 %2156
        %2158 = vrot.lane.b32.xlu0 %v2153, 4
        %v2159 = vpop.permute.xlu0 %2158
        %v2162 = vadd.f32 %v2050, %v2157
        %v2163 = vadd.f32 %v2051, %v2159
        %s2164 = sld [smem:[#allocation3 + $0x45]]
        %v2165 = vstv %s2164
        %v2166 = vmul.f32 %v2165, %v1722
        %v2167 = vmul.f32 %v2165, %v1723
        %2170 = vrot.lane.b32.xlu0 %v2166, 4
        %v2171 = vpop.permute.xlu0 %2170
        %2172 = vrot.lane.b32.xlu0 %v2167, 4
        %v2173 = vpop.permute.xlu0 %2172
        %v2176 = vadd.f32 %v2064, %v2171
        %v2177 = vadd.f32 %v2065, %v2173
        %s2178 = sld [smem:[#allocation3 + $0xa9]]
        %v2179 = vstv %s2178
        %v2180 = vmul.f32 %v2179, %v1722
        %v2181 = vmul.f32 %v2179, %v1723
        %2184 = vrot.lane.b32.xlu0 %v2180, 4
        %v2185 = vpop.permute.xlu0 %2184
        %2186 = vrot.lane.b32.xlu0 %v2181, 4
        %v2187 = vpop.permute.xlu0 %2186
        %v2190 = vadd.f32 %v2078, %v2185
        %v2191 = vadd.f32 %v2079, %v2187
        %s2192 = sld [smem:[#allocation3 + $0x5e]]
        %v2193 = vstv %s2192
        %v2194 = vmul.f32 %v2193, %v1722
        %v2195 = vmul.f32 %v2193, %v1723
        %2198 = vrot.lane.b32.xlu0 %v2194, 4
        %v2199 = vpop.permute.xlu0 %2198
        %2200 = vrot.lane.b32.xlu0 %v2195, 4
        %v2201 = vpop.permute.xlu0 %2200
        %v2204 = vadd.f32 %v2092, %v2199
        %v2205 = vadd.f32 %v2093, %v2201
        %s2206 = sld [smem:[#allocation3 + $0xc2]]
        %v2207 = vstv %s2206
        %v2208 = vmul.f32 %v2207, %v1722
        %v2209 = vmul.f32 %v2207, %v1723
        %2212 = vrot.lane.b32.xlu0 %v2208, 4
        %v2213 = vpop.permute.xlu0 %2212
        %2214 = vrot.lane.b32.xlu0 %v2209, 4
        %v2215 = vpop.permute.xlu0 %2214
        %v2218 = vadd.f32 %v2106, %v2213
        %v2219 = vadd.f32 %v2107, %v2215
        %v2220 = vld [vmem:[#allocation2] sm:$0xff]
        %v2221 = vld [vmem:[#allocation2 + $0x8] sm:$0xff]
        %s2222 = sld [smem:[#allocation3 + $0x14]]
        %v2223 = vstv %s2222
        %v2224 = vmul.f32 %v2223, %v2220
        %v2225 = vmul.f32 %v2223, %v2221
        %v2226 = vadd.f32 %v2120, %v2224
        %v2227 = vadd.f32 %v2121, %v2225
        %s2228 = sld [smem:[#allocation3 + $0x78]]
        %v2229 = vstv %s2228
        %v2230 = vmul.f32 %v2229, %v2220
        %v2231 = vmul.f32 %v2229, %v2221
        %v2232 = vadd.f32 %v2134, %v2230
        %v2233 = vadd.f32 %v2135, %v2231
        %s2234 = sld [smem:[#allocation3 + $0x2d]]
        %v2235 = vstv %s2234
        %v2236 = vmul.f32 %v2235, %v2220
        %v2237 = vmul.f32 %v2235, %v2221
        %v2238 = vadd.f32 %v2148, %v2236
        %v2239 = vadd.f32 %v2149, %v2237
        %s2240 = sld [smem:[#allocation3 + $0x91]]
        %v2241 = vstv %s2240
        %v2242 = vmul.f32 %v2241, %v2220
        %v2243 = vmul.f32 %v2241, %v2221
        %v2244 = vadd.f32 %v2162, %v2242
        %v2245 = vadd.f32 %v2163, %v2243
        %s2246 = sld [smem:[#allocation3 + $0x46]]
        %v2247 = vstv %s2246
        %v2248 = vmul.f32 %v2247, %v2220
        %v2249 = vmul.f32 %v2247, %v2221
        %v2250 = vadd.f32 %v2176, %v2248
        %v2251 = vadd.f32 %v2177, %v2249
        %s2252 = sld [smem:[#allocation3 + $0xaa]]
        %v2253 = vstv %s2252
        %v2254 = vmul.f32 %v2253, %v2220
        %v2255 = vmul.f32 %v2253, %v2221
        %v2256 = vadd.f32 %v2190, %v2254
        %v2257 = vadd.f32 %v2191, %v2255
        %s2258 = sld [smem:[#allocation3 + $0x5f]]
        %v2259 = vstv %s2258
        %v2260 = vmul.f32 %v2259, %v2220
        %v2261 = vmul.f32 %v2259, %v2221
        %v2262 = vadd.f32 %v2204, %v2260
        %v2263 = vadd.f32 %v2205, %v2261
        %s2264 = sld [smem:[#allocation3 + $0xc3]]
        %v2265 = vstv %s2264
        %v2266 = vmul.f32 %v2265, %v2220
        %v2267 = vmul.f32 %v2265, %v2221
        %v2268 = vadd.f32 %v2218, %v2266
        %v2269 = vadd.f32 %v2219, %v2267
        %s2270 = sld [smem:[#allocation3 + $0x15]]
        %v2271 = vstv %s2270
        %v2272 = vmul.f32 %v2271, %v2220
        %v2273 = vmul.f32 %v2271, %v2221
        %2276 = vrot.lane.b32.xlu0 %v2272, 1
        %v2277 = vpop.permute.xlu0 %2276
        %2278 = vrot.lane.b32.xlu0 %v2273, 1
        %v2279 = vpop.permute.xlu0 %2278
        %v2282 = vadd.f32 %v2226, %v2277
        %v2283 = vadd.f32 %v2227, %v2279
        %s2284 = sld [smem:[#allocation3 + $0x79]]
        %v2285 = vstv %s2284
        %v2286 = vmul.f32 %v2285, %v2220
        %v2287 = vmul.f32 %v2285, %v2221
        %2290 = vrot.lane.b32.xlu0 %v2286, 1
        %v2291 = vpop.permute.xlu0 %2290
        %2292 = vrot.lane.b32.xlu0 %v2287, 1
        %v2293 = vpop.permute.xlu0 %2292
        %v2296 = vadd.f32 %v2232, %v2291
        %v2297 = vadd.f32 %v2233, %v2293
        %s2298 = sld [smem:[#allocation3 + $0x2e]]
        %v2299 = vstv %s2298
        %v2300 = vmul.f32 %v2299, %v2220
        %v2301 = vmul.f32 %v2299, %v2221
        %2304 = vrot.lane.b32.xlu0 %v2300, 1
        %v2305 = vpop.permute.xlu0 %2304
        %2306 = vrot.lane.b32.xlu0 %v2301, 1
        %v2307 = vpop.permute.xlu0 %2306
        %v2310 = vadd.f32 %v2238, %v2305
        %v2311 = vadd.f32 %v2239, %v2307
        %s2312 = sld [smem:[#allocation3 + $0x92]]
        %v2313 = vstv %s2312
        %v2314 = vmul.f32 %v2313, %v2220
        %v2315 = vmul.f32 %v2313, %v2221
        %2318 = vrot.lane.b32.xlu0 %v2314, 1
        %v2319 = vpop.permute.xlu0 %2318
        %2320 = vrot.lane.b32.xlu0 %v2315, 1
        %v2321 = vpop.permute.xlu0 %2320
        %v2324 = vadd.f32 %v2244, %v2319
        %v2325 = vadd.f32 %v2245, %v2321
        %s2326 = sld [smem:[#allocation3 + $0x47]]
        %v2327 = vstv %s2326
        %v2328 = vmul.f32 %v2327, %v2220
        %v2329 = vmul.f32 %v2327, %v2221
        %2332 = vrot.lane.b32.xlu0 %v2328, 1
        %v2333 = vpop.permute.xlu0 %2332
        %2334 = vrot.lane.b32.xlu0 %v2329, 1
        %v2335 = vpop.permute.xlu0 %2334
        %v2338 = vadd.f32 %v2250, %v2333
        %v2339 = vadd.f32 %v2251, %v2335
        %s2340 = sld [smem:[#allocation3 + $0xab]]
        %v2341 = vstv %s2340
        %v2342 = vmul.f32 %v2341, %v2220
        %v2343 = vmul.f32 %v2341, %v2221
        %2346 = vrot.lane.b32.xlu0 %v2342, 1
        %v2347 = vpop.permute.xlu0 %2346
        %2348 = vrot.lane.b32.xlu0 %v2343, 1
        %v2349 = vpop.permute.xlu0 %2348
        %v2352 = vadd.f32 %v2256, %v2347
        %v2353 = vadd.f32 %v2257, %v2349
        %s2354 = sld [smem:[#allocation3 + $0x60]]
        %v2355 = vstv %s2354
        %v2356 = vmul.f32 %v2355, %v2220
        %v2357 = vmul.f32 %v2355, %v2221
        %2360 = vrot.lane.b32.xlu0 %v2356, 1
        %v2361 = vpop.permute.xlu0 %2360
        %2362 = vrot.lane.b32.xlu0 %v2357, 1
        %v2363 = vpop.permute.xlu0 %2362
        %v2366 = vadd.f32 %v2262, %v2361
        %v2367 = vadd.f32 %v2263, %v2363
        %s2368 = sld [smem:[#allocation3 + $0xc4]]
        %v2369 = vstv %s2368
        %v2370 = vmul.f32 %v2369, %v2220
        %v2371 = vmul.f32 %v2369, %v2221
        %2374 = vrot.lane.b32.xlu0 %v2370, 1
        %v2375 = vpop.permute.xlu0 %2374
        %2376 = vrot.lane.b32.xlu0 %v2371, 1
        %v2377 = vpop.permute.xlu0 %2376
        %v2380 = vadd.f32 %v2268, %v2375
        %v2381 = vadd.f32 %v2269, %v2377
        %s2382 = sld [smem:[#allocation3 + $0x16]]
        %v2383 = vstv %s2382
        %v2384 = vmul.f32 %v2383, %v2220
        %v2385 = vmul.f32 %v2383, %v2221
        %2388 = vrot.lane.b32.xlu0 %v2384, 2
        %v2389 = vpop.permute.xlu0 %2388
        %2390 = vrot.lane.b32.xlu0 %v2385, 2
        %v2391 = vpop.permute.xlu0 %2390
        %v2394 = vadd.f32 %v2282, %v2389
        %v2395 = vadd.f32 %v2283, %v2391
        %s2396 = sld [smem:[#allocation3 + $0x7a]]
        %v2397 = vstv %s2396
        %v2398 = vmul.f32 %v2397, %v2220
        %v2399 = vmul.f32 %v2397, %v2221
        %2402 = vrot.lane.b32.xlu0 %v2398, 2
        %v2403 = vpop.permute.xlu0 %2402
        %2404 = vrot.lane.b32.xlu0 %v2399, 2
        %v2405 = vpop.permute.xlu0 %2404
        %v2408 = vadd.f32 %v2296, %v2403
        %v2409 = vadd.f32 %v2297, %v2405
        %s2410 = sld [smem:[#allocation3 + $0x2f]]
        %v2411 = vstv %s2410
        %v2412 = vmul.f32 %v2411, %v2220
        %v2413 = vmul.f32 %v2411, %v2221
        %2416 = vrot.lane.b32.xlu0 %v2412, 2
        %v2417 = vpop.permute.xlu0 %2416
        %2418 = vrot.lane.b32.xlu0 %v2413, 2
        %v2419 = vpop.permute.xlu0 %2418
        %v2422 = vadd.f32 %v2310, %v2417
        %v2423 = vadd.f32 %v2311, %v2419
        %s2424 = sld [smem:[#allocation3 + $0x93]]
        %v2425 = vstv %s2424
        %v2426 = vmul.f32 %v2425, %v2220
        %v2427 = vmul.f32 %v2425, %v2221
        %2430 = vrot.lane.b32.xlu0 %v2426, 2
        %v2431 = vpop.permute.xlu0 %2430
        %2432 = vrot.lane.b32.xlu0 %v2427, 2
        %v2433 = vpop.permute.xlu0 %2432
        %v2436 = vadd.f32 %v2324, %v2431
        %v2437 = vadd.f32 %v2325, %v2433
        %s2438 = sld [smem:[#allocation3 + $0x48]]
        %v2439 = vstv %s2438
        %v2440 = vmul.f32 %v2439, %v2220
        %v2441 = vmul.f32 %v2439, %v2221
        %2444 = vrot.lane.b32.xlu0 %v2440, 2
        %v2445 = vpop.permute.xlu0 %2444
        %2446 = vrot.lane.b32.xlu0 %v2441, 2
        %v2447 = vpop.permute.xlu0 %2446
        %v2450 = vadd.f32 %v2338, %v2445
        %v2451 = vadd.f32 %v2339, %v2447
        %s2452 = sld [smem:[#allocation3 + $0xac]]
        %v2453 = vstv %s2452
        %v2454 = vmul.f32 %v2453, %v2220
        %v2455 = vmul.f32 %v2453, %v2221
        %2458 = vrot.lane.b32.xlu0 %v2454, 2
        %v2459 = vpop.permute.xlu0 %2458
        %2460 = vrot.lane.b32.xlu0 %v2455, 2
        %v2461 = vpop.permute.xlu0 %2460
        %v2464 = vadd.f32 %v2352, %v2459
        %v2465 = vadd.f32 %v2353, %v2461
        %s2466 = sld [smem:[#allocation3 + $0x61]]
        %v2467 = vstv %s2466
        %v2468 = vmul.f32 %v2467, %v2220
        %v2469 = vmul.f32 %v2467, %v2221
        %2472 = vrot.lane.b32.xlu0 %v2468, 2
        %v2473 = vpop.permute.xlu0 %2472
        %2474 = vrot.lane.b32.xlu0 %v2469, 2
        %v2475 = vpop.permute.xlu0 %2474
        %v2478 = vadd.f32 %v2366, %v2473
        %v2479 = vadd.f32 %v2367, %v2475
        %s2480 = sld [smem:[#allocation3 + $0xc5]]
        %v2481 = vstv %s2480
        %v2482 = vmul.f32 %v2481, %v2220
        %v2483 = vmul.f32 %v2481, %v2221
        %2486 = vrot.lane.b32.xlu0 %v2482, 2
        %v2487 = vpop.permute.xlu0 %2486
        %2488 = vrot.lane.b32.xlu0 %v2483, 2
        %v2489 = vpop.permute.xlu0 %2488
        %v2492 = vadd.f32 %v2380, %v2487
        %v2493 = vadd.f32 %v2381, %v2489
        %s2494 = sld [smem:[#allocation3 + $0x17]]
        %v2495 = vstv %s2494
        %v2496 = vmul.f32 %v2495, %v2220
        %v2497 = vmul.f32 %v2495, %v2221
        %2500 = vrot.lane.b32.xlu0 %v2496, 3
        %v2501 = vpop.permute.xlu0 %2500
        %2502 = vrot.lane.b32.xlu0 %v2497, 3
        %v2503 = vpop.permute.xlu0 %2502
        %v2506 = vadd.f32 %v2394, %v2501
        %v2507 = vadd.f32 %v2395, %v2503
        %s2508 = sld [smem:[#allocation3 + $0x7b]]
        %v2509 = vstv %s2508
        %v2510 = vmul.f32 %v2509, %v2220
        %v2511 = vmul.f32 %v2509, %v2221
        %2514 = vrot.lane.b32.xlu0 %v2510, 3
        %v2515 = vpop.permute.xlu0 %2514
        %2516 = vrot.lane.b32.xlu0 %v2511, 3
        %v2517 = vpop.permute.xlu0 %2516
        %v2520 = vadd.f32 %v2408, %v2515
        %v2521 = vadd.f32 %v2409, %v2517
        %s2522 = sld [smem:[#allocation3 + $0x30]]
        %v2523 = vstv %s2522
        %v2524 = vmul.f32 %v2523, %v2220
        %v2525 = vmul.f32 %v2523, %v2221
        %2528 = vrot.lane.b32.xlu0 %v2524, 3
        %v2529 = vpop.permute.xlu0 %2528
        %2530 = vrot.lane.b32.xlu0 %v2525, 3
        %v2531 = vpop.permute.xlu0 %2530
        %v2534 = vadd.f32 %v2422, %v2529
        %v2535 = vadd.f32 %v2423, %v2531
        %s2536 = sld [smem:[#allocation3 + $0x94]]
        %v2537 = vstv %s2536
        %v2538 = vmul.f32 %v2537, %v2220
        %v2539 = vmul.f32 %v2537, %v2221
        %2542 = vrot.lane.b32.xlu0 %v2538, 3
        %v2543 = vpop.permute.xlu0 %2542
        %2544 = vrot.lane.b32.xlu0 %v2539, 3
        %v2545 = vpop.permute.xlu0 %2544
        %v2548 = vadd.f32 %v2436, %v2543
        %v2549 = vadd.f32 %v2437, %v2545
        %s2550 = sld [smem:[#allocation3 + $0x49]]
        %v2551 = vstv %s2550
        %v2552 = vmul.f32 %v2551, %v2220
        %v2553 = vmul.f32 %v2551, %v2221
        %2556 = vrot.lane.b32.xlu0 %v2552, 3
        %v2557 = vpop.permute.xlu0 %2556
        %2558 = vrot.lane.b32.xlu0 %v2553, 3
        %v2559 = vpop.permute.xlu0 %2558
        %v2562 = vadd.f32 %v2450, %v2557
        %v2563 = vadd.f32 %v2451, %v2559
        %s2564 = sld [smem:[#allocation3 + $0xad]]
        %v2565 = vstv %s2564
        %v2566 = vmul.f32 %v2565, %v2220
        %v2567 = vmul.f32 %v2565, %v2221
        %2570 = vrot.lane.b32.xlu0 %v2566, 3
        %v2571 = vpop.permute.xlu0 %2570
        %2572 = vrot.lane.b32.xlu0 %v2567, 3
        %v2573 = vpop.permute.xlu0 %2572
        %v2576 = vadd.f32 %v2464, %v2571
        %v2577 = vadd.f32 %v2465, %v2573
        %s2578 = sld [smem:[#allocation3 + $0x62]]
        %v2579 = vstv %s2578
        %v2580 = vmul.f32 %v2579, %v2220
        %v2581 = vmul.f32 %v2579, %v2221
        %2584 = vrot.lane.b32.xlu0 %v2580, 3
        %v2585 = vpop.permute.xlu0 %2584
        %2586 = vrot.lane.b32.xlu0 %v2581, 3
        %v2587 = vpop.permute.xlu0 %2586
        %v2590 = vadd.f32 %v2478, %v2585
        %v2591 = vadd.f32 %v2479, %v2587
        %s2592 = sld [smem:[#allocation3 + $0xc6]]
        %v2593 = vstv %s2592
        %v2594 = vmul.f32 %v2593, %v2220
        %v2595 = vmul.f32 %v2593, %v2221
        %2598 = vrot.lane.b32.xlu0 %v2594, 3
        %v2599 = vpop.permute.xlu0 %2598
        %2600 = vrot.lane.b32.xlu0 %v2595, 3
        %v2601 = vpop.permute.xlu0 %2600
        %v2604 = vadd.f32 %v2492, %v2599
        %v2605 = vadd.f32 %v2493, %v2601
        %s2606 = sld [smem:[#allocation3 + $0x18]]
        %v2607 = vstv %s2606
        %v2608 = vmul.f32 %v2607, %v2220
        %v2609 = vmul.f32 %v2607, %v2221
        %2612 = vrot.lane.b32.xlu0 %v2608, 4
        %v2613 = vpop.permute.xlu0 %2612
        %2614 = vrot.lane.b32.xlu0 %v2609, 4
        %v2615 = vpop.permute.xlu0 %2614
        %v2618 = vadd.f32 %v2506, %v2613
        %v2619 = vadd.f32 %v2507, %v2615
        %s2620 = sld [smem:[#allocation3 + $0x7c]]
        %v2621 = vstv %s2620
        %v2622 = vmul.f32 %v2621, %v2220
        %v2623 = vmul.f32 %v2621, %v2221
        %2626 = vrot.lane.b32.xlu0 %v2622, 4
        %v2627 = vpop.permute.xlu0 %2626
        %2628 = vrot.lane.b32.xlu0 %v2623, 4
        %v2629 = vpop.permute.xlu0 %2628
        %v2632 = vadd.f32 %v2520, %v2627
        %v2633 = vadd.f32 %v2521, %v2629
        %s2634 = sld [smem:[#allocation3 + $0x31]]
        %v2635 = vstv %s2634
        %v2636 = vmul.f32 %v2635, %v2220
        %v2637 = vmul.f32 %v2635, %v2221
        %2640 = vrot.lane.b32.xlu0 %v2636, 4
        %v2641 = vpop.permute.xlu0 %2640
        %2642 = vrot.lane.b32.xlu0 %v2637, 4
        %v2643 = vpop.permute.xlu0 %2642
        %v2646 = vadd.f32 %v2534, %v2641
        %v2647 = vadd.f32 %v2535, %v2643
        %s2648 = sld [smem:[#allocation3 + $0x95]]
        %v2649 = vstv %s2648
        %v2650 = vmul.f32 %v2649, %v2220
        %v2651 = vmul.f32 %v2649, %v2221
        %2654 = vrot.lane.b32.xlu0 %v2650, 4
        %v2655 = vpop.permute.xlu0 %2654
        %2656 = vrot.lane.b32.xlu0 %v2651, 4
        %v2657 = vpop.permute.xlu0 %2656
        %v2660 = vadd.f32 %v2548, %v2655
        %v2661 = vadd.f32 %v2549, %v2657
        %s2662 = sld [smem:[#allocation3 + $0x4a]]
        %v2663 = vstv %s2662
        %v2664 = vmul.f32 %v2663, %v2220
        %v2665 = vmul.f32 %v2663, %v2221
        %2668 = vrot.lane.b32.xlu0 %v2664, 4
        %v2669 = vpop.permute.xlu0 %2668
        %2670 = vrot.lane.b32.xlu0 %v2665, 4
        %v2671 = vpop.permute.xlu0 %2670
        %v2674 = vadd.f32 %v2562, %v2669
        %v2675 = vadd.f32 %v2563, %v2671
        %s2676 = sld [smem:[#allocation3 + $0xae]]
        %v2677 = vstv %s2676
        %v2678 = vmul.f32 %v2677, %v2220
        %v2679 = vmul.f32 %v2677, %v2221
        %2682 = vrot.lane.b32.xlu0 %v2678, 4
        %v2683 = vpop.permute.xlu0 %2682
        %2684 = vrot.lane.b32.xlu0 %v2679, 4
        %v2685 = vpop.permute.xlu0 %2684
        %v2688 = vadd.f32 %v2576, %v2683
        %v2689 = vadd.f32 %v2577, %v2685
        %s2690 = sld [smem:[#allocation3 + $0x63]]
        %v2691 = vstv %s2690
        %v2692 = vmul.f32 %v2691, %v2220
        %v2693 = vmul.f32 %v2691, %v2221
        %2696 = vrot.lane.b32.xlu0 %v2692, 4
        %v2697 = vpop.permute.xlu0 %2696
        %2698 = vrot.lane.b32.xlu0 %v2693, 4
        %v2699 = vpop.permute.xlu0 %2698
        %v2702 = vadd.f32 %v2590, %v2697
        %v2703 = vadd.f32 %v2591, %v2699
        %s2704 = sld [smem:[#allocation3 + $0xc7]]
        %v2705 = vstv %s2704
        %v2706 = vmul.f32 %v2705, %v2220
        %v2707 = vmul.f32 %v2705, %v2221
        %2710 = vrot.lane.b32.xlu0 %v2706, 4
        %v2711 = vpop.permute.xlu0 %2710
        %2712 = vrot.lane.b32.xlu0 %v2707, 4
        %v2713 = vpop.permute.xlu0 %2712
        %v2716 = vadd.f32 %v2604, %v2711
        %v2717 = vadd.f32 %v2605, %v2713
        %v2718 = vmul.f32 %v2618, %v2618
        %v2719 = vmul.f32 %v2619, %v2619
        %v2720 = vadd.f32 %v2718, 0.0
        %v2721 = vadd.f32 %v2719, 0.0
        %v2722 = vmul.f32 %v2632, %v2632
        %v2723 = vmul.f32 %v2633, %v2633
        %v2724 = vadd.f32 %v2720, %v2722
        %v2725 = vadd.f32 %v2721, %v2723
        %v2726 = vmul.f32 %v2646, %v2646
        %v2727 = vmul.f32 %v2647, %v2647
        %v2728 = vadd.f32 %v2724, %v2726
        %v2729 = vadd.f32 %v2725, %v2727
        %v2730 = vmul.f32 %v2660, %v2660
        %v2731 = vmul.f32 %v2661, %v2661
        %v2732 = vadd.f32 %v2728, %v2730
        %v2733 = vadd.f32 %v2729, %v2731
        %v2734 = vmul.f32 %v2674, %v2674
        %v2735 = vmul.f32 %v2675, %v2675
        %v2736 = vadd.f32 %v2732, %v2734
        %v2737 = vadd.f32 %v2733, %v2735
        %v2738 = vmul.f32 %v2688, %v2688
        %v2739 = vmul.f32 %v2689, %v2689
        %v2740 = vadd.f32 %v2736, %v2738
        %v2741 = vadd.f32 %v2737, %v2739
        %v2742 = vmul.f32 %v2702, %v2702
        %v2743 = vmul.f32 %v2703, %v2703
        %v2744 = vadd.f32 %v2740, %v2742
        %v2745 = vadd.f32 %v2741, %v2743
        %v2746 = vmul.f32 %v2716, %v2716
        %v2747 = vmul.f32 %v2717, %v2717
        %v2748 = vadd.f32 %v2744, %v2746
        %v2749 = vadd.f32 %v2745, %v2747
        %v2750 = vsub.f32 %v2748, 0.225
        %v2751 = vsub.f32 %v2749, 0.225
        %v2752 = vmul.f32 %v2750, 50.0
        %v2753 = vmul.f32 %v2751, 50.0
        %v2754 = vmul.f32 %v2752, 0.5
        %v2755 = vmul.f32 %v2753, 0.5
        %v2756 = vtanh.pop %v2754
        %v2757 = vtanh.pop %v2755
        %v2758 = vadd.f32 %v2756, 1.0
        %v2759 = vadd.f32 %v2757, 1.0
        %v2760 = vmul.f32 %v2758, 0.5
        %v2761 = vmul.f32 %v2759, 0.5
        %v2762 = vld [vmem:[%s201] sm:$0xff]
        %v2763 = vld [vmem:[%s201 + $0x8] sm:$0xff]
        %2766 = vrot.lane.b32.xlu0 %v2762, 4
        %v2767 = vpop.permute.xlu0 %2766
        %2768 = vrot.lane.b32.xlu0 %v2763, 4
        %v2769 = vpop.permute.xlu0 %2768
        %v2772 = vsub.f32 %v2760, %v2767
        %v2773 = vsub.f32 %v2761, %v2769
        %v2774 = vmul.f32 %v2772, %v2772
        %v2775 = vmul.f32 %v2773, %v2773
        %v2776 = vmul.f32 %v2774, %v2774
        %v2777 = vmul.f32 %v2775, %v2775
        %2780 = vrot.lane.b32.xlu0 %v2776, 124
        %v2781 = vpop.permute.xlu0 %2780
        %2782 = vrot.lane.b32.xlu0 %v2777, 124
        %v2783 = vpop.permute.xlu0 %2782
        %vm2786 = vcmask 130048
        %v2787 = vsel %vm2786, %v2781, 0.0
        %v2788 = vsel %vm2786, %v2783, 0.0
        %v2789 = vadd.f32 %v2787, %v2788
        %2790 = vadd.xlane.f32.xlu0 %v2789
        %v2791 = vpop.xlane.xlu0 %2790
        %v2792 = vrot.slane %v2791, 4
        %v2793 = vadd.f32 %v2791, %v2792
        %v2794 = vrot.slane %v2793, 2
        %v2795 = vadd.f32 %v2793, %v2794
        %v2796 = vrot.slane %v2795, 1
        %v2797 = vadd.f32 %v2795, %v2796
        %s2798 = vtos %v2797
        %v2799 = vstv %s2798
        %2800 = vst [vmem:[%s191] sm:$0x1] %v2799
        %s2801 = sand.u32 %s99, 1
        %s2802 = scalar_lea.sflag [#allocation4], %s2801
        %s2803 = sand.u32 %s99, 1
        %s2804 = scalar_lea.vmem [#allocation6], %s2803
        // Predicated region
        $region37: #{tpu_custom_call.1} parent=31 // pred_check
          %p2805 = pneg %p109
        $region38: #{tpu_custom_call.1} parent=31 // pred_check_branch
          %2807 = sbr.rel (%p2805) target = $region40
        $region39: #{tpu_custom_call.1} parent=31 // pred_region
          %2809 = vsyncadd %s2802, 0
          %s2810 = scalar_lea.hbm %s3, %s18
          %s2812 = sshll.u32 %s2804, 4
          %s2813 = int_to_ptr.vmem [resolvable:$true] %s2812
          %s2814 = sshll.u32 %s2810, 4
          %s2815 = int_to_ptr.hbm [resolvable:$true] %s2814
          %2817 = dma.vmem_to_hbm [thread:$0]  %s2813, 16, %s2815, %s2802
        $region40: #{tpu_custom_call.1} parent=31 // pred_fallthru
          _
      $region32: #{tpu_custom_call.1} parent=5 // pred_fallthru
        _
      %p2818 = scmp.le.s32.totalorder 2, %s13
      // Predicated region
      $region41: #{tpu_custom_call.1} parent=5 // pred_check
        %p2819 = pneg %p2818
      $region42: #{tpu_custom_call.1} parent=5 // pred_check_branch
        %2821 = sbr.rel (%p2819) target = $region44
      $region43: #{tpu_custom_call.1} parent=5 // pred_region
        %s2822 = ssub.s32 %s13, 2
        // Predicated region
        $region45: #{tpu_custom_call.1} parent=43 // pred_check
          %p2823 = pneg %p115
        $region46: #{tpu_custom_call.1} parent=43 // pred_check_branch
          %2825 = sbr.rel (%p2823) target = $region48
        $region47: #{tpu_custom_call.1} parent=43 // pred_region
          %s2826 = sand.u32 %s100, 1
          %s2827 = scalar_lea.sflag [#allocation4], %s2826
          %s2828 = sand.u32 %s100, 1
          %s2829 = scalar_lea.vmem [#allocation6], %s2828
          %2831 = dma.done %s2827, 16
        $region48: #{tpu_custom_call.1} parent=43 // pred_fallthru
          _
      $region44: #{tpu_custom_call.1} parent=5 // pred_fallthru
        _
    $region6: #{tpu_custom_call.1} parent=1 // loop_footer
      %s17 = sadd.s32 1, %s13
    $region7: #{tpu_custom_call.1} parent=1 // loop_footer_branch
      %12 = sbr.rel target = $region3
    $region8: #{tpu_custom_call.1} parent=1 // loop_exit
      _
    %2832 = vsyncpa [#allocation4], 1
    %s2833 = scalar_lea.sflag [#allocation4], 1
    %2834 = vsyncpa %s2833, 1
    %2835 = vsyncpa [#allocation5], 1
    %s2836 = scalar_lea.sflag [#allocation5], 1
    %2837 = vsyncpa %s2836, 1

</llo_original>
